<compile_context>
chip_gen: v7x
topology: tpu7x:2x2x1
jax: 0.10.0
libtpu: 0.0.40
codegen_flags: <defaults>
</compile_context>

<pallas_src>
import math
import jax
import jax.numpy as jnp
from jax.experimental import pallas as pl
from jax.experimental.pallas import tpu as pltpu

# ---------------- configuration (mirrors MLP.__init__ args) ----------------
INPUT_SIZE = 32
HIDDEN_SIZE = 32
OUTPUT_SIZE = 16
DEPTH = 4
SKIPS = [2]
LATENT_DIM = 8

assert INPUT_SIZE == HIDDEN_SIZE, "skip connection (h + x) requires input_size == hidden_size"

BATCH = 512        # example batch (lanes of the feature-major layout)
TM = 256           # batch tile on the lane axis (multiple of 128)

# ---------------- activation-stack / weight-slab layout --------------------
STACK_ROWS = 128                     # K of every layer matmul (zero/one padded)
SLAB_ROWS = 128                      # 3*32 + 16 = 112 rows used, rounded up

ROW_H = 0                            # rows  0:32  current hidden h
ROW_Z = ROW_H + HIDDEN_SIZE          # rows 32:40  latent z
ROW_X = ROW_Z + LATENT_DIM           # rows 40:72  persistent x (for the skip)
ROW_ONE = ROW_X + INPUT_SIZE         # rows 72:128 ones (bias carrier)
C_BIAS = STACK_ROWS - 1              # bias lives in slab lane column 127

R_W0 = 0                             # slab row offsets of the weight blocks
R_W1 = HIDDEN_SIZE
R_W2 = 2 * HIDDEN_SIZE
R_W3 = 3 * HIDDEN_SIZE


def _mlp_kernel(xT_ref, zT_ref, w_ref, o_ref, stack_ref):
    f32 = jnp.float32
    hp = jax.lax.Precision.HIGHEST
    x = xT_ref[...]                                  # (INPUT_SIZE, TM)
    z = zT_ref[...]                                  # (LATENT_DIM, TM)
    tm = x.shape[-1]

    # (Re)build the activation stack for this batch tile.  Every store is
    # sublane-aligned (offsets/sizes are multiples of 8) and full lane width.
    stack_ref[ROW_H:ROW_H + INPUT_SIZE, :] = x                 # h := x (layer-0 input)
    stack_ref[ROW_Z:ROW_Z + LATENT_DIM, :] = z
    stack_ref[ROW_X:ROW_X + INPUT_SIZE, :] = x                 # persistent x for the skip
    stack_ref[ROW_ONE:STACK_ROWS, :] = jnp.ones((STACK_ROWS - ROW_ONE, tm), f32)

    def layer(row, out_dim):
        # ONE full-lane-width matmul per layer: weights, bias and (for L2) the
        # skip are all folded into the (out_dim, 128) slab block.
        return jnp.dot(w_ref[row:row + out_dim, :], stack_ref[...],
                       preferred_element_type=f32, precision=hp)

    # L0..L2: Linear + ReLU, result written back into the stack's h rows.
    stack_ref[ROW_H:ROW_H + HIDDEN_SIZE, :] = jnp.maximum(layer(R_W0, HIDDEN_SIZE), 0.0)
    stack_ref[ROW_H:ROW_H + HIDDEN_SIZE, :] = jnp.maximum(layer(R_W1, HIDDEN_SIZE), 0.0)
    stack_ref[ROW_H:ROW_H + HIDDEN_SIZE, :] = jnp.maximum(layer(R_W2, HIDDEN_SIZE), 0.0)
    # L3: the module's last Sequential also contains a ReLU -> keep it.
    # Output tile (OUTPUT_SIZE, TM) is lane-dense -> unmasked vector stores.
    o_ref[...] = jnp.maximum(layer(R_W3, OUTPUT_SIZE), 0.0).astype(o_ref.dtype)


def _mlp_forward_impl(x, z, w_slab):
    """x: (N, INPUT_SIZE) f32, z: (N, LATENT_DIM) f32 -> (N, OUTPUT_SIZE) f32."""
    n = x.shape[0]
    n_pad = (-n) % TM
    if n_pad:                                   # pad ragged batches to a TM multiple
        x = jnp.pad(x, ((0, n_pad), (0, 0)))
        z = jnp.pad(z, ((0, n_pad), (0, 0)))
    n_full = n + n_pad

    # Layout plumbing (fused under the surrounding jit): batch -> lane axis.
    xT = x.T                                    # (INPUT_SIZE, n_full)
    zT = z.T                                    # (LATENT_DIM, n_full)

    oT = pl.pallas_call(
        _mlp_kernel,
        out_shape=jax.ShapeDtypeStruct((OUTPUT_SIZE, n_full), jnp.float32),
        grid_spec=pltpu.PrefetchScalarGridSpec(
            num_scalar_prefetch=0,
            grid=(n_full // TM,),
            in_specs=[
                pl.BlockSpec((INPUT_SIZE, TM), lambda i: (0, i)),          # xT
                pl.BlockSpec((LATENT_DIM, TM), lambda i: (0, i)),          # zT
                pl.BlockSpec((SLAB_ROWS, STACK_ROWS), lambda i: (0, 0)),   # packed weights
            ],
            out_specs=pl.BlockSpec((OUTPUT_SIZE, TM), lambda i: (0, i)),
            scratch_shapes=[pltpu.VMEM((STACK_ROWS, TM), jnp.float32)],    # activation stack
        ),
        compiler_params=pltpu.CompilerParams(
            dimension_semantics=("parallel",)),
    )(xT, zT, w_slab)

    out = oT.T                                  # back to (n_full, OUTPUT_SIZE)
    if n_pad:
        out = out[:n]
    return out


mlp_forward = jax.jit(_mlp_forward_impl)


def init_params(key):
    """Deterministic PyTorch-Linear-style init, weights in native (out, in) form."""
    def linear(key, fan_in, fan_out):
        kw, kb = jax.random.split(key)
        bound = 1.0 / math.sqrt(fan_in)
        w = jax.random.uniform(kw, (fan_out, fan_in), jnp.float32, -bound, bound)
        b = jax.random.uniform(kb, (fan_out,), jnp.float32, -bound, bound)
        return w, b

    k0, k1, k2, k3 = jax.random.split(key, 4)
    w0, b0 = linear(k0, INPUT_SIZE + LATENT_DIM, HIDDEN_SIZE)
    w1, b1 = linear(k1, HIDDEN_SIZE, HIDDEN_SIZE)
    w2, b2 = linear(k2, HIDDEN_SIZE + LATENT_DIM, HIDDEN_SIZE)
    w3, b3 = linear(k3, HIDDEN_SIZE, OUTPUT_SIZE)
    return (w0, b0, w1, b1, w2, b2, w3, b3)


def pack_params(params):
    """Pack all weights/biases into one (SLAB_ROWS, 128) f32 slab.

    Every block spans the full 128 lanes; bias sits in column C_BIAS; the skip
    connection of layer 2 is folded in by repeating W2_h at the x columns.
    """
    w0, b0, w1, b1, w2, b2, w3, b3 = params
    slab = jnp.zeros((SLAB_ROWS, STACK_ROWS), jnp.float32)
    # L0: in = cat(x, z)
    slab = slab.at[R_W0:R_W0 + HIDDEN_SIZE, ROW_H:ROW_H + INPUT_SIZE].set(w0[:, :INPUT_SIZE])
    slab = slab.at[R_W0:R_W0 + HIDDEN_SIZE, ROW_Z:ROW_Z + LATENT_DIM].set(w0[:, INPUT_SIZE:])
    slab = slab.at[R_W0:R_W0 + HIDDEN_SIZE, C_BIAS].set(b0)
    # L1: in = h
    slab = slab.at[R_W1:R_W1 + HIDDEN_SIZE, ROW_H:ROW_H + HIDDEN_SIZE].set(w1)
    slab = slab.at[R_W1:R_W1 + HIDDEN_SIZE, C_BIAS].set(b1)
    # L2: in = cat(h + x, z)  =>  W2_h @ h + W2_h @ x + W2_z @ z + b2 (skip folded in)
    slab = slab.at[R_W2:R_W2 + HIDDEN_SIZE, ROW_H:ROW_H + HIDDEN_SIZE].set(w2[:, :HIDDEN_SIZE])
    slab = slab.at[R_W2:R_W2 + HIDDEN_SIZE, ROW_Z:ROW_Z + LATENT_DIM].set(w2[:, HIDDEN_SIZE:])
    slab = slab.at[R_W2:R_W2 + HIDDEN_SIZE, ROW_X:ROW_X + INPUT_SIZE].set(w2[:, :HIDDEN_SIZE])
    slab = slab.at[R_W2:R_W2 + HIDDEN_SIZE, C_BIAS].set(b2)
    # L3: in = h
    slab = slab.at[R_W3:R_W3 + OUTPUT_SIZE, ROW_H:ROW_H + HIDDEN_SIZE].set(w3)
    slab = slab.at[R_W3:R_W3 + OUTPUT_SIZE, C_BIAS].set(b3)
    return slab


def mlp_reference(x, z, params):
    """Plain-JAX reference matching the PyTorch forward exactly."""
    w0, b0, w1, b1, w2, b2, w3, b3 = params
    hp = jax.lax.Precision.HIGHEST
    h = jnp.concatenate([x, z], -1)
    h = jax.nn.relu(jnp.dot(h, w0.T, precision=hp) + b0)
    h = jax.nn.relu(jnp.dot(h, w1.T, precision=hp) + b1)
    h = h + x
    h = jnp.concatenate([h, z], -1)
    h = jax.nn.relu(jnp.dot(h, w2.T, precision=hp) + b2)
    h = jax.nn.relu(jnp.dot(h, w3.T, precision=hp) + b3)
    return h


if __name__ == "__main__":
    key = jax.random.PRNGKey(0)
    kx, kz, kp = jax.random.split(key, 3)
    x = jax.random.normal(kx, (BATCH, INPUT_SIZE), jnp.float32)
    z = jax.random.normal(kz, (BATCH, LATENT_DIM), jnp.float32)
    params = init_params(kp)
    w_slab = pack_params(params)

    out = jax.block_until_ready(mlp_forward(x, z, w_slab))
    ref = mlp_reference(x, z, params)
    assert out.shape == (BATCH, OUTPUT_SIZE)
    assert jnp.allclose(out, ref, atol=1e-4, rtol=1e-4), "mismatch vs reference"

    # Ragged batch (exercises the pad-to-TM remainder path).
    n2 = 200
    out2 = jax.block_until_ready(mlp_forward(x[:n2], z[:n2], w_slab))
    ref2 = mlp_reference(x[:n2], z[:n2], params)
    assert out2.shape == (n2, OUTPUT_SIZE)
    assert jnp.allclose(out2, ref2, atol=1e-4, rtol=1e-4), "mismatch vs reference (ragged)"

    print("KERNEL_OK")
</pallas_src>

<mosaic_0001>
module attributes {stable_mosaic.version = 11 : i64} {
  func.func @_mlp_kernel(%arg0: i32, %arg1: memref<32x256xf32, #tpu.memory_space<vmem>>, %arg2: memref<8x256xf32, #tpu.memory_space<vmem>>, %arg3: memref<128x128xf32, #tpu.memory_space<vmem>>, %arg4: memref<16x256xf32, #tpu.memory_space<vmem>>, %arg5: memref<128x256xf32, #tpu.memory_space<vmem>>) attributes {dimension_semantics = [#tpu.dimension_semantics<parallel>], iteration_bounds = array<i64: 2>, scalar_prefetch = 0 : i64, scratch_operands = 1 : i64, tpu.core_type = #tpu.core_type<tc>, window_params = [{transform_indices = @transform_0, window_bounds = array<i64: 32, 256>}, {transform_indices = @transform_1, window_bounds = array<i64: 8, 256>}, {pipeline_mode = #tpu.pipeline_mode<synchronous>, transform_indices = @transform_2, window_bounds = array<i64: 128, 128>}, {transform_indices = @transform_3, window_bounds = array<i64: 16, 256>}]} {
    %c0 = arith.constant 0 : index
    %c0_0 = arith.constant 0 : index
    %0 = vector.load %arg1[%c0, %c0_0] : memref<32x256xf32, #tpu.memory_space<vmem>>, vector<32x256xf32>
    %c0_1 = arith.constant 0 : index
    %c0_2 = arith.constant 0 : index
    %1 = vector.load %arg2[%c0_1, %c0_2] : memref<8x256xf32, #tpu.memory_space<vmem>>, vector<8x256xf32>
    %c0_3 = arith.constant 0 : index
    %c0_4 = arith.constant 0 : index
    %2 = vector.load %arg5[%c0_3, %c0_4] : memref<128x256xf32, #tpu.memory_space<vmem>>, vector<32x256xf32>
    tpu.vector_store %arg5[%c0_3, %c0_4], %0 {strides = array<i32>} : memref<128x256xf32, #tpu.memory_space<vmem>>, vector<32x256xf32>,
    %c32 = arith.constant 32 : index
    %c0_5 = arith.constant 0 : index
    %3 = vector.load %arg5[%c32, %c0_5] : memref<128x256xf32, #tpu.memory_space<vmem>>, vector<8x256xf32>
    tpu.vector_store %arg5[%c32, %c0_5], %1 {strides = array<i32>} : memref<128x256xf32, #tpu.memory_space<vmem>>, vector<8x256xf32>,
    %c40 = arith.constant 40 : index
    %c0_6 = arith.constant 0 : index
    %4 = vector.load %arg5[%c40, %c0_6] : memref<128x256xf32, #tpu.memory_space<vmem>>, vector<32x256xf32>
    tpu.vector_store %arg5[%c40, %c0_6], %0 {strides = array<i32>} : memref<128x256xf32, #tpu.memory_space<vmem>>, vector<32x256xf32>,
    %cst = arith.constant 1.000000e+00 : f32
    %5 = vector.broadcast %cst : f32 to vector<56x256xf32>
    %c72 = arith.constant 72 : index
    %c0_7 = arith.constant 0 : index
    %6 = vector.load %arg5[%c72, %c0_7] : memref<128x256xf32, #tpu.memory_space<vmem>>, vector<56x256xf32>
    tpu.vector_store %arg5[%c72, %c0_7], %5 {strides = array<i32>} : memref<128x256xf32, #tpu.memory_space<vmem>>, vector<56x256xf32>,
    %c0_8 = arith.constant 0 : index
    %c0_9 = arith.constant 0 : index
    %7 = vector.load %arg3[%c0_8, %c0_9] : memref<128x128xf32, #tpu.memory_space<vmem>>, vector<32x128xf32>
    %c0_10 = arith.constant 0 : index
    %c0_11 = arith.constant 0 : index
    %8 = vector.load %arg5[%c0_10, %c0_11] : memref<128x256xf32, #tpu.memory_space<vmem>>, vector<128x256xf32>
    %cst_12 = arith.constant dense<0.000000e+00> : vector<32x256xf32>
    %9 = tpu.matmul %7, %8, %cst_12 {dimension_numbers = #tpu.dot_dimension_numbers<[1], [0], [0], [1], [0, 0, 1, 1], [], []>, precision = #tpu.contract_precision<fp32>} : vector<32x128xf32>, vector<128x256xf32>, vector<32x256xf32> -> vector<32x256xf32>
    %cst_13 = arith.constant 0.000000e+00 : f32
    %10 = vector.broadcast %cst_13 : f32 to vector<32x256xf32>
    %11 = arith.maximumf %9, %10 : vector<32x256xf32>
    %c0_14 = arith.constant 0 : index
    %c0_15 = arith.constant 0 : index
    %12 = vector.load %arg5[%c0_14, %c0_15] : memref<128x256xf32, #tpu.memory_space<vmem>>, vector<32x256xf32>
    tpu.vector_store %arg5[%c0_14, %c0_15], %11 {strides = array<i32>} : memref<128x256xf32, #tpu.memory_space<vmem>>, vector<32x256xf32>,
    %c32_16 = arith.constant 32 : index
    %c0_17 = arith.constant 0 : index
    %13 = vector.load %arg3[%c32_16, %c0_17] : memref<128x128xf32, #tpu.memory_space<vmem>>, vector<32x128xf32>
    %c0_18 = arith.constant 0 : index
    %c0_19 = arith.constant 0 : index
    %14 = vector.load %arg5[%c0_18, %c0_19] : memref<128x256xf32, #tpu.memory_space<vmem>>, vector<128x256xf32>
    %cst_20 = arith.constant dense<0.000000e+00> : vector<32x256xf32>
    %15 = tpu.matmul %13, %14, %cst_20 {dimension_numbers = #tpu.dot_dimension_numbers<[1], [0], [0], [1], [0, 0, 1, 1], [], []>, precision = #tpu.contract_precision<fp32>} : vector<32x128xf32>, vector<128x256xf32>, vector<32x256xf32> -> vector<32x256xf32>
    %cst_21 = arith.constant 0.000000e+00 : f32
    %16 = vector.broadcast %cst_21 : f32 to vector<32x256xf32>
    %17 = arith.maximumf %15, %16 : vector<32x256xf32>
    %c0_22 = arith.constant 0 : index
    %c0_23 = arith.constant 0 : index
    %18 = vector.load %arg5[%c0_22, %c0_23] : memref<128x256xf32, #tpu.memory_space<vmem>>, vector<32x256xf32>
    tpu.vector_store %arg5[%c0_22, %c0_23], %17 {strides = array<i32>} : memref<128x256xf32, #tpu.memory_space<vmem>>, vector<32x256xf32>,
    %c64 = arith.constant 64 : index
    %c0_24 = arith.constant 0 : index
    %19 = vector.load %arg3[%c64, %c0_24] : memref<128x128xf32, #tpu.memory_space<vmem>>, vector<32x128xf32>
    %c0_25 = arith.constant 0 : index
    %c0_26 = arith.constant 0 : index
    %20 = vector.load %arg5[%c0_25, %c0_26] : memref<128x256xf32, #tpu.memory_space<vmem>>, vector<128x256xf32>
    %cst_27 = arith.constant dense<0.000000e+00> : vector<32x256xf32>
    %21 = tpu.matmul %19, %20, %cst_27 {dimension_numbers = #tpu.dot_dimension_numbers<[1], [0], [0], [1], [0, 0, 1, 1], [], []>, precision = #tpu.contract_precision<fp32>} : vector<32x128xf32>, vector<128x256xf32>, vector<32x256xf32> -> vector<32x256xf32>
    %cst_28 = arith.constant 0.000000e+00 : f32
    %22 = vector.broadcast %cst_28 : f32 to vector<32x256xf32>
    %23 = arith.maximumf %21, %22 : vector<32x256xf32>
    %c0_29 = arith.constant 0 : index
    %c0_30 = arith.constant 0 : index
    %24 = vector.load %arg5[%c0_29, %c0_30] : memref<128x256xf32, #tpu.memory_space<vmem>>, vector<32x256xf32>
    tpu.vector_store %arg5[%c0_29, %c0_30], %23 {strides = array<i32>} : memref<128x256xf32, #tpu.memory_space<vmem>>, vector<32x256xf32>,
    %c96 = arith.constant 96 : index
    %c0_31 = arith.constant 0 : index
    %25 = vector.load %arg3[%c96, %c0_31] : memref<128x128xf32, #tpu.memory_space<vmem>>, vector<16x128xf32>
    %c0_32 = arith.constant 0 : index
    %c0_33 = arith.constant 0 : index
    %26 = vector.load %arg5[%c0_32, %c0_33] : memref<128x256xf32, #tpu.memory_space<vmem>>, vector<128x256xf32>
    %cst_34 = arith.constant dense<0.000000e+00> : vector<16x256xf32>
    %27 = tpu.matmul %25, %26, %cst_34 {dimension_numbers = #tpu.dot_dimension_numbers<[1], [0], [0], [1], [0, 0, 1, 1], [], []>, precision = #tpu.contract_precision<fp32>} : vector<16x128xf32>, vector<128x256xf32>, vector<16x256xf32> -> vector<16x256xf32>
    %cst_35 = arith.constant 0.000000e+00 : f32
    %28 = vector.broadcast %cst_35 : f32 to vector<16x256xf32>
    %29 = arith.maximumf %27, %28 : vector<16x256xf32>
    %c0_36 = arith.constant 0 : index
    %c0_37 = arith.constant 0 : index
    %30 = vector.load %arg4[%c0_36, %c0_37] : memref<16x256xf32, #tpu.memory_space<vmem>>, vector<16x256xf32>
    tpu.vector_store %arg4[%c0_36, %c0_37], %29 {strides = array<i32>} : memref<16x256xf32, #tpu.memory_space<vmem>>, vector<16x256xf32>,
    return
  }
  func.func @transform_0(%arg0: i32) -> (i32, i32) {
    %c0_i32 = arith.constant 0 : i32
    %c0_i32_0 = arith.constant 0 : i32
    return %c0_i32, %arg0 : i32, i32
  }
  func.func @transform_1(%arg0: i32) -> (i32, i32) {
    %c0_i32 = arith.constant 0 : i32
    %c0_i32_0 = arith.constant 0 : i32
    return %c0_i32, %arg0 : i32, i32
  }
  func.func @transform_2(%arg0: i32) -> (i32, i32) {
    %c0_i32 = arith.constant 0 : i32
    %c0_i32_0 = arith.constant 0 : i32
    %c0_i32_1 = arith.constant 0 : i32
    return %c0_i32, %c0_i32_0 : i32, i32
  }
  func.func @transform_3(%arg0: i32) -> (i32, i32) {
    %c0_i32 = arith.constant 0 : i32
    %c0_i32_0 = arith.constant 0 : i32
    return %c0_i32, %arg0 : i32, i32
  }
}

</mosaic_0001>

<llo_original>
// kernel: _mlp_forward_impl.1
$region0: #{_mlp_forward_impl.1}
  #allocation0 [shape = 'u32[]', space=smem, size = 0x4, offset = 0x4, fixed_abs, tag = 'smem constant byte address 0x4 - core index']
  #allocation1 [shape = 'u32[144,128]{1,0:T(1,128)}', space=vmem, size = 0x12000, scoped, tag = 'internal scratch']
  #allocation2 [shape = 'f32[128,256]{1,0:T(8,128)}', space=vmem, size = 0x20000, scoped, tag = 'scratch operand']
  %s0 = inlined_call_operand.hbm [shape: f32[32,512], index: 0, kind: input, shape index: {}]
  %s1 = inlined_call_operand.hbm [shape: f32[8,512], index: 1, kind: input, shape index: {}]
  %s2 = inlined_call_operand.hbm [shape: f32[128,128], index: 2, kind: input, shape index: {}]
  %s3 = inlined_call_operand.hbm [shape: f32[16,512], index: 3, kind: output, shape index: {}]
  %s4 = sld [smem:[#allocation0]]
  $region57: #{_mlp_forward_impl.1} parent=0
    _
  %s6 = ssub.s32 1, %s4
  %s7 = scalar_select 0, %s6, %s4
  $region1: #{_mlp_forward_impl.1} parent=0
    #allocation3 [shape = 'u8[65536]{0}', space=vmem, size = 0x10000, scoped, tag = 'input window, operand 0']
    #allocation4 [shape = 's32[2]{0}', space=sflag, size = 0x8, scoped, tag = 'scoped memory for _mlp_forward_impl.1']
    #allocation5 [shape = 's32[2]{0}', space=sflag, size = 0x8, scoped, tag = 'scoped memory for _mlp_forward_impl.1']
    #allocation6 [shape = 'u8[16384]{0}', space=vmem, size = 0x4000, scoped, tag = 'input window, operand 1']
    #allocation7 [shape = 's32[2]{0}', space=sflag, size = 0x8, scoped, tag = 'scoped memory for _mlp_forward_impl.1']
    #allocation8 [shape = 'u8[65536]{0}', space=vmem, size = 0x10000, scoped, tag = 'input window, operand 2, single buffered']
    #allocation9 [shape = 'u8[32768]{0}', space=vmem, size = 0x8000, scoped, tag = 'output window, operand 0']
    %8 = vsyncpa [#allocation4], 0
    %s9 = scalar_lea.sflag [#allocation4], 1
    %10 = vsyncpa %s9, 0
    %11 = vsyncpa [#allocation7], 0
    %s12 = scalar_lea.sflag [#allocation7], 1
    %13 = vsyncpa %s12, 0
    %14 = vsyncpa [#allocation5], 0
    %s15 = scalar_lea.sflag [#allocation5], 1
    %16 = vsyncpa %s15, 0
    loop: start=0, step=1, limit=4
    $region2: #{_mlp_forward_impl.1} parent=1 // loop_pre_header
      _
    $region3: #{_mlp_forward_impl.1} parent=1 // loop_header
      %s18 = sphi 0, %s22
      %p19 = scmp.ge.s32.totalorder %s18, 4
      %s28 = sphi 0, %s30
      %s31 = sphi 0, %s28
      %s32 = sphi 0, %s31
      %s48 = sphi 0, %s32
      %s54 = sphi 0, %s56
      %s57 = sphi 0, %s54
      %s58 = sphi 0, %s57
      %s74 = sphi 0, %s58
      %s78 = sphi 0, %s78
      %s80 = sphi 0, %s78
      %s81 = sphi 0, %s80
      %s95 = sphi 0, %s81
      %s101 = sphi 0, %s103
      %s104 = sphi 0, %s101
      %s105 = sphi 0, %s104
      %s121 = sphi 0, %s105
    $region4: #{_mlp_forward_impl.1} parent=1 // loop_header_branch
      %21 = sbr.rel (%p19) target = $region8
    $region5: #{_mlp_forward_impl.1} parent=1 // loop_body
      %s23 = ssub.s32 %s18, 1
      %s24 = ssub.s32 %s18, 2
      %s25 = sadd.s32 %s18, 1
      %s26 = ssub.s32 %s18, %s25
      %p27 = scmp.eq.s32.totalorder %s26, 0
      %s29 = sadd.s32 %s28, 1
      %s30 = scalar_select %p27, %s28, %s29
      %p33 = pneg %p27
      %p34 = scmp.eq.s32.totalorder %s18, 1
      %p35 = por %p33, %p34
      %p36 = scmp.ne.s32.totalorder %s28, %s31
      %p37 = scmp.eq.s32.totalorder %s18, 0
      %p38 = por %p36, %p37
      %p39 = scmp.ne.s32.totalorder %s28, %s31
      %p40 = scmp.eq.s32.totalorder %s23, 1
      %p41 = por %p39, %p40
      %p42 = scmp.ne.s32.totalorder %s31, %s32
      %p43 = scmp.eq.s32.totalorder %s23, 0
      %p44 = por %p42, %p43
      %p45 = scmp.ne.s32.totalorder %s31, %s32
      %p46 = scmp.eq.s32.totalorder %s24, 1
      %p47 = por %p45, %p46
      %p49 = scmp.ne.s32.totalorder %s32, %s48
      %p50 = scmp.eq.s32.totalorder %s24, 0
      %p51 = por %p49, %p50
      %s52 = ssub.s32 %s18, %s25
      %p53 = scmp.eq.s32.totalorder %s52, 0
      %s55 = sadd.s32 %s54, 1
      %s56 = scalar_select %p53, %s54, %s55
      %p59 = pneg %p53
      %p60 = scmp.eq.s32.totalorder %s18, 1
      %p61 = por %p59, %p60
      %p62 = scmp.ne.s32.totalorder %s54, %s57
      %p63 = scmp.eq.s32.totalorder %s18, 0
      %p64 = por %p62, %p63
      %p65 = scmp.ne.s32.totalorder %s54, %s57
      %p66 = scmp.eq.s32.totalorder %s23, 1
      %p67 = por %p65, %p66
      %p68 = scmp.ne.s32.totalorder %s57, %s58
      %p69 = scmp.eq.s32.totalorder %s23, 0
      %p70 = por %p68, %p69
      %p71 = scmp.ne.s32.totalorder %s57, %s58
      %p72 = scmp.eq.s32.totalorder %s24, 1
      %p73 = por %p71, %p72
      %p75 = scmp.ne.s32.totalorder %s58, %s74
      %p76 = scmp.eq.s32.totalorder %s24, 0
      %p77 = por %p75, %p76
      %s79 = sadd.s32 %s78, 1
      %p82 = scmp.eq.s32.totalorder %s18, 1
      %p83 = scmp.ne.s32.totalorder %s78, %s80
      %p84 = scmp.eq.s32.totalorder %s18, 0
      %p85 = por %p83, %p84
      %p86 = scmp.ne.s32.totalorder %s78, %s80
      %p87 = scmp.eq.s32.totalorder %s23, 1
      %p88 = por %p86, %p87
      %p89 = scmp.ne.s32.totalorder %s80, %s81
      %p90 = scmp.eq.s32.totalorder %s23, 0
      %p91 = por %p89, %p90
      %p92 = scmp.ne.s32.totalorder %s80, %s81
      %p93 = scmp.eq.s32.totalorder %s24, 1
      %p94 = por %p92, %p93
      %p96 = scmp.ne.s32.totalorder %s81, %s95
      %p97 = scmp.eq.s32.totalorder %s24, 0
      %p98 = por %p96, %p97
      %s99 = ssub.s32 %s18, %s25
      %p100 = scmp.eq.s32.totalorder %s99, 0
      %s102 = sadd.s32 %s101, 1
      %s103 = scalar_select %p100, %s101, %s102
      %p106 = pneg %p100
      %p107 = scmp.eq.s32.totalorder %s18, 1
      %p108 = por %p106, %p107
      %p109 = scmp.ne.s32.totalorder %s101, %s104
      %p110 = scmp.eq.s32.totalorder %s18, 0
      %p111 = por %p109, %p110
      %p112 = scmp.ne.s32.totalorder %s101, %s104
      %p113 = scmp.eq.s32.totalorder %s23, 1
      %p114 = por %p112, %p113
      %p115 = scmp.ne.s32.totalorder %s104, %s105
      %p116 = scmp.eq.s32.totalorder %s23, 0
      %p117 = por %p115, %p116
      %p118 = scmp.ne.s32.totalorder %s104, %s105
      %p119 = scmp.eq.s32.totalorder %s24, 1
      %p120 = por %p118, %p119
      %p122 = scmp.ne.s32.totalorder %s105, %s121
      %p123 = scmp.eq.s32.totalorder %s24, 0
      %p124 = por %p122, %p123
      %p125 = scmp.le.s32.totalorder 1, %s18
      %p126 = scmp.lt.s32.totalorder %s18, 3
      %p127 = pnand %p125, %p126
      %p128 = pneg %p127
      // Predicated region
      $region9: #{_mlp_forward_impl.1} parent=5 // pred_check
        _
      $region10: #{_mlp_forward_impl.1} parent=5 // pred_check_branch
        %130 = sbr.rel (%p127) target = $region12
      $region11: #{_mlp_forward_impl.1} parent=5 // pred_region
        %s131 = ssub.s32 %s18, 1
        // Predicated region
        $region13: #{_mlp_forward_impl.1} parent=11 // pred_check
          %p132 = pneg %p91
        $region14: #{_mlp_forward_impl.1} parent=11 // pred_check_branch
          %134 = sbr.rel (%p132) target = $region16
        $region15: #{_mlp_forward_impl.1} parent=11 // pred_region
          %s136 = ssub.s32 2048, 2048
          %137 = vsyncadd [#allocation7], %s136
          %s138 = sshll.u32 [#allocation8], 4
          %s139 = int_to_ptr.vmem [resolvable:$true] %s138
          %144 = dma.hbm_to_vmem [thread:$0]  %s2, 2048, %s139, [#allocation7], 128, 128, 8
        $region16: #{_mlp_forward_impl.1} parent=11 // pred_fallthru
          _
      $region12: #{_mlp_forward_impl.1} parent=5 // pred_fallthru
        _
      %p145 = scmp.lt.s32.totalorder %s18, 2
      // Predicated region
      $region17: #{_mlp_forward_impl.1} parent=5 // pred_check
        %p146 = pneg %p145
      $region18: #{_mlp_forward_impl.1} parent=5 // pred_check_branch
        %148 = sbr.rel (%p146) target = $region20
      $region19: #{_mlp_forward_impl.1} parent=5 // pred_region
        // Predicated region
        $region21: #{_mlp_forward_impl.1} parent=19 // pred_check
          %p149 = pneg %p38
        $region22: #{_mlp_forward_impl.1} parent=19 // pred_check_branch
          %151 = sbr.rel (%p149) target = $region24
        $region23: #{_mlp_forward_impl.1} parent=19 // pred_region
          %s152 = sand.u32 %s28, 1
          %s153 = scalar_lea.sflag [#allocation4], %s152
          %s154 = sand.u32 %s28, 1
          %s155 = smul.addr %s154, 64
          %s156 = scalar_lea.vmem [#allocation3], %s155
          %s157 = smul.u32 2, %s18
          %s159 = ssub.s32 1024, 1024
          %160 = vsyncadd %s153, %s159
          %s161 = smul.addr %s157, 128
          %s162 = scalar_lea.hbm %s0, %s161
          %s163 = sshll.u32 %s156, 4
          %s164 = int_to_ptr.vmem [resolvable:$true] %s163
          %169 = dma.hbm_to_vmem [thread:$0]  %s162, 1024, %s164, %s153, 512, 256, 16
        $region24: #{_mlp_forward_impl.1} parent=19 // pred_fallthru
          _
        // Predicated region
        $region25: #{_mlp_forward_impl.1} parent=19 // pred_check
          %p170 = pneg %p64
        $region26: #{_mlp_forward_impl.1} parent=19 // pred_check_branch
          %172 = sbr.rel (%p170) target = $region28
        $region27: #{_mlp_forward_impl.1} parent=19 // pred_region
          %s173 = sand.u32 %s18, 1
          %s174 = scalar_lea.sflag [#allocation7], %s173
          %s175 = sand.u32 %s54, 1
          %s176 = smul.addr %s175, 16
          %s177 = scalar_lea.vmem [#allocation6], %s176
          %s178 = smul.u32 2, %s18
          %s180 = ssub.s32 256, 256
          %181 = vsyncadd %s174, %s180
          %s182 = smul.addr %s178, 128
          %s183 = scalar_lea.hbm %s1, %s182
          %s185 = sshll.u32 %s177, 4
          %s186 = int_to_ptr.vmem [resolvable:$true] %s185
          %188 = dma.hbm_to_vmem [thread:$0]  %s183, 256, %s186, %s174
        $region28: #{_mlp_forward_impl.1} parent=19 // pred_fallthru
          _
      $region20: #{_mlp_forward_impl.1} parent=5 // pred_fallthru
        _
      %p189 = scmp.le.s32.totalorder 1, %s18
      %p190 = scmp.lt.s32.totalorder %s18, 3
      %p191 = pnand %p189, %p190
      %p192 = pneg %p191
      // Predicated region
      $region29: #{_mlp_forward_impl.1} parent=5 // pred_check
        _
      $region30: #{_mlp_forward_impl.1} parent=5 // pred_check_branch
        %194 = sbr.rel (%p191) target = $region32
      $region31: #{_mlp_forward_impl.1} parent=5 // pred_region
        %s195 = ssub.s32 %s18, 1
        %s196 = sand.u32 %s31, 1
        %s197 = scalar_lea.sflag [#allocation4], %s196
        %s198 = sand.u32 %s31, 1
        %s199 = smul.addr %s198, 64
        %s200 = scalar_lea.vmem [#allocation3], %s199
        // Predicated region
        $region33: #{_mlp_forward_impl.1} parent=31 // pred_check
          %p201 = pneg %p44
        $region34: #{_mlp_forward_impl.1} parent=31 // pred_check_branch
          %203 = sbr.rel (%p201) target = $region36
        $region35: #{_mlp_forward_impl.1} parent=31 // pred_region
          %204 = dma.done %s197, 1024
        $region36: #{_mlp_forward_impl.1} parent=31 // pred_fallthru
          _
        %s205 = sand.u32 %s23, 1
        %s206 = scalar_lea.sflag [#allocation7], %s205
        %s207 = sand.u32 %s57, 1
        %s208 = smul.addr %s207, 16
        %s209 = scalar_lea.vmem [#allocation6], %s208
        // Predicated region
        $region37: #{_mlp_forward_impl.1} parent=31 // pred_check
          %p210 = pneg %p70
        $region38: #{_mlp_forward_impl.1} parent=31 // pred_check_branch
          %212 = sbr.rel (%p210) target = $region40
        $region39: #{_mlp_forward_impl.1} parent=31 // pred_region
          %213 = dma.done %s206, 256
        $region40: #{_mlp_forward_impl.1} parent=31 // pred_fallthru
          _
        // Predicated region
        $region41: #{_mlp_forward_impl.1} parent=31 // pred_check
          %p214 = pneg %p91
        $region42: #{_mlp_forward_impl.1} parent=31 // pred_check_branch
          %216 = sbr.rel (%p214) target = $region44
        $region43: #{_mlp_forward_impl.1} parent=31 // pred_region
          %217 = dma.done [#allocation7], 2048
        $region44: #{_mlp_forward_impl.1} parent=31 // pred_fallthru
          _
        %s218 = sand.u32 %s31, 1
        %s219 = scalar_lea.sflag [#allocation4], %s218
        %s220 = sand.u32 %s31, 1
        %s221 = smul.addr %s220, 64
        %s222 = scalar_lea.vmem [#allocation3], %s221
        %p223 = pneg %p44
        %p224 = pneg %p41
        %s225 = sand.u32 %s23, 1
        %s226 = scalar_lea.sflag [#allocation7], %s225
        %s227 = sand.u32 %s57, 1
        %s228 = smul.addr %s227, 16
        %s229 = scalar_lea.vmem [#allocation6], %s228
        %p230 = pneg %p70
        %p231 = pneg %p67
        %p232 = pneg %p91
        %p233 = pneg %p88
        %p234 = pneg %p117
        %p235 = pneg %p114
        %s236 = sand.u32 %s104, 1
        %s237 = scalar_lea.sflag [#allocation5], %s236
        %s238 = sand.u32 %s104, 1
        %s239 = smul.addr %s238, 32
        %s240 = scalar_lea.vmem [#allocation9], %s239
        %s241 = smul.u32 2, %s23
        %s242 = smul.u32 2, %s23
        %s243 = smul.u32 2, %s23
        %v244 = vld [vmem:[%s200] sm:$0xff]
        %v245 = vld [vmem:[%s200 + $0x8] sm:$0xff]
        %v246 = vld [vmem:[%s200 + $0x10] sm:$0xff]
        %v247 = vld [vmem:[%s200 + $0x18] sm:$0xff]
        %v248 = vld [vmem:[%s200 + $0x20] sm:$0xff]
        %v249 = vld [vmem:[%s200 + $0x28] sm:$0xff]
        %v250 = vld [vmem:[%s200 + $0x30] sm:$0xff]
        %v251 = vld [vmem:[%s200 + $0x38] sm:$0xff]
        %v252 = vld [vmem:[%s209] sm:$0xff]
        %v253 = vld [vmem:[%s209 + $0x8] sm:$0xff]
        %254 = vst [vmem:[#allocation2] sm:$0xff] %v244
        %255 = vst [vmem:[#allocation2 + $0x8] sm:$0xff] %v245
        %256 = vst [vmem:[#allocation2 + $0x10] sm:$0xff] %v246
        %257 = vst [vmem:[#allocation2 + $0x18] sm:$0xff] %v247
        %258 = vst [vmem:[#allocation2 + $0x20] sm:$0xff] %v248
        %259 = vst [vmem:[#allocation2 + $0x28] sm:$0xff] %v249
        %260 = vst [vmem:[#allocation2 + $0x30] sm:$0xff] %v250
        %261 = vst [vmem:[#allocation2 + $0x38] sm:$0xff] %v251
        %262 = vst [vmem:[#allocation2 + $0x40] sm:$0xff] %v252
        %263 = vst [vmem:[#allocation2 + $0x48] sm:$0xff] %v253
        %264 = vst [vmem:[#allocation2 + $0x50] sm:$0xff] %v244
        %265 = vst [vmem:[#allocation2 + $0x58] sm:$0xff] %v245
        %266 = vst [vmem:[#allocation2 + $0x60] sm:$0xff] %v246
        %267 = vst [vmem:[#allocation2 + $0x68] sm:$0xff] %v247
        %268 = vst [vmem:[#allocation2 + $0x70] sm:$0xff] %v248
        %269 = vst [vmem:[#allocation2 + $0x78] sm:$0xff] %v249
        %270 = vst [vmem:[#allocation2 + $0x80] sm:$0xff] %v250
        %271 = vst [vmem:[#allocation2 + $0x88] sm:$0xff] %v251
        %272 = vst [vmem:[#allocation2 + $0x90] sm:$0xff] 1.0
        %273 = vst [vmem:[#allocation2 + $0x98] sm:$0xff] 1.0
        %274 = vst [vmem:[#allocation2 + $0xa0] sm:$0xff] 1.0
        %275 = vst [vmem:[#allocation2 + $0xa8] sm:$0xff] 1.0
        %276 = vst [vmem:[#allocation2 + $0xb0] sm:$0xff] 1.0
        %277 = vst [vmem:[#allocation2 + $0xb8] sm:$0xff] 1.0
        %278 = vst [vmem:[#allocation2 + $0xc0] sm:$0xff] 1.0
        %279 = vst [vmem:[#allocation2 + $0xc8] sm:$0xff] 1.0
        %280 = vst [vmem:[#allocation2 + $0xd0] sm:$0xff] 1.0
        %281 = vst [vmem:[#allocation2 + $0xd8] sm:$0xff] 1.0
        %282 = vst [vmem:[#allocation2 + $0xe0] sm:$0xff] 1.0
        %283 = vst [vmem:[#allocation2 + $0xe8] sm:$0xff] 1.0
        %284 = vst [vmem:[#allocation2 + $0xf0] sm:$0xff] 1.0
        %285 = vst [vmem:[#allocation2 + $0xf8] sm:$0xff] 1.0
        %v286 = vld [vmem:[#allocation8] sm:$0xff]
        %v287 = vld [vmem:[#allocation8 + $0x8] sm:$0xff]
        %v288 = vld [vmem:[#allocation8 + $0x10] sm:$0xff]
        %v289 = vld [vmem:[#allocation8 + $0x18] sm:$0xff]
        %v290 = vld [vmem:[#allocation2] sm:$0xff]
        %v291 = vld [vmem:[#allocation2 + $0x8] sm:$0xff]
        %v292 = vld [vmem:[#allocation2 + $0x10] sm:$0xff]
        %v293 = vld [vmem:[#allocation2 + $0x18] sm:$0xff]
        %v294 = vld [vmem:[#allocation2 + $0x20] sm:$0xff]
        %v295 = vld [vmem:[#allocation2 + $0x28] sm:$0xff]
        %v296 = vld [vmem:[#allocation2 + $0x30] sm:$0xff]
        %v297 = vld [vmem:[#allocation2 + $0x38] sm:$0xff]
        %v298 = vld [vmem:[#allocation2 + $0x40] sm:$0xff]
        %v299 = vld [vmem:[#allocation2 + $0x48] sm:$0xff]
        %v300 = vld [vmem:[#allocation2 + $0x50] sm:$0xff]
        %v301 = vld [vmem:[#allocation2 + $0x58] sm:$0xff]
        %v302 = vld [vmem:[#allocation2 + $0x60] sm:$0xff]
        %v303 = vld [vmem:[#allocation2 + $0x68] sm:$0xff]
        %v304 = vld [vmem:[#allocation2 + $0x70] sm:$0xff]
        %v305 = vld [vmem:[#allocation2 + $0x78] sm:$0xff]
        %v306 = vld [vmem:[#allocation2 + $0x80] sm:$0xff]
        %v307 = vld [vmem:[#allocation2 + $0x88] sm:$0xff]
        %v308 = vld [vmem:[#allocation2 + $0x90] sm:$0xff]
        %v309 = vld [vmem:[#allocation2 + $0x98] sm:$0xff]
        %v310 = vld [vmem:[#allocation2 + $0xa0] sm:$0xff]
        %v311 = vld [vmem:[#allocation2 + $0xa8] sm:$0xff]
        %v312 = vld [vmem:[#allocation2 + $0xb0] sm:$0xff]
        %v313 = vld [vmem:[#allocation2 + $0xb8] sm:$0xff]
        %v314 = vld [vmem:[#allocation2 + $0xc0] sm:$0xff]
        %v315 = vld [vmem:[#allocation2 + $0xc8] sm:$0xff]
        %v316 = vld [vmem:[#allocation2 + $0xd0] sm:$0xff]
        %v317 = vld [vmem:[#allocation2 + $0xd8] sm:$0xff]
        %v318 = vld [vmem:[#allocation2 + $0xe0] sm:$0xff]
        %v319 = vld [vmem:[#allocation2 + $0xe8] sm:$0xff]
        %v320 = vld [vmem:[#allocation2 + $0xf0] sm:$0xff]
        %v321 = vld [vmem:[#allocation2 + $0xf8] sm:$0xff]
        %v322 = vand.u32 %v291, 4294901760
        %323 = vmatprep.subr.mxu0 %v322
        %v324 = vand.u32 %v290, 4294901760
        %325 = vmatpush1.msra.mxu0 %v324
        %v326 = vand.u32 %v293, 4294901760
        %327 = vmatprep.subr.mxu0 %v326
        %v328 = vand.u32 %v292, 4294901760
        %329 = vmatpush1.msra.mxu0 %v328
        %v330 = vand.u32 %v295, 4294901760
        %331 = vmatprep.subr.mxu0 %v330
        %v332 = vand.u32 %v294, 4294901760
        %333 = vmatpush1.msra.mxu0 %v332
        %v334 = vand.u32 %v297, 4294901760
        %335 = vmatprep.subr.mxu0 %v334
        %v336 = vand.u32 %v296, 4294901760
        %337 = vmatpush1.msra.mxu0 %v336
        %v338 = vand.u32 %v299, 4294901760
        %339 = vmatprep.subr.mxu0 %v338
        %v340 = vand.u32 %v298, 4294901760
        %341 = vmatpush1.msra.mxu0 %v340
        %v342 = vand.u32 %v301, 4294901760
        %343 = vmatprep.subr.mxu0 %v342
        %v344 = vand.u32 %v300, 4294901760
        %345 = vmatpush1.msra.mxu0 %v344
        %v346 = vand.u32 %v303, 4294901760
        %347 = vmatprep.subr.mxu0 %v346
        %v348 = vand.u32 %v302, 4294901760
        %349 = vmatpush1.msra.mxu0 %v348
        %v350 = vand.u32 %v305, 4294901760
        %351 = vmatprep.subr.mxu0 %v350
        %v352 = vand.u32 %v304, 4294901760
        %353 = vmatpush1.msra.mxu0 %v352
        %v354 = vand.u32 %v307, 4294901760
        %355 = vmatprep.subr.mxu0 %v354
        %v356 = vand.u32 %v306, 4294901760
        %357 = vmatpush1.msra.mxu0 %v356
        %v358 = vand.u32 %v309, 4294901760
        %359 = vmatprep.subr.mxu0 %v358
        %v360 = vand.u32 %v308, 4294901760
        %361 = vmatpush1.msra.mxu0 %v360
        %v362 = vand.u32 %v311, 4294901760
        %363 = vmatprep.subr.mxu0 %v362
        %v364 = vand.u32 %v310, 4294901760
        %365 = vmatpush1.msra.mxu0 %v364
        %v366 = vand.u32 %v313, 4294901760
        %367 = vmatprep.subr.mxu0 %v366
        %v368 = vand.u32 %v312, 4294901760
        %369 = vmatpush1.msra.mxu0 %v368
        %v370 = vand.u32 %v315, 4294901760
        %371 = vmatprep.subr.mxu0 %v370
        %v372 = vand.u32 %v314, 4294901760
        %373 = vmatpush1.msra.mxu0 %v372
        %v374 = vand.u32 %v317, 4294901760
        %375 = vmatprep.subr.mxu0 %v374
        %v376 = vand.u32 %v316, 4294901760
        %377 = vmatpush1.msra.mxu0 %v376
        %v378 = vand.u32 %v319, 4294901760
        %379 = vmatprep.subr.mxu0 %v378
        %v380 = vand.u32 %v318, 4294901760
        %381 = vmatpush1.msra.mxu0 %v380
        %v382 = vand.u32 %v321, 4294901760
        %383 = vmatprep.subr.mxu0 %v382
        %v384 = vand.u32 %v320, 4294901760
        %385 = vmatpush1.msra.mxu0 %v384
        %386 = vmatprep.subr.mxu0 0.0
        %387 = vmatpush1.msra.mxu0 0.0
        %388 = vmatprep.subr.mxu0 0.0
        %389 = vmatpush1.msra.mxu0 0.0
        %390 = vmatprep.subr.mxu0 0.0
        %391 = vmatpush1.msra.mxu0 0.0
        %392 = vmatprep.subr.mxu0 0.0
        %393 = vmatpush1.msra.mxu0 0.0
        %394 = vmatprep.subr.mxu0 0.0
        %395 = vmatpush1.msra.mxu0 0.0
        %396 = vmatprep.subr.mxu0 0.0
        %397 = vmatpush1.msra.mxu0 0.0
        %398 = vmatprep.subr.mxu0 0.0
        %399 = vmatpush1.msra.mxu0 0.0
        %400 = vmatprep.subr.mxu0 0.0
        %401 = vmatpush1.msra.mxu0 0.0
        %402 = vmatprep.subr.mxu0 0.0
        %403 = vmatpush1.msra.mxu0 0.0
        %404 = vmatprep.subr.mxu0 0.0
        %405 = vmatpush1.msra.mxu0 0.0
        %406 = vmatprep.subr.mxu0 0.0
        %407 = vmatpush1.msra.mxu0 0.0
        %408 = vmatprep.subr.mxu0 0.0
        %409 = vmatpush1.msra.mxu0 0.0
        %410 = vmatprep.subr.mxu0 0.0
        %411 = vmatpush1.msra.mxu0 0.0
        %412 = vmatprep.subr.mxu0 0.0
        %413 = vmatpush1.msra.mxu0 0.0
        %414 = vmatprep.subr.mxu0 0.0
        %415 = vmatpush1.msra.mxu0 0.0
        %416 = vmatprep.subr.mxu0 0.0
        %417 = vmatpush1.msra.mxu0 0.0
        %418 = vmatprep.mubr.f32.mxu0 0.0
        %v419 = vand.u32 %v286, 4294901760
        %v420 = vsub.f32 %v286, %v419
        %v421 = vand.u32 %v420, 4294901760
        %v422 = vsub.f32 %v420, %v421
        %v423 = vand.u32 %v422, 4294901760
        %424 = vmatmul.mubr.f32.gmra.mrb[0].mxu0 %v423
        %v425 = vpop.f32.mrb[0].mxu0
        %v426 = vadd.f32 0.0, %v425
        %v427 = vpop.f32.mrb[0].mxu0
        %v428 = vadd.f32 0.0, %v427
        %429 = vmatprep.mubr.f32.mxu0 0.0
        %v430 = vand.u32 %v287, 4294901760
        %v431 = vsub.f32 %v287, %v430
        %v432 = vand.u32 %v431, 4294901760
        %v433 = vsub.f32 %v431, %v432
        %v434 = vand.u32 %v433, 4294901760
        %435 = vmatmul.mubr.f32.gmra.mrb[0].mxu0 %v434
        %v436 = vpop.f32.mrb[0].mxu0
        %v437 = vadd.f32 0.0, %v436
        %v438 = vpop.f32.mrb[0].mxu0
        %v439 = vadd.f32 0.0, %v438
        %440 = vmatprep.mubr.f32.mxu0 0.0
        %v441 = vand.u32 %v288, 4294901760
        %v442 = vsub.f32 %v288, %v441
        %v443 = vand.u32 %v442, 4294901760
        %v444 = vsub.f32 %v442, %v443
        %v445 = vand.u32 %v444, 4294901760
        %446 = vmatmul.mubr.f32.gmra.mrb[0].mxu0 %v445
        %v447 = vpop.f32.mrb[0].mxu0
        %v448 = vadd.f32 0.0, %v447
        %v449 = vpop.f32.mrb[0].mxu0
        %v450 = vadd.f32 0.0, %v449
        %451 = vmatprep.mubr.f32.mxu0 0.0
        %v452 = vand.u32 %v289, 4294901760
        %v453 = vsub.f32 %v289, %v452
        %v454 = vand.u32 %v453, 4294901760
        %v455 = vsub.f32 %v453, %v454
        %v456 = vand.u32 %v455, 4294901760
        %457 = vmatmul.mubr.f32.gmra.mrb[0].mxu0 %v456
        %v458 = vpop.f32.mrb[0].mxu0
        %v459 = vadd.f32 0.0, %v458
        %v460 = vpop.f32.mrb[0].mxu0
        %v461 = vadd.f32 0.0, %v460
        %462 = vdwg.mxu0
        %v463 = vand.u32 %v291, 4294901760
        %v464 = vsub.f32 %v291, %v463
        %v465 = vand.u32 %v464, 4294901760
        %v466 = vsub.f32 %v464, %v465
        %v467 = vand.u32 %v466, 4294901760
        %468 = vmatprep.subr.mxu0 %v467
        %v469 = vand.u32 %v290, 4294901760
        %v470 = vsub.f32 %v290, %v469
        %v471 = vand.u32 %v470, 4294901760
        %v472 = vsub.f32 %v470, %v471
        %v473 = vand.u32 %v472, 4294901760
        %474 = vmatpush1.msra.mxu0 %v473
        %v475 = vand.u32 %v293, 4294901760
        %v476 = vsub.f32 %v293, %v475
        %v477 = vand.u32 %v476, 4294901760
        %v478 = vsub.f32 %v476, %v477
        %v479 = vand.u32 %v478, 4294901760
        %480 = vmatprep.subr.mxu0 %v479
        %v481 = vand.u32 %v292, 4294901760
        %v482 = vsub.f32 %v292, %v481
        %v483 = vand.u32 %v482, 4294901760
        %v484 = vsub.f32 %v482, %v483
        %v485 = vand.u32 %v484, 4294901760
        %486 = vmatpush1.msra.mxu0 %v485
        %v487 = vand.u32 %v295, 4294901760
        %v488 = vsub.f32 %v295, %v487
        %v489 = vand.u32 %v488, 4294901760
        %v490 = vsub.f32 %v488, %v489
        %v491 = vand.u32 %v490, 4294901760
        %492 = vmatprep.subr.mxu0 %v491
        %v493 = vand.u32 %v294, 4294901760
        %v494 = vsub.f32 %v294, %v493
        %v495 = vand.u32 %v494, 4294901760
        %v496 = vsub.f32 %v494, %v495
        %v497 = vand.u32 %v496, 4294901760
        %498 = vmatpush1.msra.mxu0 %v497
        %v499 = vand.u32 %v297, 4294901760
        %v500 = vsub.f32 %v297, %v499
        %v501 = vand.u32 %v500, 4294901760
        %v502 = vsub.f32 %v500, %v501
        %v503 = vand.u32 %v502, 4294901760
        %504 = vmatprep.subr.mxu0 %v503
        %v505 = vand.u32 %v296, 4294901760
        %v506 = vsub.f32 %v296, %v505
        %v507 = vand.u32 %v506, 4294901760
        %v508 = vsub.f32 %v506, %v507
        %v509 = vand.u32 %v508, 4294901760
        %510 = vmatpush1.msra.mxu0 %v509
        %v511 = vand.u32 %v299, 4294901760
        %v512 = vsub.f32 %v299, %v511
        %v513 = vand.u32 %v512, 4294901760
        %v514 = vsub.f32 %v512, %v513
        %v515 = vand.u32 %v514, 4294901760
        %516 = vmatprep.subr.mxu0 %v515
        %v517 = vand.u32 %v298, 4294901760
        %v518 = vsub.f32 %v298, %v517
        %v519 = vand.u32 %v518, 4294901760
        %v520 = vsub.f32 %v518, %v519
        %v521 = vand.u32 %v520, 4294901760
        %522 = vmatpush1.msra.mxu0 %v521
        %v523 = vand.u32 %v301, 4294901760
        %v524 = vsub.f32 %v301, %v523
        %v525 = vand.u32 %v524, 4294901760
        %v526 = vsub.f32 %v524, %v525
        %v527 = vand.u32 %v526, 4294901760
        %528 = vmatprep.subr.mxu0 %v527
        %v529 = vand.u32 %v300, 4294901760
        %v530 = vsub.f32 %v300, %v529
        %v531 = vand.u32 %v530, 4294901760
        %v532 = vsub.f32 %v530, %v531
        %v533 = vand.u32 %v532, 4294901760
        %534 = vmatpush1.msra.mxu0 %v533
        %v535 = vand.u32 %v303, 4294901760
        %v536 = vsub.f32 %v303, %v535
        %v537 = vand.u32 %v536, 4294901760
        %v538 = vsub.f32 %v536, %v537
        %v539 = vand.u32 %v538, 4294901760
        %540 = vmatprep.subr.mxu0 %v539
        %v541 = vand.u32 %v302, 4294901760
        %v542 = vsub.f32 %v302, %v541
        %v543 = vand.u32 %v542, 4294901760
        %v544 = vsub.f32 %v542, %v543
        %v545 = vand.u32 %v544, 4294901760
        %546 = vmatpush1.msra.mxu0 %v545
        %v547 = vand.u32 %v305, 4294901760
        %v548 = vsub.f32 %v305, %v547
        %v549 = vand.u32 %v548, 4294901760
        %v550 = vsub.f32 %v548, %v549
        %v551 = vand.u32 %v550, 4294901760
        %552 = vmatprep.subr.mxu0 %v551
        %v553 = vand.u32 %v304, 4294901760
        %v554 = vsub.f32 %v304, %v553
        %v555 = vand.u32 %v554, 4294901760
        %v556 = vsub.f32 %v554, %v555
        %v557 = vand.u32 %v556, 4294901760
        %558 = vmatpush1.msra.mxu0 %v557
        %v559 = vand.u32 %v307, 4294901760
        %v560 = vsub.f32 %v307, %v559
        %v561 = vand.u32 %v560, 4294901760
        %v562 = vsub.f32 %v560, %v561
        %v563 = vand.u32 %v562, 4294901760
        %564 = vmatprep.subr.mxu0 %v563
        %v565 = vand.u32 %v306, 4294901760
        %v566 = vsub.f32 %v306, %v565
        %v567 = vand.u32 %v566, 4294901760
        %v568 = vsub.f32 %v566, %v567
        %v569 = vand.u32 %v568, 4294901760
        %570 = vmatpush1.msra.mxu0 %v569
        %v571 = vand.u32 %v309, 4294901760
        %v572 = vsub.f32 %v309, %v571
        %v573 = vand.u32 %v572, 4294901760
        %v574 = vsub.f32 %v572, %v573
        %v575 = vand.u32 %v574, 4294901760
        %576 = vmatprep.subr.mxu0 %v575
        %v577 = vand.u32 %v308, 4294901760
        %v578 = vsub.f32 %v308, %v577
        %v579 = vand.u32 %v578, 4294901760
        %v580 = vsub.f32 %v578, %v579
        %v581 = vand.u32 %v580, 4294901760
        %582 = vmatpush1.msra.mxu0 %v581
        %v583 = vand.u32 %v311, 4294901760
        %v584 = vsub.f32 %v311, %v583
        %v585 = vand.u32 %v584, 4294901760
        %v586 = vsub.f32 %v584, %v585
        %v587 = vand.u32 %v586, 4294901760
        %588 = vmatprep.subr.mxu0 %v587
        %v589 = vand.u32 %v310, 4294901760
        %v590 = vsub.f32 %v310, %v589
        %v591 = vand.u32 %v590, 4294901760
        %v592 = vsub.f32 %v590, %v591
        %v593 = vand.u32 %v592, 4294901760
        %594 = vmatpush1.msra.mxu0 %v593
        %v595 = vand.u32 %v313, 4294901760
        %v596 = vsub.f32 %v313, %v595
        %v597 = vand.u32 %v596, 4294901760
        %v598 = vsub.f32 %v596, %v597
        %v599 = vand.u32 %v598, 4294901760
        %600 = vmatprep.subr.mxu0 %v599
        %v601 = vand.u32 %v312, 4294901760
        %v602 = vsub.f32 %v312, %v601
        %v603 = vand.u32 %v602, 4294901760
        %v604 = vsub.f32 %v602, %v603
        %v605 = vand.u32 %v604, 4294901760
        %606 = vmatpush1.msra.mxu0 %v605
        %v607 = vand.u32 %v315, 4294901760
        %v608 = vsub.f32 %v315, %v607
        %v609 = vand.u32 %v608, 4294901760
        %v610 = vsub.f32 %v608, %v609
        %v611 = vand.u32 %v610, 4294901760
        %612 = vmatprep.subr.mxu0 %v611
        %v613 = vand.u32 %v314, 4294901760
        %v614 = vsub.f32 %v314, %v613
        %v615 = vand.u32 %v614, 4294901760
        %v616 = vsub.f32 %v614, %v615
        %v617 = vand.u32 %v616, 4294901760
        %618 = vmatpush1.msra.mxu0 %v617
        %v619 = vand.u32 %v317, 4294901760
        %v620 = vsub.f32 %v317, %v619
        %v621 = vand.u32 %v620, 4294901760
        %v622 = vsub.f32 %v620, %v621
        %v623 = vand.u32 %v622, 4294901760
        %624 = vmatprep.subr.mxu0 %v623
        %v625 = vand.u32 %v316, 4294901760
        %v626 = vsub.f32 %v316, %v625
        %v627 = vand.u32 %v626, 4294901760
        %v628 = vsub.f32 %v626, %v627
        %v629 = vand.u32 %v628, 4294901760
        %630 = vmatpush1.msra.mxu0 %v629
        %v631 = vand.u32 %v319, 4294901760
        %v632 = vsub.f32 %v319, %v631
        %v633 = vand.u32 %v632, 4294901760
        %v634 = vsub.f32 %v632, %v633
        %v635 = vand.u32 %v634, 4294901760
        %636 = vmatprep.subr.mxu0 %v635
        %v637 = vand.u32 %v318, 4294901760
        %v638 = vsub.f32 %v318, %v637
        %v639 = vand.u32 %v638, 4294901760
        %v640 = vsub.f32 %v638, %v639
        %v641 = vand.u32 %v640, 4294901760
        %642 = vmatpush1.msra.mxu0 %v641
        %v643 = vand.u32 %v321, 4294901760
        %v644 = vsub.f32 %v321, %v643
        %v645 = vand.u32 %v644, 4294901760
        %v646 = vsub.f32 %v644, %v645
        %v647 = vand.u32 %v646, 4294901760
        %648 = vmatprep.subr.mxu0 %v647
        %v649 = vand.u32 %v320, 4294901760
        %v650 = vsub.f32 %v320, %v649
        %v651 = vand.u32 %v650, 4294901760
        %v652 = vsub.f32 %v650, %v651
        %v653 = vand.u32 %v652, 4294901760
        %654 = vmatpush1.msra.mxu0 %v653
        %655 = vmatprep.subr.mxu0 0.0
        %656 = vmatpush1.msra.mxu0 0.0
        %657 = vmatprep.subr.mxu0 0.0
        %658 = vmatpush1.msra.mxu0 0.0
        %659 = vmatprep.subr.mxu0 0.0
        %660 = vmatpush1.msra.mxu0 0.0
        %661 = vmatprep.subr.mxu0 0.0
        %662 = vmatpush1.msra.mxu0 0.0
        %663 = vmatprep.subr.mxu0 0.0
        %664 = vmatpush1.msra.mxu0 0.0
        %665 = vmatprep.subr.mxu0 0.0
        %666 = vmatpush1.msra.mxu0 0.0
        %667 = vmatprep.subr.mxu0 0.0
        %668 = vmatpush1.msra.mxu0 0.0
        %669 = vmatprep.subr.mxu0 0.0
        %670 = vmatpush1.msra.mxu0 0.0
        %671 = vmatprep.subr.mxu0 0.0
        %672 = vmatpush1.msra.mxu0 0.0
        %673 = vmatprep.subr.mxu0 0.0
        %674 = vmatpush1.msra.mxu0 0.0
        %675 = vmatprep.subr.mxu0 0.0
        %676 = vmatpush1.msra.mxu0 0.0
        %677 = vmatprep.subr.mxu0 0.0
        %678 = vmatpush1.msra.mxu0 0.0
        %679 = vmatprep.subr.mxu0 0.0
        %680 = vmatpush1.msra.mxu0 0.0
        %681 = vmatprep.subr.mxu0 0.0
        %682 = vmatpush1.msra.mxu0 0.0
        %683 = vmatprep.subr.mxu0 0.0
        %684 = vmatpush1.msra.mxu0 0.0
        %685 = vmatprep.subr.mxu0 0.0
        %686 = vmatpush1.msra.mxu0 0.0
        %687 = vmatprep.mubr.f32.mxu0 0.0
        %v688 = vand.u32 %v286, 4294901760
        %689 = vmatmul.mubr.f32.gmra.mrb[0].mxu0 %v688
        %v690 = vpop.f32.mrb[0].mxu0
        %v691 = vadd.f32 %v426, %v690
        %v692 = vpop.f32.mrb[0].mxu0
        %v693 = vadd.f32 %v428, %v692
        %694 = vmatprep.mubr.f32.mxu0 0.0
        %v695 = vand.u32 %v287, 4294901760
        %696 = vmatmul.mubr.f32.gmra.mrb[0].mxu0 %v695
        %v697 = vpop.f32.mrb[0].mxu0
        %v698 = vadd.f32 %v437, %v697
        %v699 = vpop.f32.mrb[0].mxu0
        %v700 = vadd.f32 %v439, %v699
        %701 = vmatprep.mubr.f32.mxu0 0.0
        %v702 = vand.u32 %v288, 4294901760
        %703 = vmatmul.mubr.f32.gmra.mrb[0].mxu0 %v702
        %v704 = vpop.f32.mrb[0].mxu0
        %v705 = vadd.f32 %v448, %v704
        %v706 = vpop.f32.mrb[0].mxu0
        %v707 = vadd.f32 %v450, %v706
        %708 = vmatprep.mubr.f32.mxu0 0.0
        %v709 = vand.u32 %v289, 4294901760
        %710 = vmatmul.mubr.f32.gmra.mrb[0].mxu0 %v709
        %v711 = vpop.f32.mrb[0].mxu0
        %v712 = vadd.f32 %v459, %v711
        %v713 = vpop.f32.mrb[0].mxu0
        %v714 = vadd.f32 %v461, %v713
        %715 = vdwg.mxu0
        %v716 = vand.u32 %v291, 4294901760
        %v717 = vsub.f32 %v291, %v716
        %718 = vmatprep.subr.mxu0 %v717
        %v719 = vand.u32 %v290, 4294901760
        %v720 = vsub.f32 %v290, %v719
        %721 = vmatpush1.msra.mxu0 %v720
        %v722 = vand.u32 %v293, 4294901760
        %v723 = vsub.f32 %v293, %v722
        %724 = vmatprep.subr.mxu0 %v723
        %v725 = vand.u32 %v292, 4294901760
        %v726 = vsub.f32 %v292, %v725
        %727 = vmatpush1.msra.mxu0 %v726
        %v728 = vand.u32 %v295, 4294901760
        %v729 = vsub.f32 %v295, %v728
        %730 = vmatprep.subr.mxu0 %v729
        %v731 = vand.u32 %v294, 4294901760
        %v732 = vsub.f32 %v294, %v731
        %733 = vmatpush1.msra.mxu0 %v732
        %v734 = vand.u32 %v297, 4294901760
        %v735 = vsub.f32 %v297, %v734
        %736 = vmatprep.subr.mxu0 %v735
        %v737 = vand.u32 %v296, 4294901760
        %v738 = vsub.f32 %v296, %v737
        %739 = vmatpush1.msra.mxu0 %v738
        %v740 = vand.u32 %v299, 4294901760
        %v741 = vsub.f32 %v299, %v740
        %742 = vmatprep.subr.mxu0 %v741
        %v743 = vand.u32 %v298, 4294901760
        %v744 = vsub.f32 %v298, %v743
        %745 = vmatpush1.msra.mxu0 %v744
        %v746 = vand.u32 %v301, 4294901760
        %v747 = vsub.f32 %v301, %v746
        %748 = vmatprep.subr.mxu0 %v747
        %v749 = vand.u32 %v300, 4294901760
        %v750 = vsub.f32 %v300, %v749
        %751 = vmatpush1.msra.mxu0 %v750
        %v752 = vand.u32 %v303, 4294901760
        %v753 = vsub.f32 %v303, %v752
        %754 = vmatprep.subr.mxu0 %v753
        %v755 = vand.u32 %v302, 4294901760
        %v756 = vsub.f32 %v302, %v755
        %757 = vmatpush1.msra.mxu0 %v756
        %v758 = vand.u32 %v305, 4294901760
        %v759 = vsub.f32 %v305, %v758
        %760 = vmatprep.subr.mxu0 %v759
        %v761 = vand.u32 %v304, 4294901760
        %v762 = vsub.f32 %v304, %v761
        %763 = vmatpush1.msra.mxu0 %v762
        %v764 = vand.u32 %v307, 4294901760
        %v765 = vsub.f32 %v307, %v764
        %766 = vmatprep.subr.mxu0 %v765
        %v767 = vand.u32 %v306, 4294901760
        %v768 = vsub.f32 %v306, %v767
        %769 = vmatpush1.msra.mxu0 %v768
        %v770 = vand.u32 %v309, 4294901760
        %v771 = vsub.f32 %v309, %v770
        %772 = vmatprep.subr.mxu0 %v771
        %v773 = vand.u32 %v308, 4294901760
        %v774 = vsub.f32 %v308, %v773
        %775 = vmatpush1.msra.mxu0 %v774
        %v776 = vand.u32 %v311, 4294901760
        %v777 = vsub.f32 %v311, %v776
        %778 = vmatprep.subr.mxu0 %v777
        %v779 = vand.u32 %v310, 4294901760
        %v780 = vsub.f32 %v310, %v779
        %781 = vmatpush1.msra.mxu0 %v780
        %v782 = vand.u32 %v313, 4294901760
        %v783 = vsub.f32 %v313, %v782
        %784 = vmatprep.subr.mxu0 %v783
        %v785 = vand.u32 %v312, 4294901760
        %v786 = vsub.f32 %v312, %v785
        %787 = vmatpush1.msra.mxu0 %v786
        %v788 = vand.u32 %v315, 4294901760
        %v789 = vsub.f32 %v315, %v788
        %790 = vmatprep.subr.mxu0 %v789
        %v791 = vand.u32 %v314, 4294901760
        %v792 = vsub.f32 %v314, %v791
        %793 = vmatpush1.msra.mxu0 %v792
        %v794 = vand.u32 %v317, 4294901760
        %v795 = vsub.f32 %v317, %v794
        %796 = vmatprep.subr.mxu0 %v795
        %v797 = vand.u32 %v316, 4294901760
        %v798 = vsub.f32 %v316, %v797
        %799 = vmatpush1.msra.mxu0 %v798
        %v800 = vand.u32 %v319, 4294901760
        %v801 = vsub.f32 %v319, %v800
        %802 = vmatprep.subr.mxu0 %v801
        %v803 = vand.u32 %v318, 4294901760
        %v804 = vsub.f32 %v318, %v803
        %805 = vmatpush1.msra.mxu0 %v804
        %v806 = vand.u32 %v321, 4294901760
        %v807 = vsub.f32 %v321, %v806
        %808 = vmatprep.subr.mxu0 %v807
        %v809 = vand.u32 %v320, 4294901760
        %v810 = vsub.f32 %v320, %v809
        %811 = vmatpush1.msra.mxu0 %v810
        %812 = vmatprep.subr.mxu0 0.0
        %813 = vmatpush1.msra.mxu0 0.0
        %814 = vmatprep.subr.mxu0 0.0
        %815 = vmatpush1.msra.mxu0 0.0
        %816 = vmatprep.subr.mxu0 0.0
        %817 = vmatpush1.msra.mxu0 0.0
        %818 = vmatprep.subr.mxu0 0.0
        %819 = vmatpush1.msra.mxu0 0.0
        %820 = vmatprep.subr.mxu0 0.0
        %821 = vmatpush1.msra.mxu0 0.0
        %822 = vmatprep.subr.mxu0 0.0
        %823 = vmatpush1.msra.mxu0 0.0
        %824 = vmatprep.subr.mxu0 0.0
        %825 = vmatpush1.msra.mxu0 0.0
        %826 = vmatprep.subr.mxu0 0.0
        %827 = vmatpush1.msra.mxu0 0.0
        %828 = vmatprep.subr.mxu0 0.0
        %829 = vmatpush1.msra.mxu0 0.0
        %830 = vmatprep.subr.mxu0 0.0
        %831 = vmatpush1.msra.mxu0 0.0
        %832 = vmatprep.subr.mxu0 0.0
        %833 = vmatpush1.msra.mxu0 0.0
        %834 = vmatprep.subr.mxu0 0.0
        %835 = vmatpush1.msra.mxu0 0.0
        %836 = vmatprep.subr.mxu0 0.0
        %837 = vmatpush1.msra.mxu0 0.0
        %838 = vmatprep.subr.mxu0 0.0
        %839 = vmatpush1.msra.mxu0 0.0
        %840 = vmatprep.subr.mxu0 0.0
        %841 = vmatpush1.msra.mxu0 0.0
        %842 = vmatprep.subr.mxu0 0.0
        %843 = vmatpush1.msra.mxu0 0.0
        %844 = vmatprep.mubr.f32.mxu0 0.0
        %v845 = vand.u32 %v286, 4294901760
        %v846 = vsub.f32 %v286, %v845
        %847 = vmatmul.mubr.f32.gmra.mrb[0].mxu0 %v846
        %v848 = vpop.f32.mrb[0].mxu0
        %v849 = vadd.f32 %v691, %v848
        %v850 = vpop.f32.mrb[0].mxu0
        %v851 = vadd.f32 %v693, %v850
        %852 = vmatprep.mubr.f32.mxu0 0.0
        %v853 = vand.u32 %v287, 4294901760
        %v854 = vsub.f32 %v287, %v853
        %855 = vmatmul.mubr.f32.gmra.mrb[0].mxu0 %v854
        %v856 = vpop.f32.mrb[0].mxu0
        %v857 = vadd.f32 %v698, %v856
        %v858 = vpop.f32.mrb[0].mxu0
        %v859 = vadd.f32 %v700, %v858
        %860 = vmatprep.mubr.f32.mxu0 0.0
        %v861 = vand.u32 %v288, 4294901760
        %v862 = vsub.f32 %v288, %v861
        %863 = vmatmul.mubr.f32.gmra.mrb[0].mxu0 %v862
        %v864 = vpop.f32.mrb[0].mxu0
        %v865 = vadd.f32 %v705, %v864
        %v866 = vpop.f32.mrb[0].mxu0
        %v867 = vadd.f32 %v707, %v866
        %868 = vmatprep.mubr.f32.mxu0 0.0
        %v869 = vand.u32 %v289, 4294901760
        %v870 = vsub.f32 %v289, %v869
        %871 = vmatmul.mubr.f32.gmra.mrb[0].mxu0 %v870
        %v872 = vpop.f32.mrb[0].mxu0
        %v873 = vadd.f32 %v712, %v872
        %v874 = vpop.f32.mrb[0].mxu0
        %v875 = vadd.f32 %v714, %v874
        %876 = vdwg.mxu0
        %v877 = vand.u32 %v291, 4294901760
        %878 = vmatprep.subr.mxu0 %v877
        %v879 = vand.u32 %v290, 4294901760
        %880 = vmatpush1.msra.mxu0 %v879
        %v881 = vand.u32 %v293, 4294901760
        %882 = vmatprep.subr.mxu0 %v881
        %v883 = vand.u32 %v292, 4294901760
        %884 = vmatpush1.msra.mxu0 %v883
        %v885 = vand.u32 %v295, 4294901760
        %886 = vmatprep.subr.mxu0 %v885
        %v887 = vand.u32 %v294, 4294901760
        %888 = vmatpush1.msra.mxu0 %v887
        %v889 = vand.u32 %v297, 4294901760
        %890 = vmatprep.subr.mxu0 %v889
        %v891 = vand.u32 %v296, 4294901760
        %892 = vmatpush1.msra.mxu0 %v891
        %v893 = vand.u32 %v299, 4294901760
        %894 = vmatprep.subr.mxu0 %v893
        %v895 = vand.u32 %v298, 4294901760
        %896 = vmatpush1.msra.mxu0 %v895
        %v897 = vand.u32 %v301, 4294901760
        %898 = vmatprep.subr.mxu0 %v897
        %v899 = vand.u32 %v300, 4294901760
        %900 = vmatpush1.msra.mxu0 %v899
        %v901 = vand.u32 %v303, 4294901760
        %902 = vmatprep.subr.mxu0 %v901
        %v903 = vand.u32 %v302, 4294901760
        %904 = vmatpush1.msra.mxu0 %v903
        %v905 = vand.u32 %v305, 4294901760
        %906 = vmatprep.subr.mxu0 %v905
        %v907 = vand.u32 %v304, 4294901760
        %908 = vmatpush1.msra.mxu0 %v907
        %v909 = vand.u32 %v307, 4294901760
        %910 = vmatprep.subr.mxu0 %v909
        %v911 = vand.u32 %v306, 4294901760
        %912 = vmatpush1.msra.mxu0 %v911
        %v913 = vand.u32 %v309, 4294901760
        %914 = vmatprep.subr.mxu0 %v913
        %v915 = vand.u32 %v308, 4294901760
        %916 = vmatpush1.msra.mxu0 %v915
        %v917 = vand.u32 %v311, 4294901760
        %918 = vmatprep.subr.mxu0 %v917
        %v919 = vand.u32 %v310, 4294901760
        %920 = vmatpush1.msra.mxu0 %v919
        %v921 = vand.u32 %v313, 4294901760
        %922 = vmatprep.subr.mxu0 %v921
        %v923 = vand.u32 %v312, 4294901760
        %924 = vmatpush1.msra.mxu0 %v923
        %v925 = vand.u32 %v315, 4294901760
        %926 = vmatprep.subr.mxu0 %v925
        %v927 = vand.u32 %v314, 4294901760
        %928 = vmatpush1.msra.mxu0 %v927
        %v929 = vand.u32 %v317, 4294901760
        %930 = vmatprep.subr.mxu0 %v929
        %v931 = vand.u32 %v316, 4294901760
        %932 = vmatpush1.msra.mxu0 %v931
        %v933 = vand.u32 %v319, 4294901760
        %934 = vmatprep.subr.mxu0 %v933
        %v935 = vand.u32 %v318, 4294901760
        %936 = vmatpush1.msra.mxu0 %v935
        %v937 = vand.u32 %v321, 4294901760
        %938 = vmatprep.subr.mxu0 %v937
        %v939 = vand.u32 %v320, 4294901760
        %940 = vmatpush1.msra.mxu0 %v939
        %941 = vmatprep.subr.mxu0 0.0
        %942 = vmatpush1.msra.mxu0 0.0
        %943 = vmatprep.subr.mxu0 0.0
        %944 = vmatpush1.msra.mxu0 0.0
        %945 = vmatprep.subr.mxu0 0.0
        %946 = vmatpush1.msra.mxu0 0.0
        %947 = vmatprep.subr.mxu0 0.0
        %948 = vmatpush1.msra.mxu0 0.0
        %949 = vmatprep.subr.mxu0 0.0
        %950 = vmatpush1.msra.mxu0 0.0
        %951 = vmatprep.subr.mxu0 0.0
        %952 = vmatpush1.msra.mxu0 0.0
        %953 = vmatprep.subr.mxu0 0.0
        %954 = vmatpush1.msra.mxu0 0.0
        %955 = vmatprep.subr.mxu0 0.0
        %956 = vmatpush1.msra.mxu0 0.0
        %957 = vmatprep.subr.mxu0 0.0
        %958 = vmatpush1.msra.mxu0 0.0
        %959 = vmatprep.subr.mxu0 0.0
        %960 = vmatpush1.msra.mxu0 0.0
        %961 = vmatprep.subr.mxu0 0.0
        %962 = vmatpush1.msra.mxu0 0.0
        %963 = vmatprep.subr.mxu0 0.0
        %964 = vmatpush1.msra.mxu0 0.0
        %965 = vmatprep.subr.mxu0 0.0
        %966 = vmatpush1.msra.mxu0 0.0
        %967 = vmatprep.subr.mxu0 0.0
        %968 = vmatpush1.msra.mxu0 0.0
        %969 = vmatprep.subr.mxu0 0.0
        %970 = vmatpush1.msra.mxu0 0.0
        %971 = vmatprep.subr.mxu0 0.0
        %972 = vmatpush1.msra.mxu0 0.0
        %973 = vmatprep.mubr.f32.mxu0 0.0
        %v974 = vand.u32 %v286, 4294901760
        %v975 = vsub.f32 %v286, %v974
        %v976 = vand.u32 %v975, 4294901760
        %977 = vmatmul.mubr.f32.gmra.mrb[0].mxu0 %v976
        %v978 = vpop.f32.mrb[0].mxu0
        %v979 = vadd.f32 %v849, %v978
        %v980 = vpop.f32.mrb[0].mxu0
        %v981 = vadd.f32 %v851, %v980
        %982 = vmatprep.mubr.f32.mxu0 0.0
        %v983 = vand.u32 %v287, 4294901760
        %v984 = vsub.f32 %v287, %v983
        %v985 = vand.u32 %v984, 4294901760
        %986 = vmatmul.mubr.f32.gmra.mrb[0].mxu0 %v985
        %v987 = vpop.f32.mrb[0].mxu0
        %v988 = vadd.f32 %v857, %v987
        %v989 = vpop.f32.mrb[0].mxu0
        %v990 = vadd.f32 %v859, %v989
        %991 = vmatprep.mubr.f32.mxu0 0.0
        %v992 = vand.u32 %v288, 4294901760
        %v993 = vsub.f32 %v288, %v992
        %v994 = vand.u32 %v993, 4294901760
        %995 = vmatmul.mubr.f32.gmra.mrb[0].mxu0 %v994
        %v996 = vpop.f32.mrb[0].mxu0
        %v997 = vadd.f32 %v865, %v996
        %v998 = vpop.f32.mrb[0].mxu0
        %v999 = vadd.f32 %v867, %v998
        %1000 = vmatprep.mubr.f32.mxu0 0.0
        %v1001 = vand.u32 %v289, 4294901760
        %v1002 = vsub.f32 %v289, %v1001
        %v1003 = vand.u32 %v1002, 4294901760
        %1004 = vmatmul.mubr.f32.gmra.mrb[0].mxu0 %v1003
        %v1005 = vpop.f32.mrb[0].mxu0
        %v1006 = vadd.f32 %v873, %v1005
        %v1007 = vpop.f32.mrb[0].mxu0
        %v1008 = vadd.f32 %v875, %v1007
        %1009 = vdwg.mxu0
        %v1010 = vand.u32 %v291, 4294901760
        %v1011 = vsub.f32 %v291, %v1010
        %v1012 = vand.u32 %v1011, 4294901760
        %1013 = vmatprep.subr.mxu0 %v1012
        %v1014 = vand.u32 %v290, 4294901760
        %v1015 = vsub.f32 %v290, %v1014
        %v1016 = vand.u32 %v1015, 4294901760
        %1017 = vmatpush1.msra.mxu0 %v1016
        %v1018 = vand.u32 %v293, 4294901760
        %v1019 = vsub.f32 %v293, %v1018
        %v1020 = vand.u32 %v1019, 4294901760
        %1021 = vmatprep.subr.mxu0 %v1020
        %v1022 = vand.u32 %v292, 4294901760
        %v1023 = vsub.f32 %v292, %v1022
        %v1024 = vand.u32 %v1023, 4294901760
        %1025 = vmatpush1.msra.mxu0 %v1024
        %v1026 = vand.u32 %v295, 4294901760
        %v1027 = vsub.f32 %v295, %v1026
        %v1028 = vand.u32 %v1027, 4294901760
        %1029 = vmatprep.subr.mxu0 %v1028
        %v1030 = vand.u32 %v294, 4294901760
        %v1031 = vsub.f32 %v294, %v1030
        %v1032 = vand.u32 %v1031, 4294901760
        %1033 = vmatpush1.msra.mxu0 %v1032
        %v1034 = vand.u32 %v297, 4294901760
        %v1035 = vsub.f32 %v297, %v1034
        %v1036 = vand.u32 %v1035, 4294901760
        %1037 = vmatprep.subr.mxu0 %v1036
        %v1038 = vand.u32 %v296, 4294901760
        %v1039 = vsub.f32 %v296, %v1038
        %v1040 = vand.u32 %v1039, 4294901760
        %1041 = vmatpush1.msra.mxu0 %v1040
        %v1042 = vand.u32 %v299, 4294901760
        %v1043 = vsub.f32 %v299, %v1042
        %v1044 = vand.u32 %v1043, 4294901760
        %1045 = vmatprep.subr.mxu0 %v1044
        %v1046 = vand.u32 %v298, 4294901760
        %v1047 = vsub.f32 %v298, %v1046
        %v1048 = vand.u32 %v1047, 4294901760
        %1049 = vmatpush1.msra.mxu0 %v1048
        %v1050 = vand.u32 %v301, 4294901760
        %v1051 = vsub.f32 %v301, %v1050
        %v1052 = vand.u32 %v1051, 4294901760
        %1053 = vmatprep.subr.mxu0 %v1052
        %v1054 = vand.u32 %v300, 4294901760
        %v1055 = vsub.f32 %v300, %v1054
        %v1056 = vand.u32 %v1055, 4294901760
        %1057 = vmatpush1.msra.mxu0 %v1056
        %v1058 = vand.u32 %v303, 4294901760
        %v1059 = vsub.f32 %v303, %v1058
        %v1060 = vand.u32 %v1059, 4294901760
        %1061 = vmatprep.subr.mxu0 %v1060
        %v1062 = vand.u32 %v302, 4294901760
        %v1063 = vsub.f32 %v302, %v1062
        %v1064 = vand.u32 %v1063, 4294901760
        %1065 = vmatpush1.msra.mxu0 %v1064
        %v1066 = vand.u32 %v305, 4294901760
        %v1067 = vsub.f32 %v305, %v1066
        %v1068 = vand.u32 %v1067, 4294901760
        %1069 = vmatprep.subr.mxu0 %v1068
        %v1070 = vand.u32 %v304, 4294901760
        %v1071 = vsub.f32 %v304, %v1070
        %v1072 = vand.u32 %v1071, 4294901760
        %1073 = vmatpush1.msra.mxu0 %v1072
        %v1074 = vand.u32 %v307, 4294901760
        %v1075 = vsub.f32 %v307, %v1074
        %v1076 = vand.u32 %v1075, 4294901760
        %1077 = vmatprep.subr.mxu0 %v1076
        %v1078 = vand.u32 %v306, 4294901760
        %v1079 = vsub.f32 %v306, %v1078
        %v1080 = vand.u32 %v1079, 4294901760
        %1081 = vmatpush1.msra.mxu0 %v1080
        %v1082 = vand.u32 %v309, 4294901760
        %v1083 = vsub.f32 %v309, %v1082
        %v1084 = vand.u32 %v1083, 4294901760
        %1085 = vmatprep.subr.mxu0 %v1084
        %v1086 = vand.u32 %v308, 4294901760
        %v1087 = vsub.f32 %v308, %v1086
        %v1088 = vand.u32 %v1087, 4294901760
        %1089 = vmatpush1.msra.mxu0 %v1088
        %v1090 = vand.u32 %v311, 4294901760
        %v1091 = vsub.f32 %v311, %v1090
        %v1092 = vand.u32 %v1091, 4294901760
        %1093 = vmatprep.subr.mxu0 %v1092
        %v1094 = vand.u32 %v310, 4294901760
        %v1095 = vsub.f32 %v310, %v1094
        %v1096 = vand.u32 %v1095, 4294901760
        %1097 = vmatpush1.msra.mxu0 %v1096
        %v1098 = vand.u32 %v313, 4294901760
        %v1099 = vsub.f32 %v313, %v1098
        %v1100 = vand.u32 %v1099, 4294901760
        %1101 = vmatprep.subr.mxu0 %v1100
        %v1102 = vand.u32 %v312, 4294901760
        %v1103 = vsub.f32 %v312, %v1102
        %v1104 = vand.u32 %v1103, 4294901760
        %1105 = vmatpush1.msra.mxu0 %v1104
        %v1106 = vand.u32 %v315, 4294901760
        %v1107 = vsub.f32 %v315, %v1106
        %v1108 = vand.u32 %v1107, 4294901760
        %1109 = vmatprep.subr.mxu0 %v1108
        %v1110 = vand.u32 %v314, 4294901760
        %v1111 = vsub.f32 %v314, %v1110
        %v1112 = vand.u32 %v1111, 4294901760
        %1113 = vmatpush1.msra.mxu0 %v1112
        %v1114 = vand.u32 %v317, 4294901760
        %v1115 = vsub.f32 %v317, %v1114
        %v1116 = vand.u32 %v1115, 4294901760
        %1117 = vmatprep.subr.mxu0 %v1116
        %v1118 = vand.u32 %v316, 4294901760
        %v1119 = vsub.f32 %v316, %v1118
        %v1120 = vand.u32 %v1119, 4294901760
        %1121 = vmatpush1.msra.mxu0 %v1120
        %v1122 = vand.u32 %v319, 4294901760
        %v1123 = vsub.f32 %v319, %v1122
        %v1124 = vand.u32 %v1123, 4294901760
        %1125 = vmatprep.subr.mxu0 %v1124
        %v1126 = vand.u32 %v318, 4294901760
        %v1127 = vsub.f32 %v318, %v1126
        %v1128 = vand.u32 %v1127, 4294901760
        %1129 = vmatpush1.msra.mxu0 %v1128
        %v1130 = vand.u32 %v321, 4294901760
        %v1131 = vsub.f32 %v321, %v1130
        %v1132 = vand.u32 %v1131, 4294901760
        %1133 = vmatprep.subr.mxu0 %v1132
        %v1134 = vand.u32 %v320, 4294901760
        %v1135 = vsub.f32 %v320, %v1134
        %v1136 = vand.u32 %v1135, 4294901760
        %1137 = vmatpush1.msra.mxu0 %v1136
        %1138 = vmatprep.subr.mxu0 0.0
        %1139 = vmatpush1.msra.mxu0 0.0
        %1140 = vmatprep.subr.mxu0 0.0
        %1141 = vmatpush1.msra.mxu0 0.0
        %1142 = vmatprep.subr.mxu0 0.0
        %1143 = vmatpush1.msra.mxu0 0.0
        %1144 = vmatprep.subr.mxu0 0.0
        %1145 = vmatpush1.msra.mxu0 0.0
        %1146 = vmatprep.subr.mxu0 0.0
        %1147 = vmatpush1.msra.mxu0 0.0
        %1148 = vmatprep.subr.mxu0 0.0
        %1149 = vmatpush1.msra.mxu0 0.0
        %1150 = vmatprep.subr.mxu0 0.0
        %1151 = vmatpush1.msra.mxu0 0.0
        %1152 = vmatprep.subr.mxu0 0.0
        %1153 = vmatpush1.msra.mxu0 0.0
        %1154 = vmatprep.subr.mxu0 0.0
        %1155 = vmatpush1.msra.mxu0 0.0
        %1156 = vmatprep.subr.mxu0 0.0
        %1157 = vmatpush1.msra.mxu0 0.0
        %1158 = vmatprep.subr.mxu0 0.0
        %1159 = vmatpush1.msra.mxu0 0.0
        %1160 = vmatprep.subr.mxu0 0.0
        %1161 = vmatpush1.msra.mxu0 0.0
        %1162 = vmatprep.subr.mxu0 0.0
        %1163 = vmatpush1.msra.mxu0 0.0
        %1164 = vmatprep.subr.mxu0 0.0
        %1165 = vmatpush1.msra.mxu0 0.0
        %1166 = vmatprep.subr.mxu0 0.0
        %1167 = vmatpush1.msra.mxu0 0.0
        %1168 = vmatprep.subr.mxu0 0.0
        %1169 = vmatpush1.msra.mxu0 0.0
        %1170 = vmatprep.mubr.f32.mxu0 0.0
        %v1171 = vand.u32 %v286, 4294901760
        %1172 = vmatmul.mubr.f32.gmra.mrb[0].mxu0 %v1171
        %v1173 = vpop.f32.mrb[0].mxu0
        %v1174 = vadd.f32 %v979, %v1173
        %v1175 = vpop.f32.mrb[0].mxu0
        %v1176 = vadd.f32 %v981, %v1175
        %1177 = vmatprep.mubr.f32.mxu0 0.0
        %v1178 = vand.u32 %v287, 4294901760
        %1179 = vmatmul.mubr.f32.gmra.mrb[0].mxu0 %v1178
        %v1180 = vpop.f32.mrb[0].mxu0
        %v1181 = vadd.f32 %v988, %v1180
        %v1182 = vpop.f32.mrb[0].mxu0
        %v1183 = vadd.f32 %v990, %v1182
        %1184 = vmatprep.mubr.f32.mxu0 0.0
        %v1185 = vand.u32 %v288, 4294901760
        %1186 = vmatmul.mubr.f32.gmra.mrb[0].mxu0 %v1185
        %v1187 = vpop.f32.mrb[0].mxu0
        %v1188 = vadd.f32 %v997, %v1187
        %v1189 = vpop.f32.mrb[0].mxu0
        %v1190 = vadd.f32 %v999, %v1189
        %1191 = vmatprep.mubr.f32.mxu0 0.0
        %v1192 = vand.u32 %v289, 4294901760
        %1193 = vmatmul.mubr.f32.gmra.mrb[0].mxu0 %v1192
        %v1194 = vpop.f32.mrb[0].mxu0
        %v1195 = vadd.f32 %v1006, %v1194
        %v1196 = vpop.f32.mrb[0].mxu0
        %v1197 = vadd.f32 %v1008, %v1196
        %1198 = vdwg.mxu0
        %v1199 = vand.u32 %v291, 4294901760
        %1200 = vmatprep.subr.mxu0 %v1199
        %v1201 = vand.u32 %v290, 4294901760
        %1202 = vmatpush1.msra.mxu0 %v1201
        %v1203 = vand.u32 %v293, 4294901760
        %1204 = vmatprep.subr.mxu0 %v1203
        %v1205 = vand.u32 %v292, 4294901760
        %1206 = vmatpush1.msra.mxu0 %v1205
        %v1207 = vand.u32 %v295, 4294901760
        %1208 = vmatprep.subr.mxu0 %v1207
        %v1209 = vand.u32 %v294, 4294901760
        %1210 = vmatpush1.msra.mxu0 %v1209
        %v1211 = vand.u32 %v297, 4294901760
        %1212 = vmatprep.subr.mxu0 %v1211
        %v1213 = vand.u32 %v296, 4294901760
        %1214 = vmatpush1.msra.mxu0 %v1213
        %v1215 = vand.u32 %v299, 4294901760
        %1216 = vmatprep.subr.mxu0 %v1215
        %v1217 = vand.u32 %v298, 4294901760
        %1218 = vmatpush1.msra.mxu0 %v1217
        %v1219 = vand.u32 %v301, 4294901760
        %1220 = vmatprep.subr.mxu0 %v1219
        %v1221 = vand.u32 %v300, 4294901760
        %1222 = vmatpush1.msra.mxu0 %v1221
        %v1223 = vand.u32 %v303, 4294901760
        %1224 = vmatprep.subr.mxu0 %v1223
        %v1225 = vand.u32 %v302, 4294901760
        %1226 = vmatpush1.msra.mxu0 %v1225
        %v1227 = vand.u32 %v305, 4294901760
        %1228 = vmatprep.subr.mxu0 %v1227
        %v1229 = vand.u32 %v304, 4294901760
        %1230 = vmatpush1.msra.mxu0 %v1229
        %v1231 = vand.u32 %v307, 4294901760
        %1232 = vmatprep.subr.mxu0 %v1231
        %v1233 = vand.u32 %v306, 4294901760
        %1234 = vmatpush1.msra.mxu0 %v1233
        %v1235 = vand.u32 %v309, 4294901760
        %1236 = vmatprep.subr.mxu0 %v1235
        %v1237 = vand.u32 %v308, 4294901760
        %1238 = vmatpush1.msra.mxu0 %v1237
        %v1239 = vand.u32 %v311, 4294901760
        %1240 = vmatprep.subr.mxu0 %v1239
        %v1241 = vand.u32 %v310, 4294901760
        %1242 = vmatpush1.msra.mxu0 %v1241
        %v1243 = vand.u32 %v313, 4294901760
        %1244 = vmatprep.subr.mxu0 %v1243
        %v1245 = vand.u32 %v312, 4294901760
        %1246 = vmatpush1.msra.mxu0 %v1245
        %v1247 = vand.u32 %v315, 4294901760
        %1248 = vmatprep.subr.mxu0 %v1247
        %v1249 = vand.u32 %v314, 4294901760
        %1250 = vmatpush1.msra.mxu0 %v1249
        %v1251 = vand.u32 %v317, 4294901760
        %1252 = vmatprep.subr.mxu0 %v1251
        %v1253 = vand.u32 %v316, 4294901760
        %1254 = vmatpush1.msra.mxu0 %v1253
        %v1255 = vand.u32 %v319, 4294901760
        %1256 = vmatprep.subr.mxu0 %v1255
        %v1257 = vand.u32 %v318, 4294901760
        %1258 = vmatpush1.msra.mxu0 %v1257
        %v1259 = vand.u32 %v321, 4294901760
        %1260 = vmatprep.subr.mxu0 %v1259
        %v1261 = vand.u32 %v320, 4294901760
        %1262 = vmatpush1.msra.mxu0 %v1261
        %1263 = vmatprep.subr.mxu0 0.0
        %1264 = vmatpush1.msra.mxu0 0.0
        %1265 = vmatprep.subr.mxu0 0.0
        %1266 = vmatpush1.msra.mxu0 0.0
        %1267 = vmatprep.subr.mxu0 0.0
        %1268 = vmatpush1.msra.mxu0 0.0
        %1269 = vmatprep.subr.mxu0 0.0
        %1270 = vmatpush1.msra.mxu0 0.0
        %1271 = vmatprep.subr.mxu0 0.0
        %1272 = vmatpush1.msra.mxu0 0.0
        %1273 = vmatprep.subr.mxu0 0.0
        %1274 = vmatpush1.msra.mxu0 0.0
        %1275 = vmatprep.subr.mxu0 0.0
        %1276 = vmatpush1.msra.mxu0 0.0
        %1277 = vmatprep.subr.mxu0 0.0
        %1278 = vmatpush1.msra.mxu0 0.0
        %1279 = vmatprep.subr.mxu0 0.0
        %1280 = vmatpush1.msra.mxu0 0.0
        %1281 = vmatprep.subr.mxu0 0.0
        %1282 = vmatpush1.msra.mxu0 0.0
        %1283 = vmatprep.subr.mxu0 0.0
        %1284 = vmatpush1.msra.mxu0 0.0
        %1285 = vmatprep.subr.mxu0 0.0
        %1286 = vmatpush1.msra.mxu0 0.0
        %1287 = vmatprep.subr.mxu0 0.0
        %1288 = vmatpush1.msra.mxu0 0.0
        %1289 = vmatprep.subr.mxu0 0.0
        %1290 = vmatpush1.msra.mxu0 0.0
        %1291 = vmatprep.subr.mxu0 0.0
        %1292 = vmatpush1.msra.mxu0 0.0
        %1293 = vmatprep.subr.mxu0 0.0
        %1294 = vmatpush1.msra.mxu0 0.0
        %1295 = vmatprep.mubr.f32.mxu0 0.0
        %v1296 = vand.u32 %v286, 4294901760
        %1297 = vmatmul.mubr.f32.gmra.mrb[0].mxu0 %v1296
        %v1298 = vpop.f32.mrb[0].mxu0
        %v1299 = vadd.f32 %v1174, %v1298
        %v1300 = vpop.f32.mrb[0].mxu0
        %v1301 = vadd.f32 %v1176, %v1300
        %1302 = vmatprep.mubr.f32.mxu0 0.0
        %v1303 = vand.u32 %v287, 4294901760
        %1304 = vmatmul.mubr.f32.gmra.mrb[0].mxu0 %v1303
        %v1305 = vpop.f32.mrb[0].mxu0
        %v1306 = vadd.f32 %v1181, %v1305
        %v1307 = vpop.f32.mrb[0].mxu0
        %v1308 = vadd.f32 %v1183, %v1307
        %1309 = vmatprep.mubr.f32.mxu0 0.0
        %v1310 = vand.u32 %v288, 4294901760
        %1311 = vmatmul.mubr.f32.gmra.mrb[0].mxu0 %v1310
        %v1312 = vpop.f32.mrb[0].mxu0
        %v1313 = vadd.f32 %v1188, %v1312
        %v1314 = vpop.f32.mrb[0].mxu0
        %v1315 = vadd.f32 %v1190, %v1314
        %1316 = vmatprep.mubr.f32.mxu0 0.0
        %v1317 = vand.u32 %v289, 4294901760
        %1318 = vmatmul.mubr.f32.gmra.mrb[0].mxu0 %v1317
        %v1319 = vpop.f32.mrb[0].mxu0
        %v1320 = vadd.f32 %v1195, %v1319
        %v1321 = vpop.f32.mrb[0].mxu0
        %v1322 = vadd.f32 %v1197, %v1321
        %1323 = vdwg.mxu0
        %v1324 = vmax.f32 %v1299, 0.0
        %v1325 = vmax.f32 %v1301, 0.0
        %v1326 = vmax.f32 %v1306, 0.0
        %v1327 = vmax.f32 %v1308, 0.0
        %v1328 = vmax.f32 %v1313, 0.0
        %v1329 = vmax.f32 %v1315, 0.0
        %v1330 = vmax.f32 %v1320, 0.0
        %v1331 = vmax.f32 %v1322, 0.0
        %1332 = vst [vmem:[#allocation2] sm:$0xff] %v1324
        %1333 = vst [vmem:[#allocation2 + $0x8] sm:$0xff] %v1325
        %1334 = vst [vmem:[#allocation2 + $0x10] sm:$0xff] %v1326
        %1335 = vst [vmem:[#allocation2 + $0x18] sm:$0xff] %v1327
        %1336 = vst [vmem:[#allocation2 + $0x20] sm:$0xff] %v1328
        %1337 = vst [vmem:[#allocation2 + $0x28] sm:$0xff] %v1329
        %1338 = vst [vmem:[#allocation2 + $0x30] sm:$0xff] %v1330
        %1339 = vst [vmem:[#allocation2 + $0x38] sm:$0xff] %v1331
        %v1340 = vld [vmem:[#allocation8 + $0x20] sm:$0xff]
        %v1341 = vld [vmem:[#allocation8 + $0x28] sm:$0xff]
        %v1342 = vld [vmem:[#allocation8 + $0x30] sm:$0xff]
        %v1343 = vld [vmem:[#allocation8 + $0x38] sm:$0xff]
        %v1344 = vld [vmem:[#allocation2] sm:$0xff]
        %v1345 = vld [vmem:[#allocation2 + $0x8] sm:$0xff]
        %v1346 = vld [vmem:[#allocation2 + $0x10] sm:$0xff]
        %v1347 = vld [vmem:[#allocation2 + $0x18] sm:$0xff]
        %v1348 = vld [vmem:[#allocation2 + $0x20] sm:$0xff]
        %v1349 = vld [vmem:[#allocation2 + $0x28] sm:$0xff]
        %v1350 = vld [vmem:[#allocation2 + $0x30] sm:$0xff]
        %v1351 = vld [vmem:[#allocation2 + $0x38] sm:$0xff]
        %v1352 = vld [vmem:[#allocation2 + $0x40] sm:$0xff]
        %v1353 = vld [vmem:[#allocation2 + $0x48] sm:$0xff]
        %v1354 = vld [vmem:[#allocation2 + $0x50] sm:$0xff]
        %v1355 = vld [vmem:[#allocation2 + $0x58] sm:$0xff]
        %v1356 = vld [vmem:[#allocation2 + $0x60] sm:$0xff]
        %v1357 = vld [vmem:[#allocation2 + $0x68] sm:$0xff]
        %v1358 = vld [vmem:[#allocation2 + $0x70] sm:$0xff]
        %v1359 = vld [vmem:[#allocation2 + $0x78] sm:$0xff]
        %v1360 = vld [vmem:[#allocation2 + $0x80] sm:$0xff]
        %v1361 = vld [vmem:[#allocation2 + $0x88] sm:$0xff]
        %v1362 = vld [vmem:[#allocation2 + $0x90] sm:$0xff]
        %v1363 = vld [vmem:[#allocation2 + $0x98] sm:$0xff]
        %v1364 = vld [vmem:[#allocation2 + $0xa0] sm:$0xff]
        %v1365 = vld [vmem:[#allocation2 + $0xa8] sm:$0xff]
        %v1366 = vld [vmem:[#allocation2 + $0xb0] sm:$0xff]
        %v1367 = vld [vmem:[#allocation2 + $0xb8] sm:$0xff]
        %v1368 = vld [vmem:[#allocation2 + $0xc0] sm:$0xff]
        %v1369 = vld [vmem:[#allocation2 + $0xc8] sm:$0xff]
        %v1370 = vld [vmem:[#allocation2 + $0xd0] sm:$0xff]
        %v1371 = vld [vmem:[#allocation2 + $0xd8] sm:$0xff]
        %v1372 = vld [vmem:[#allocation2 + $0xe0] sm:$0xff]
        %v1373 = vld [vmem:[#allocation2 + $0xe8] sm:$0xff]
        %v1374 = vld [vmem:[#allocation2 + $0xf0] sm:$0xff]
        %v1375 = vld [vmem:[#allocation2 + $0xf8] sm:$0xff]
        %v1376 = vand.u32 %v1345, 4294901760
        %1377 = vmatprep.subr.mxu0 %v1376
        %v1378 = vand.u32 %v1344, 4294901760
        %1379 = vmatpush1.msra.mxu0 %v1378
        %v1380 = vand.u32 %v1347, 4294901760
        %1381 = vmatprep.subr.mxu0 %v1380
        %v1382 = vand.u32 %v1346, 4294901760
        %1383 = vmatpush1.msra.mxu0 %v1382
        %v1384 = vand.u32 %v1349, 4294901760
        %1385 = vmatprep.subr.mxu0 %v1384
        %v1386 = vand.u32 %v1348, 4294901760
        %1387 = vmatpush1.msra.mxu0 %v1386
        %v1388 = vand.u32 %v1351, 4294901760
        %1389 = vmatprep.subr.mxu0 %v1388
        %v1390 = vand.u32 %v1350, 4294901760
        %1391 = vmatpush1.msra.mxu0 %v1390
        %v1392 = vand.u32 %v1353, 4294901760
        %1393 = vmatprep.subr.mxu0 %v1392
        %v1394 = vand.u32 %v1352, 4294901760
        %1395 = vmatpush1.msra.mxu0 %v1394
        %v1396 = vand.u32 %v1355, 4294901760
        %1397 = vmatprep.subr.mxu0 %v1396
        %v1398 = vand.u32 %v1354, 4294901760
        %1399 = vmatpush1.msra.mxu0 %v1398
        %v1400 = vand.u32 %v1357, 4294901760
        %1401 = vmatprep.subr.mxu0 %v1400
        %v1402 = vand.u32 %v1356, 4294901760
        %1403 = vmatpush1.msra.mxu0 %v1402
        %v1404 = vand.u32 %v1359, 4294901760
        %1405 = vmatprep.subr.mxu0 %v1404
        %v1406 = vand.u32 %v1358, 4294901760
        %1407 = vmatpush1.msra.mxu0 %v1406
        %v1408 = vand.u32 %v1361, 4294901760
        %1409 = vmatprep.subr.mxu0 %v1408
        %v1410 = vand.u32 %v1360, 4294901760
        %1411 = vmatpush1.msra.mxu0 %v1410
        %v1412 = vand.u32 %v1363, 4294901760
        %1413 = vmatprep.subr.mxu0 %v1412
        %v1414 = vand.u32 %v1362, 4294901760
        %1415 = vmatpush1.msra.mxu0 %v1414
        %v1416 = vand.u32 %v1365, 4294901760
        %1417 = vmatprep.subr.mxu0 %v1416
        %v1418 = vand.u32 %v1364, 4294901760
        %1419 = vmatpush1.msra.mxu0 %v1418
        %v1420 = vand.u32 %v1367, 4294901760
        %1421 = vmatprep.subr.mxu0 %v1420
        %v1422 = vand.u32 %v1366, 4294901760
        %1423 = vmatpush1.msra.mxu0 %v1422
        %v1424 = vand.u32 %v1369, 4294901760
        %1425 = vmatprep.subr.mxu0 %v1424
        %v1426 = vand.u32 %v1368, 4294901760
        %1427 = vmatpush1.msra.mxu0 %v1426
        %v1428 = vand.u32 %v1371, 4294901760
        %1429 = vmatprep.subr.mxu0 %v1428
        %v1430 = vand.u32 %v1370, 4294901760
        %1431 = vmatpush1.msra.mxu0 %v1430
        %v1432 = vand.u32 %v1373, 4294901760
        %1433 = vmatprep.subr.mxu0 %v1432
        %v1434 = vand.u32 %v1372, 4294901760
        %1435 = vmatpush1.msra.mxu0 %v1434
        %v1436 = vand.u32 %v1375, 4294901760
        %1437 = vmatprep.subr.mxu0 %v1436
        %v1438 = vand.u32 %v1374, 4294901760
        %1439 = vmatpush1.msra.mxu0 %v1438
        %1440 = vmatprep.subr.mxu0 0.0
        %1441 = vmatpush1.msra.mxu0 0.0
        %1442 = vmatprep.subr.mxu0 0.0
        %1443 = vmatpush1.msra.mxu0 0.0
        %1444 = vmatprep.subr.mxu0 0.0
        %1445 = vmatpush1.msra.mxu0 0.0
        %1446 = vmatprep.subr.mxu0 0.0
        %1447 = vmatpush1.msra.mxu0 0.0
        %1448 = vmatprep.subr.mxu0 0.0
        %1449 = vmatpush1.msra.mxu0 0.0
        %1450 = vmatprep.subr.mxu0 0.0
        %1451 = vmatpush1.msra.mxu0 0.0
        %1452 = vmatprep.subr.mxu0 0.0
        %1453 = vmatpush1.msra.mxu0 0.0
        %1454 = vmatprep.subr.mxu0 0.0
        %1455 = vmatpush1.msra.mxu0 0.0
        %1456 = vmatprep.subr.mxu0 0.0
        %1457 = vmatpush1.msra.mxu0 0.0
        %1458 = vmatprep.subr.mxu0 0.0
        %1459 = vmatpush1.msra.mxu0 0.0
        %1460 = vmatprep.subr.mxu0 0.0
        %1461 = vmatpush1.msra.mxu0 0.0
        %1462 = vmatprep.subr.mxu0 0.0
        %1463 = vmatpush1.msra.mxu0 0.0
        %1464 = vmatprep.subr.mxu0 0.0
        %1465 = vmatpush1.msra.mxu0 0.0
        %1466 = vmatprep.subr.mxu0 0.0
        %1467 = vmatpush1.msra.mxu0 0.0
        %1468 = vmatprep.subr.mxu0 0.0
        %1469 = vmatpush1.msra.mxu0 0.0
        %1470 = vmatprep.subr.mxu0 0.0
        %1471 = vmatpush1.msra.mxu0 0.0
        %1472 = vmatprep.mubr.f32.mxu0 0.0
        %v1473 = vand.u32 %v1340, 4294901760
        %v1474 = vsub.f32 %v1340, %v1473
        %v1475 = vand.u32 %v1474, 4294901760
        %v1476 = vsub.f32 %v1474, %v1475
        %v1477 = vand.u32 %v1476, 4294901760
        %1478 = vmatmul.mubr.f32.gmra.mrb[0].mxu0 %v1477
        %v1479 = vpop.f32.mrb[0].mxu0
        %v1480 = vadd.f32 0.0, %v1479
        %v1481 = vpop.f32.mrb[0].mxu0
        %v1482 = vadd.f32 0.0, %v1481
        %1483 = vmatprep.mubr.f32.mxu0 0.0
        %v1484 = vand.u32 %v1341, 4294901760
        %v1485 = vsub.f32 %v1341, %v1484
        %v1486 = vand.u32 %v1485, 4294901760
        %v1487 = vsub.f32 %v1485, %v1486
        %v1488 = vand.u32 %v1487, 4294901760
        %1489 = vmatmul.mubr.f32.gmra.mrb[0].mxu0 %v1488
        %v1490 = vpop.f32.mrb[0].mxu0
        %v1491 = vadd.f32 0.0, %v1490
        %v1492 = vpop.f32.mrb[0].mxu0
        %v1493 = vadd.f32 0.0, %v1492
        %1494 = vmatprep.mubr.f32.mxu0 0.0
        %v1495 = vand.u32 %v1342, 4294901760
        %v1496 = vsub.f32 %v1342, %v1495
        %v1497 = vand.u32 %v1496, 4294901760
        %v1498 = vsub.f32 %v1496, %v1497
        %v1499 = vand.u32 %v1498, 4294901760
        %1500 = vmatmul.mubr.f32.gmra.mrb[0].mxu0 %v1499
        %v1501 = vpop.f32.mrb[0].mxu0
        %v1502 = vadd.f32 0.0, %v1501
        %v1503 = vpop.f32.mrb[0].mxu0
        %v1504 = vadd.f32 0.0, %v1503
        %1505 = vmatprep.mubr.f32.mxu0 0.0
        %v1506 = vand.u32 %v1343, 4294901760
        %v1507 = vsub.f32 %v1343, %v1506
        %v1508 = vand.u32 %v1507, 4294901760
        %v1509 = vsub.f32 %v1507, %v1508
        %v1510 = vand.u32 %v1509, 4294901760
        %1511 = vmatmul.mubr.f32.gmra.mrb[0].mxu0 %v1510
        %v1512 = vpop.f32.mrb[0].mxu0
        %v1513 = vadd.f32 0.0, %v1512
        %v1514 = vpop.f32.mrb[0].mxu0
        %v1515 = vadd.f32 0.0, %v1514
        %1516 = vdwg.mxu0
        %v1517 = vand.u32 %v1345, 4294901760
        %v1518 = vsub.f32 %v1345, %v1517
        %v1519 = vand.u32 %v1518, 4294901760
        %v1520 = vsub.f32 %v1518, %v1519
        %v1521 = vand.u32 %v1520, 4294901760
        %1522 = vmatprep.subr.mxu0 %v1521
        %v1523 = vand.u32 %v1344, 4294901760
        %v1524 = vsub.f32 %v1344, %v1523
        %v1525 = vand.u32 %v1524, 4294901760
        %v1526 = vsub.f32 %v1524, %v1525
        %v1527 = vand.u32 %v1526, 4294901760
        %1528 = vmatpush1.msra.mxu0 %v1527
        %v1529 = vand.u32 %v1347, 4294901760
        %v1530 = vsub.f32 %v1347, %v1529
        %v1531 = vand.u32 %v1530, 4294901760
        %v1532 = vsub.f32 %v1530, %v1531
        %v1533 = vand.u32 %v1532, 4294901760
        %1534 = vmatprep.subr.mxu0 %v1533
        %v1535 = vand.u32 %v1346, 4294901760
        %v1536 = vsub.f32 %v1346, %v1535
        %v1537 = vand.u32 %v1536, 4294901760
        %v1538 = vsub.f32 %v1536, %v1537
        %v1539 = vand.u32 %v1538, 4294901760
        %1540 = vmatpush1.msra.mxu0 %v1539
        %v1541 = vand.u32 %v1349, 4294901760
        %v1542 = vsub.f32 %v1349, %v1541
        %v1543 = vand.u32 %v1542, 4294901760
        %v1544 = vsub.f32 %v1542, %v1543
        %v1545 = vand.u32 %v1544, 4294901760
        %1546 = vmatprep.subr.mxu0 %v1545
        %v1547 = vand.u32 %v1348, 4294901760
        %v1548 = vsub.f32 %v1348, %v1547
        %v1549 = vand.u32 %v1548, 4294901760
        %v1550 = vsub.f32 %v1548, %v1549
        %v1551 = vand.u32 %v1550, 4294901760
        %1552 = vmatpush1.msra.mxu0 %v1551
        %v1553 = vand.u32 %v1351, 4294901760
        %v1554 = vsub.f32 %v1351, %v1553
        %v1555 = vand.u32 %v1554, 4294901760
        %v1556 = vsub.f32 %v1554, %v1555
        %v1557 = vand.u32 %v1556, 4294901760
        %1558 = vmatprep.subr.mxu0 %v1557
        %v1559 = vand.u32 %v1350, 4294901760
        %v1560 = vsub.f32 %v1350, %v1559
        %v1561 = vand.u32 %v1560, 4294901760
        %v1562 = vsub.f32 %v1560, %v1561
        %v1563 = vand.u32 %v1562, 4294901760
        %1564 = vmatpush1.msra.mxu0 %v1563
        %v1565 = vand.u32 %v1353, 4294901760
        %v1566 = vsub.f32 %v1353, %v1565
        %v1567 = vand.u32 %v1566, 4294901760
        %v1568 = vsub.f32 %v1566, %v1567
        %v1569 = vand.u32 %v1568, 4294901760
        %1570 = vmatprep.subr.mxu0 %v1569
        %v1571 = vand.u32 %v1352, 4294901760
        %v1572 = vsub.f32 %v1352, %v1571
        %v1573 = vand.u32 %v1572, 4294901760
        %v1574 = vsub.f32 %v1572, %v1573
        %v1575 = vand.u32 %v1574, 4294901760
        %1576 = vmatpush1.msra.mxu0 %v1575
        %v1577 = vand.u32 %v1355, 4294901760
        %v1578 = vsub.f32 %v1355, %v1577
        %v1579 = vand.u32 %v1578, 4294901760
        %v1580 = vsub.f32 %v1578, %v1579
        %v1581 = vand.u32 %v1580, 4294901760
        %1582 = vmatprep.subr.mxu0 %v1581
        %v1583 = vand.u32 %v1354, 4294901760
        %v1584 = vsub.f32 %v1354, %v1583
        %v1585 = vand.u32 %v1584, 4294901760
        %v1586 = vsub.f32 %v1584, %v1585
        %v1587 = vand.u32 %v1586, 4294901760
        %1588 = vmatpush1.msra.mxu0 %v1587
        %v1589 = vand.u32 %v1357, 4294901760
        %v1590 = vsub.f32 %v1357, %v1589
        %v1591 = vand.u32 %v1590, 4294901760
        %v1592 = vsub.f32 %v1590, %v1591
        %v1593 = vand.u32 %v1592, 4294901760
        %1594 = vmatprep.subr.mxu0 %v1593
        %v1595 = vand.u32 %v1356, 4294901760
        %v1596 = vsub.f32 %v1356, %v1595
        %v1597 = vand.u32 %v1596, 4294901760
        %v1598 = vsub.f32 %v1596, %v1597
        %v1599 = vand.u32 %v1598, 4294901760
        %1600 = vmatpush1.msra.mxu0 %v1599
        %v1601 = vand.u32 %v1359, 4294901760
        %v1602 = vsub.f32 %v1359, %v1601
        %v1603 = vand.u32 %v1602, 4294901760
        %v1604 = vsub.f32 %v1602, %v1603
        %v1605 = vand.u32 %v1604, 4294901760
        %1606 = vmatprep.subr.mxu0 %v1605
        %v1607 = vand.u32 %v1358, 4294901760
        %v1608 = vsub.f32 %v1358, %v1607
        %v1609 = vand.u32 %v1608, 4294901760
        %v1610 = vsub.f32 %v1608, %v1609
        %v1611 = vand.u32 %v1610, 4294901760
        %1612 = vmatpush1.msra.mxu0 %v1611
        %v1613 = vand.u32 %v1361, 4294901760
        %v1614 = vsub.f32 %v1361, %v1613
        %v1615 = vand.u32 %v1614, 4294901760
        %v1616 = vsub.f32 %v1614, %v1615
        %v1617 = vand.u32 %v1616, 4294901760
        %1618 = vmatprep.subr.mxu0 %v1617
        %v1619 = vand.u32 %v1360, 4294901760
        %v1620 = vsub.f32 %v1360, %v1619
        %v1621 = vand.u32 %v1620, 4294901760
        %v1622 = vsub.f32 %v1620, %v1621
        %v1623 = vand.u32 %v1622, 4294901760
        %1624 = vmatpush1.msra.mxu0 %v1623
        %v1625 = vand.u32 %v1363, 4294901760
        %v1626 = vsub.f32 %v1363, %v1625
        %v1627 = vand.u32 %v1626, 4294901760
        %v1628 = vsub.f32 %v1626, %v1627
        %v1629 = vand.u32 %v1628, 4294901760
        %1630 = vmatprep.subr.mxu0 %v1629
        %v1631 = vand.u32 %v1362, 4294901760
        %v1632 = vsub.f32 %v1362, %v1631
        %v1633 = vand.u32 %v1632, 4294901760
        %v1634 = vsub.f32 %v1632, %v1633
        %v1635 = vand.u32 %v1634, 4294901760
        %1636 = vmatpush1.msra.mxu0 %v1635
        %v1637 = vand.u32 %v1365, 4294901760
        %v1638 = vsub.f32 %v1365, %v1637
        %v1639 = vand.u32 %v1638, 4294901760
        %v1640 = vsub.f32 %v1638, %v1639
        %v1641 = vand.u32 %v1640, 4294901760
        %1642 = vmatprep.subr.mxu0 %v1641
        %v1643 = vand.u32 %v1364, 4294901760
        %v1644 = vsub.f32 %v1364, %v1643
        %v1645 = vand.u32 %v1644, 4294901760
        %v1646 = vsub.f32 %v1644, %v1645
        %v1647 = vand.u32 %v1646, 4294901760
        %1648 = vmatpush1.msra.mxu0 %v1647
        %v1649 = vand.u32 %v1367, 4294901760
        %v1650 = vsub.f32 %v1367, %v1649
        %v1651 = vand.u32 %v1650, 4294901760
        %v1652 = vsub.f32 %v1650, %v1651
        %v1653 = vand.u32 %v1652, 4294901760
        %1654 = vmatprep.subr.mxu0 %v1653
        %v1655 = vand.u32 %v1366, 4294901760
        %v1656 = vsub.f32 %v1366, %v1655
        %v1657 = vand.u32 %v1656, 4294901760
        %v1658 = vsub.f32 %v1656, %v1657
        %v1659 = vand.u32 %v1658, 4294901760
        %1660 = vmatpush1.msra.mxu0 %v1659
        %v1661 = vand.u32 %v1369, 4294901760
        %v1662 = vsub.f32 %v1369, %v1661
        %v1663 = vand.u32 %v1662, 4294901760
        %v1664 = vsub.f32 %v1662, %v1663
        %v1665 = vand.u32 %v1664, 4294901760
        %1666 = vmatprep.subr.mxu0 %v1665
        %v1667 = vand.u32 %v1368, 4294901760
        %v1668 = vsub.f32 %v1368, %v1667
        %v1669 = vand.u32 %v1668, 4294901760
        %v1670 = vsub.f32 %v1668, %v1669
        %v1671 = vand.u32 %v1670, 4294901760
        %1672 = vmatpush1.msra.mxu0 %v1671
        %v1673 = vand.u32 %v1371, 4294901760
        %v1674 = vsub.f32 %v1371, %v1673
        %v1675 = vand.u32 %v1674, 4294901760
        %v1676 = vsub.f32 %v1674, %v1675
        %v1677 = vand.u32 %v1676, 4294901760
        %1678 = vmatprep.subr.mxu0 %v1677
        %v1679 = vand.u32 %v1370, 4294901760
        %v1680 = vsub.f32 %v1370, %v1679
        %v1681 = vand.u32 %v1680, 4294901760
        %v1682 = vsub.f32 %v1680, %v1681
        %v1683 = vand.u32 %v1682, 4294901760
        %1684 = vmatpush1.msra.mxu0 %v1683
        %v1685 = vand.u32 %v1373, 4294901760
        %v1686 = vsub.f32 %v1373, %v1685
        %v1687 = vand.u32 %v1686, 4294901760
        %v1688 = vsub.f32 %v1686, %v1687
        %v1689 = vand.u32 %v1688, 4294901760
        %1690 = vmatprep.subr.mxu0 %v1689
        %v1691 = vand.u32 %v1372, 4294901760
        %v1692 = vsub.f32 %v1372, %v1691
        %v1693 = vand.u32 %v1692, 4294901760
        %v1694 = vsub.f32 %v1692, %v1693
        %v1695 = vand.u32 %v1694, 4294901760
        %1696 = vmatpush1.msra.mxu0 %v1695
        %v1697 = vand.u32 %v1375, 4294901760
        %v1698 = vsub.f32 %v1375, %v1697
        %v1699 = vand.u32 %v1698, 4294901760
        %v1700 = vsub.f32 %v1698, %v1699
        %v1701 = vand.u32 %v1700, 4294901760
        %1702 = vmatprep.subr.mxu0 %v1701
        %v1703 = vand.u32 %v1374, 4294901760
        %v1704 = vsub.f32 %v1374, %v1703
        %v1705 = vand.u32 %v1704, 4294901760
        %v1706 = vsub.f32 %v1704, %v1705
        %v1707 = vand.u32 %v1706, 4294901760
        %1708 = vmatpush1.msra.mxu0 %v1707
        %1709 = vmatprep.subr.mxu0 0.0
        %1710 = vmatpush1.msra.mxu0 0.0
        %1711 = vmatprep.subr.mxu0 0.0
        %1712 = vmatpush1.msra.mxu0 0.0
        %1713 = vmatprep.subr.mxu0 0.0
        %1714 = vmatpush1.msra.mxu0 0.0
        %1715 = vmatprep.subr.mxu0 0.0
        %1716 = vmatpush1.msra.mxu0 0.0
        %1717 = vmatprep.subr.mxu0 0.0
        %1718 = vmatpush1.msra.mxu0 0.0
        %1719 = vmatprep.subr.mxu0 0.0
        %1720 = vmatpush1.msra.mxu0 0.0
        %1721 = vmatprep.subr.mxu0 0.0
        %1722 = vmatpush1.msra.mxu0 0.0
        %1723 = vmatprep.subr.mxu0 0.0
        %1724 = vmatpush1.msra.mxu0 0.0
        %1725 = vmatprep.subr.mxu0 0.0
        %1726 = vmatpush1.msra.mxu0 0.0
        %1727 = vmatprep.subr.mxu0 0.0
        %1728 = vmatpush1.msra.mxu0 0.0
        %1729 = vmatprep.subr.mxu0 0.0
        %1730 = vmatpush1.msra.mxu0 0.0
        %1731 = vmatprep.subr.mxu0 0.0
        %1732 = vmatpush1.msra.mxu0 0.0
        %1733 = vmatprep.subr.mxu0 0.0
        %1734 = vmatpush1.msra.mxu0 0.0
        %1735 = vmatprep.subr.mxu0 0.0
        %1736 = vmatpush1.msra.mxu0 0.0
        %1737 = vmatprep.subr.mxu0 0.0
        %1738 = vmatpush1.msra.mxu0 0.0
        %1739 = vmatprep.subr.mxu0 0.0
        %1740 = vmatpush1.msra.mxu0 0.0
        %1741 = vmatprep.mubr.f32.mxu0 0.0
        %v1742 = vand.u32 %v1340, 4294901760
        %1743 = vmatmul.mubr.f32.gmra.mrb[0].mxu0 %v1742
        %v1744 = vpop.f32.mrb[0].mxu0
        %v1745 = vadd.f32 %v1480, %v1744
        %v1746 = vpop.f32.mrb[0].mxu0
        %v1747 = vadd.f32 %v1482, %v1746
        %1748 = vmatprep.mubr.f32.mxu0 0.0
        %v1749 = vand.u32 %v1341, 4294901760
        %1750 = vmatmul.mubr.f32.gmra.mrb[0].mxu0 %v1749
        %v1751 = vpop.f32.mrb[0].mxu0
        %v1752 = vadd.f32 %v1491, %v1751
        %v1753 = vpop.f32.mrb[0].mxu0
        %v1754 = vadd.f32 %v1493, %v1753
        %1755 = vmatprep.mubr.f32.mxu0 0.0
        %v1756 = vand.u32 %v1342, 4294901760
        %1757 = vmatmul.mubr.f32.gmra.mrb[0].mxu0 %v1756
        %v1758 = vpop.f32.mrb[0].mxu0
        %v1759 = vadd.f32 %v1502, %v1758
        %v1760 = vpop.f32.mrb[0].mxu0
        %v1761 = vadd.f32 %v1504, %v1760
        %1762 = vmatprep.mubr.f32.mxu0 0.0
        %v1763 = vand.u32 %v1343, 4294901760
        %1764 = vmatmul.mubr.f32.gmra.mrb[0].mxu0 %v1763
        %v1765 = vpop.f32.mrb[0].mxu0
        %v1766 = vadd.f32 %v1513, %v1765
        %v1767 = vpop.f32.mrb[0].mxu0
        %v1768 = vadd.f32 %v1515, %v1767
        %1769 = vdwg.mxu0
        %v1770 = vand.u32 %v1345, 4294901760
        %v1771 = vsub.f32 %v1345, %v1770
        %1772 = vmatprep.subr.mxu0 %v1771
        %v1773 = vand.u32 %v1344, 4294901760
        %v1774 = vsub.f32 %v1344, %v1773
        %1775 = vmatpush1.msra.mxu0 %v1774
        %v1776 = vand.u32 %v1347, 4294901760
        %v1777 = vsub.f32 %v1347, %v1776
        %1778 = vmatprep.subr.mxu0 %v1777
        %v1779 = vand.u32 %v1346, 4294901760
        %v1780 = vsub.f32 %v1346, %v1779
        %1781 = vmatpush1.msra.mxu0 %v1780
        %v1782 = vand.u32 %v1349, 4294901760
        %v1783 = vsub.f32 %v1349, %v1782
        %1784 = vmatprep.subr.mxu0 %v1783
        %v1785 = vand.u32 %v1348, 4294901760
        %v1786 = vsub.f32 %v1348, %v1785
        %1787 = vmatpush1.msra.mxu0 %v1786
        %v1788 = vand.u32 %v1351, 4294901760
        %v1789 = vsub.f32 %v1351, %v1788
        %1790 = vmatprep.subr.mxu0 %v1789
        %v1791 = vand.u32 %v1350, 4294901760
        %v1792 = vsub.f32 %v1350, %v1791
        %1793 = vmatpush1.msra.mxu0 %v1792
        %v1794 = vand.u32 %v1353, 4294901760
        %v1795 = vsub.f32 %v1353, %v1794
        %1796 = vmatprep.subr.mxu0 %v1795
        %v1797 = vand.u32 %v1352, 4294901760
        %v1798 = vsub.f32 %v1352, %v1797
        %1799 = vmatpush1.msra.mxu0 %v1798
        %v1800 = vand.u32 %v1355, 4294901760
        %v1801 = vsub.f32 %v1355, %v1800
        %1802 = vmatprep.subr.mxu0 %v1801
        %v1803 = vand.u32 %v1354, 4294901760
        %v1804 = vsub.f32 %v1354, %v1803
        %1805 = vmatpush1.msra.mxu0 %v1804
        %v1806 = vand.u32 %v1357, 4294901760
        %v1807 = vsub.f32 %v1357, %v1806
        %1808 = vmatprep.subr.mxu0 %v1807
        %v1809 = vand.u32 %v1356, 4294901760
        %v1810 = vsub.f32 %v1356, %v1809
        %1811 = vmatpush1.msra.mxu0 %v1810
        %v1812 = vand.u32 %v1359, 4294901760
        %v1813 = vsub.f32 %v1359, %v1812
        %1814 = vmatprep.subr.mxu0 %v1813
        %v1815 = vand.u32 %v1358, 4294901760
        %v1816 = vsub.f32 %v1358, %v1815
        %1817 = vmatpush1.msra.mxu0 %v1816
        %v1818 = vand.u32 %v1361, 4294901760
        %v1819 = vsub.f32 %v1361, %v1818
        %1820 = vmatprep.subr.mxu0 %v1819
        %v1821 = vand.u32 %v1360, 4294901760
        %v1822 = vsub.f32 %v1360, %v1821
        %1823 = vmatpush1.msra.mxu0 %v1822
        %v1824 = vand.u32 %v1363, 4294901760
        %v1825 = vsub.f32 %v1363, %v1824
        %1826 = vmatprep.subr.mxu0 %v1825
        %v1827 = vand.u32 %v1362, 4294901760
        %v1828 = vsub.f32 %v1362, %v1827
        %1829 = vmatpush1.msra.mxu0 %v1828
        %v1830 = vand.u32 %v1365, 4294901760
        %v1831 = vsub.f32 %v1365, %v1830
        %1832 = vmatprep.subr.mxu0 %v1831
        %v1833 = vand.u32 %v1364, 4294901760
        %v1834 = vsub.f32 %v1364, %v1833
        %1835 = vmatpush1.msra.mxu0 %v1834
        %v1836 = vand.u32 %v1367, 4294901760
        %v1837 = vsub.f32 %v1367, %v1836
        %1838 = vmatprep.subr.mxu0 %v1837
        %v1839 = vand.u32 %v1366, 4294901760
        %v1840 = vsub.f32 %v1366, %v1839
        %1841 = vmatpush1.msra.mxu0 %v1840
        %v1842 = vand.u32 %v1369, 4294901760
        %v1843 = vsub.f32 %v1369, %v1842
        %1844 = vmatprep.subr.mxu0 %v1843
        %v1845 = vand.u32 %v1368, 4294901760
        %v1846 = vsub.f32 %v1368, %v1845
        %1847 = vmatpush1.msra.mxu0 %v1846
        %v1848 = vand.u32 %v1371, 4294901760
        %v1849 = vsub.f32 %v1371, %v1848
        %1850 = vmatprep.subr.mxu0 %v1849
        %v1851 = vand.u32 %v1370, 4294901760
        %v1852 = vsub.f32 %v1370, %v1851
        %1853 = vmatpush1.msra.mxu0 %v1852
        %v1854 = vand.u32 %v1373, 4294901760
        %v1855 = vsub.f32 %v1373, %v1854
        %1856 = vmatprep.subr.mxu0 %v1855
        %v1857 = vand.u32 %v1372, 4294901760
        %v1858 = vsub.f32 %v1372, %v1857
        %1859 = vmatpush1.msra.mxu0 %v1858
        %v1860 = vand.u32 %v1375, 4294901760
        %v1861 = vsub.f32 %v1375, %v1860
        %1862 = vmatprep.subr.mxu0 %v1861
        %v1863 = vand.u32 %v1374, 4294901760
        %v1864 = vsub.f32 %v1374, %v1863
        %1865 = vmatpush1.msra.mxu0 %v1864
        %1866 = vmatprep.subr.mxu0 0.0
        %1867 = vmatpush1.msra.mxu0 0.0
        %1868 = vmatprep.subr.mxu0 0.0
        %1869 = vmatpush1.msra.mxu0 0.0
        %1870 = vmatprep.subr.mxu0 0.0
        %1871 = vmatpush1.msra.mxu0 0.0
        %1872 = vmatprep.subr.mxu0 0.0
        %1873 = vmatpush1.msra.mxu0 0.0
        %1874 = vmatprep.subr.mxu0 0.0
        %1875 = vmatpush1.msra.mxu0 0.0
        %1876 = vmatprep.subr.mxu0 0.0
        %1877 = vmatpush1.msra.mxu0 0.0
        %1878 = vmatprep.subr.mxu0 0.0
        %1879 = vmatpush1.msra.mxu0 0.0
        %1880 = vmatprep.subr.mxu0 0.0
        %1881 = vmatpush1.msra.mxu0 0.0
        %1882 = vmatprep.subr.mxu0 0.0
        %1883 = vmatpush1.msra.mxu0 0.0
        %1884 = vmatprep.subr.mxu0 0.0
        %1885 = vmatpush1.msra.mxu0 0.0
        %1886 = vmatprep.subr.mxu0 0.0
        %1887 = vmatpush1.msra.mxu0 0.0
        %1888 = vmatprep.subr.mxu0 0.0
        %1889 = vmatpush1.msra.mxu0 0.0
        %1890 = vmatprep.subr.mxu0 0.0
        %1891 = vmatpush1.msra.mxu0 0.0
        %1892 = vmatprep.subr.mxu0 0.0
        %1893 = vmatpush1.msra.mxu0 0.0
        %1894 = vmatprep.subr.mxu0 0.0
        %1895 = vmatpush1.msra.mxu0 0.0
        %1896 = vmatprep.subr.mxu0 0.0
        %1897 = vmatpush1.msra.mxu0 0.0
        %1898 = vmatprep.mubr.f32.mxu0 0.0
        %v1899 = vand.u32 %v1340, 4294901760
        %v1900 = vsub.f32 %v1340, %v1899
        %1901 = vmatmul.mubr.f32.gmra.mrb[0].mxu0 %v1900
        %v1902 = vpop.f32.mrb[0].mxu0
        %v1903 = vadd.f32 %v1745, %v1902
        %v1904 = vpop.f32.mrb[0].mxu0
        %v1905 = vadd.f32 %v1747, %v1904
        %1906 = vmatprep.mubr.f32.mxu0 0.0
        %v1907 = vand.u32 %v1341, 4294901760
        %v1908 = vsub.f32 %v1341, %v1907
        %1909 = vmatmul.mubr.f32.gmra.mrb[0].mxu0 %v1908
        %v1910 = vpop.f32.mrb[0].mxu0
        %v1911 = vadd.f32 %v1752, %v1910
        %v1912 = vpop.f32.mrb[0].mxu0
        %v1913 = vadd.f32 %v1754, %v1912
        %1914 = vmatprep.mubr.f32.mxu0 0.0
        %v1915 = vand.u32 %v1342, 4294901760
        %v1916 = vsub.f32 %v1342, %v1915
        %1917 = vmatmul.mubr.f32.gmra.mrb[0].mxu0 %v1916
        %v1918 = vpop.f32.mrb[0].mxu0
        %v1919 = vadd.f32 %v1759, %v1918
        %v1920 = vpop.f32.mrb[0].mxu0
        %v1921 = vadd.f32 %v1761, %v1920
        %1922 = vmatprep.mubr.f32.mxu0 0.0
        %v1923 = vand.u32 %v1343, 4294901760
        %v1924 = vsub.f32 %v1343, %v1923
        %1925 = vmatmul.mubr.f32.gmra.mrb[0].mxu0 %v1924
        %v1926 = vpop.f32.mrb[0].mxu0
        %v1927 = vadd.f32 %v1766, %v1926
        %v1928 = vpop.f32.mrb[0].mxu0
        %v1929 = vadd.f32 %v1768, %v1928
        %1930 = vdwg.mxu0
        %v1931 = vand.u32 %v1345, 4294901760
        %1932 = vmatprep.subr.mxu0 %v1931
        %v1933 = vand.u32 %v1344, 4294901760
        %1934 = vmatpush1.msra.mxu0 %v1933
        %v1935 = vand.u32 %v1347, 4294901760
        %1936 = vmatprep.subr.mxu0 %v1935
        %v1937 = vand.u32 %v1346, 4294901760
        %1938 = vmatpush1.msra.mxu0 %v1937
        %v1939 = vand.u32 %v1349, 4294901760
        %1940 = vmatprep.subr.mxu0 %v1939
        %v1941 = vand.u32 %v1348, 4294901760
        %1942 = vmatpush1.msra.mxu0 %v1941
        %v1943 = vand.u32 %v1351, 4294901760
        %1944 = vmatprep.subr.mxu0 %v1943
        %v1945 = vand.u32 %v1350, 4294901760
        %1946 = vmatpush1.msra.mxu0 %v1945
        %v1947 = vand.u32 %v1353, 4294901760
        %1948 = vmatprep.subr.mxu0 %v1947
        %v1949 = vand.u32 %v1352, 4294901760
        %1950 = vmatpush1.msra.mxu0 %v1949
        %v1951 = vand.u32 %v1355, 4294901760
        %1952 = vmatprep.subr.mxu0 %v1951
        %v1953 = vand.u32 %v1354, 4294901760
        %1954 = vmatpush1.msra.mxu0 %v1953
        %v1955 = vand.u32 %v1357, 4294901760
        %1956 = vmatprep.subr.mxu0 %v1955
        %v1957 = vand.u32 %v1356, 4294901760
        %1958 = vmatpush1.msra.mxu0 %v1957
        %v1959 = vand.u32 %v1359, 4294901760
        %1960 = vmatprep.subr.mxu0 %v1959
        %v1961 = vand.u32 %v1358, 4294901760
        %1962 = vmatpush1.msra.mxu0 %v1961
        %v1963 = vand.u32 %v1361, 4294901760
        %1964 = vmatprep.subr.mxu0 %v1963
        %v1965 = vand.u32 %v1360, 4294901760
        %1966 = vmatpush1.msra.mxu0 %v1965
        %v1967 = vand.u32 %v1363, 4294901760
        %1968 = vmatprep.subr.mxu0 %v1967
        %v1969 = vand.u32 %v1362, 4294901760
        %1970 = vmatpush1.msra.mxu0 %v1969
        %v1971 = vand.u32 %v1365, 4294901760
        %1972 = vmatprep.subr.mxu0 %v1971
        %v1973 = vand.u32 %v1364, 4294901760
        %1974 = vmatpush1.msra.mxu0 %v1973
        %v1975 = vand.u32 %v1367, 4294901760
        %1976 = vmatprep.subr.mxu0 %v1975
        %v1977 = vand.u32 %v1366, 4294901760
        %1978 = vmatpush1.msra.mxu0 %v1977
        %v1979 = vand.u32 %v1369, 4294901760
        %1980 = vmatprep.subr.mxu0 %v1979
        %v1981 = vand.u32 %v1368, 4294901760
        %1982 = vmatpush1.msra.mxu0 %v1981
        %v1983 = vand.u32 %v1371, 4294901760
        %1984 = vmatprep.subr.mxu0 %v1983
        %v1985 = vand.u32 %v1370, 4294901760
        %1986 = vmatpush1.msra.mxu0 %v1985
        %v1987 = vand.u32 %v1373, 4294901760
        %1988 = vmatprep.subr.mxu0 %v1987
        %v1989 = vand.u32 %v1372, 4294901760
        %1990 = vmatpush1.msra.mxu0 %v1989
        %v1991 = vand.u32 %v1375, 4294901760
        %1992 = vmatprep.subr.mxu0 %v1991
        %v1993 = vand.u32 %v1374, 4294901760
        %1994 = vmatpush1.msra.mxu0 %v1993
        %1995 = vmatprep.subr.mxu0 0.0
        %1996 = vmatpush1.msra.mxu0 0.0
        %1997 = vmatprep.subr.mxu0 0.0
        %1998 = vmatpush1.msra.mxu0 0.0
        %1999 = vmatprep.subr.mxu0 0.0
        %2000 = vmatpush1.msra.mxu0 0.0
        %2001 = vmatprep.subr.mxu0 0.0
        %2002 = vmatpush1.msra.mxu0 0.0
        %2003 = vmatprep.subr.mxu0 0.0
        %2004 = vmatpush1.msra.mxu0 0.0
        %2005 = vmatprep.subr.mxu0 0.0
        %2006 = vmatpush1.msra.mxu0 0.0
        %2007 = vmatprep.subr.mxu0 0.0
        %2008 = vmatpush1.msra.mxu0 0.0
        %2009 = vmatprep.subr.mxu0 0.0
        %2010 = vmatpush1.msra.mxu0 0.0
        %2011 = vmatprep.subr.mxu0 0.0
        %2012 = vmatpush1.msra.mxu0 0.0
        %2013 = vmatprep.subr.mxu0 0.0
        %2014 = vmatpush1.msra.mxu0 0.0
        %2015 = vmatprep.subr.mxu0 0.0
        %2016 = vmatpush1.msra.mxu0 0.0
        %2017 = vmatprep.subr.mxu0 0.0
        %2018 = vmatpush1.msra.mxu0 0.0
        %2019 = vmatprep.subr.mxu0 0.0
        %2020 = vmatpush1.msra.mxu0 0.0
        %2021 = vmatprep.subr.mxu0 0.0
        %2022 = vmatpush1.msra.mxu0 0.0
        %2023 = vmatprep.subr.mxu0 0.0
        %2024 = vmatpush1.msra.mxu0 0.0
        %2025 = vmatprep.subr.mxu0 0.0
        %2026 = vmatpush1.msra.mxu0 0.0
        %2027 = vmatprep.mubr.f32.mxu0 0.0
        %v2028 = vand.u32 %v1340, 4294901760
        %v2029 = vsub.f32 %v1340, %v2028
        %v2030 = vand.u32 %v2029, 4294901760
        %2031 = vmatmul.mubr.f32.gmra.mrb[0].mxu0 %v2030
        %v2032 = vpop.f32.mrb[0].mxu0
        %v2033 = vadd.f32 %v1903, %v2032
        %v2034 = vpop.f32.mrb[0].mxu0
        %v2035 = vadd.f32 %v1905, %v2034
        %2036 = vmatprep.mubr.f32.mxu0 0.0
        %v2037 = vand.u32 %v1341, 4294901760
        %v2038 = vsub.f32 %v1341, %v2037
        %v2039 = vand.u32 %v2038, 4294901760
        %2040 = vmatmul.mubr.f32.gmra.mrb[0].mxu0 %v2039
        %v2041 = vpop.f32.mrb[0].mxu0
        %v2042 = vadd.f32 %v1911, %v2041
        %v2043 = vpop.f32.mrb[0].mxu0
        %v2044 = vadd.f32 %v1913, %v2043
        %2045 = vmatprep.mubr.f32.mxu0 0.0
        %v2046 = vand.u32 %v1342, 4294901760
        %v2047 = vsub.f32 %v1342, %v2046
        %v2048 = vand.u32 %v2047, 4294901760
        %2049 = vmatmul.mubr.f32.gmra.mrb[0].mxu0 %v2048
        %v2050 = vpop.f32.mrb[0].mxu0
        %v2051 = vadd.f32 %v1919, %v2050
        %v2052 = vpop.f32.mrb[0].mxu0
        %v2053 = vadd.f32 %v1921, %v2052
        %2054 = vmatprep.mubr.f32.mxu0 0.0
        %v2055 = vand.u32 %v1343, 4294901760
        %v2056 = vsub.f32 %v1343, %v2055
        %v2057 = vand.u32 %v2056, 4294901760
        %2058 = vmatmul.mubr.f32.gmra.mrb[0].mxu0 %v2057
        %v2059 = vpop.f32.mrb[0].mxu0
        %v2060 = vadd.f32 %v1927, %v2059
        %v2061 = vpop.f32.mrb[0].mxu0
        %v2062 = vadd.f32 %v1929, %v2061
        %2063 = vdwg.mxu0
        %v2064 = vand.u32 %v1345, 4294901760
        %v2065 = vsub.f32 %v1345, %v2064
        %v2066 = vand.u32 %v2065, 4294901760
        %2067 = vmatprep.subr.mxu0 %v2066
        %v2068 = vand.u32 %v1344, 4294901760
        %v2069 = vsub.f32 %v1344, %v2068
        %v2070 = vand.u32 %v2069, 4294901760
        %2071 = vmatpush1.msra.mxu0 %v2070
        %v2072 = vand.u32 %v1347, 4294901760
        %v2073 = vsub.f32 %v1347, %v2072
        %v2074 = vand.u32 %v2073, 4294901760
        %2075 = vmatprep.subr.mxu0 %v2074
        %v2076 = vand.u32 %v1346, 4294901760
        %v2077 = vsub.f32 %v1346, %v2076
        %v2078 = vand.u32 %v2077, 4294901760
        %2079 = vmatpush1.msra.mxu0 %v2078
        %v2080 = vand.u32 %v1349, 4294901760
        %v2081 = vsub.f32 %v1349, %v2080
        %v2082 = vand.u32 %v2081, 4294901760
        %2083 = vmatprep.subr.mxu0 %v2082
        %v2084 = vand.u32 %v1348, 4294901760
        %v2085 = vsub.f32 %v1348, %v2084
        %v2086 = vand.u32 %v2085, 4294901760
        %2087 = vmatpush1.msra.mxu0 %v2086
        %v2088 = vand.u32 %v1351, 4294901760
        %v2089 = vsub.f32 %v1351, %v2088
        %v2090 = vand.u32 %v2089, 4294901760
        %2091 = vmatprep.subr.mxu0 %v2090
        %v2092 = vand.u32 %v1350, 4294901760
        %v2093 = vsub.f32 %v1350, %v2092
        %v2094 = vand.u32 %v2093, 4294901760
        %2095 = vmatpush1.msra.mxu0 %v2094
        %v2096 = vand.u32 %v1353, 4294901760
        %v2097 = vsub.f32 %v1353, %v2096
        %v2098 = vand.u32 %v2097, 4294901760
        %2099 = vmatprep.subr.mxu0 %v2098
        %v2100 = vand.u32 %v1352, 4294901760
        %v2101 = vsub.f32 %v1352, %v2100
        %v2102 = vand.u32 %v2101, 4294901760
        %2103 = vmatpush1.msra.mxu0 %v2102
        %v2104 = vand.u32 %v1355, 4294901760
        %v2105 = vsub.f32 %v1355, %v2104
        %v2106 = vand.u32 %v2105, 4294901760
        %2107 = vmatprep.subr.mxu0 %v2106
        %v2108 = vand.u32 %v1354, 4294901760
        %v2109 = vsub.f32 %v1354, %v2108
        %v2110 = vand.u32 %v2109, 4294901760
        %2111 = vmatpush1.msra.mxu0 %v2110
        %v2112 = vand.u32 %v1357, 4294901760
        %v2113 = vsub.f32 %v1357, %v2112
        %v2114 = vand.u32 %v2113, 4294901760
        %2115 = vmatprep.subr.mxu0 %v2114
        %v2116 = vand.u32 %v1356, 4294901760
        %v2117 = vsub.f32 %v1356, %v2116
        %v2118 = vand.u32 %v2117, 4294901760
        %2119 = vmatpush1.msra.mxu0 %v2118
        %v2120 = vand.u32 %v1359, 4294901760
        %v2121 = vsub.f32 %v1359, %v2120
        %v2122 = vand.u32 %v2121, 4294901760
        %2123 = vmatprep.subr.mxu0 %v2122
        %v2124 = vand.u32 %v1358, 4294901760
        %v2125 = vsub.f32 %v1358, %v2124
        %v2126 = vand.u32 %v2125, 4294901760
        %2127 = vmatpush1.msra.mxu0 %v2126
        %v2128 = vand.u32 %v1361, 4294901760
        %v2129 = vsub.f32 %v1361, %v2128
        %v2130 = vand.u32 %v2129, 4294901760
        %2131 = vmatprep.subr.mxu0 %v2130
        %v2132 = vand.u32 %v1360, 4294901760
        %v2133 = vsub.f32 %v1360, %v2132
        %v2134 = vand.u32 %v2133, 4294901760
        %2135 = vmatpush1.msra.mxu0 %v2134
        %v2136 = vand.u32 %v1363, 4294901760
        %v2137 = vsub.f32 %v1363, %v2136
        %v2138 = vand.u32 %v2137, 4294901760
        %2139 = vmatprep.subr.mxu0 %v2138
        %v2140 = vand.u32 %v1362, 4294901760
        %v2141 = vsub.f32 %v1362, %v2140
        %v2142 = vand.u32 %v2141, 4294901760
        %2143 = vmatpush1.msra.mxu0 %v2142
        %v2144 = vand.u32 %v1365, 4294901760
        %v2145 = vsub.f32 %v1365, %v2144
        %v2146 = vand.u32 %v2145, 4294901760
        %2147 = vmatprep.subr.mxu0 %v2146
        %v2148 = vand.u32 %v1364, 4294901760
        %v2149 = vsub.f32 %v1364, %v2148
        %v2150 = vand.u32 %v2149, 4294901760
        %2151 = vmatpush1.msra.mxu0 %v2150
        %v2152 = vand.u32 %v1367, 4294901760
        %v2153 = vsub.f32 %v1367, %v2152
        %v2154 = vand.u32 %v2153, 4294901760
        %2155 = vmatprep.subr.mxu0 %v2154
        %v2156 = vand.u32 %v1366, 4294901760
        %v2157 = vsub.f32 %v1366, %v2156
        %v2158 = vand.u32 %v2157, 4294901760
        %2159 = vmatpush1.msra.mxu0 %v2158
        %v2160 = vand.u32 %v1369, 4294901760
        %v2161 = vsub.f32 %v1369, %v2160
        %v2162 = vand.u32 %v2161, 4294901760
        %2163 = vmatprep.subr.mxu0 %v2162
        %v2164 = vand.u32 %v1368, 4294901760
        %v2165 = vsub.f32 %v1368, %v2164
        %v2166 = vand.u32 %v2165, 4294901760
        %2167 = vmatpush1.msra.mxu0 %v2166
        %v2168 = vand.u32 %v1371, 4294901760
        %v2169 = vsub.f32 %v1371, %v2168
        %v2170 = vand.u32 %v2169, 4294901760
        %2171 = vmatprep.subr.mxu0 %v2170
        %v2172 = vand.u32 %v1370, 4294901760
        %v2173 = vsub.f32 %v1370, %v2172
        %v2174 = vand.u32 %v2173, 4294901760
        %2175 = vmatpush1.msra.mxu0 %v2174
        %v2176 = vand.u32 %v1373, 4294901760
        %v2177 = vsub.f32 %v1373, %v2176
        %v2178 = vand.u32 %v2177, 4294901760
        %2179 = vmatprep.subr.mxu0 %v2178
        %v2180 = vand.u32 %v1372, 4294901760
        %v2181 = vsub.f32 %v1372, %v2180
        %v2182 = vand.u32 %v2181, 4294901760
        %2183 = vmatpush1.msra.mxu0 %v2182
        %v2184 = vand.u32 %v1375, 4294901760
        %v2185 = vsub.f32 %v1375, %v2184
        %v2186 = vand.u32 %v2185, 4294901760
        %2187 = vmatprep.subr.mxu0 %v2186
        %v2188 = vand.u32 %v1374, 4294901760
        %v2189 = vsub.f32 %v1374, %v2188
        %v2190 = vand.u32 %v2189, 4294901760
        %2191 = vmatpush1.msra.mxu0 %v2190
        %2192 = vmatprep.subr.mxu0 0.0
        %2193 = vmatpush1.msra.mxu0 0.0
        %2194 = vmatprep.subr.mxu0 0.0
        %2195 = vmatpush1.msra.mxu0 0.0
        %2196 = vmatprep.subr.mxu0 0.0
        %2197 = vmatpush1.msra.mxu0 0.0
        %2198 = vmatprep.subr.mxu0 0.0
        %2199 = vmatpush1.msra.mxu0 0.0
        %2200 = vmatprep.subr.mxu0 0.0
        %2201 = vmatpush1.msra.mxu0 0.0
        %2202 = vmatprep.subr.mxu0 0.0
        %2203 = vmatpush1.msra.mxu0 0.0
        %2204 = vmatprep.subr.mxu0 0.0
        %2205 = vmatpush1.msra.mxu0 0.0
        %2206 = vmatprep.subr.mxu0 0.0
        %2207 = vmatpush1.msra.mxu0 0.0
        %2208 = vmatprep.subr.mxu0 0.0
        %2209 = vmatpush1.msra.mxu0 0.0
        %2210 = vmatprep.subr.mxu0 0.0
        %2211 = vmatpush1.msra.mxu0 0.0
        %2212 = vmatprep.subr.mxu0 0.0
        %2213 = vmatpush1.msra.mxu0 0.0
        %2214 = vmatprep.subr.mxu0 0.0
        %2215 = vmatpush1.msra.mxu0 0.0
        %2216 = vmatprep.subr.mxu0 0.0
        %2217 = vmatpush1.msra.mxu0 0.0
        %2218 = vmatprep.subr.mxu0 0.0
        %2219 = vmatpush1.msra.mxu0 0.0
        %2220 = vmatprep.subr.mxu0 0.0
        %2221 = vmatpush1.msra.mxu0 0.0
        %2222 = vmatprep.subr.mxu0 0.0
        %2223 = vmatpush1.msra.mxu0 0.0
        %2224 = vmatprep.mubr.f32.mxu0 0.0
        %v2225 = vand.u32 %v1340, 4294901760
        %2226 = vmatmul.mubr.f32.gmra.mrb[0].mxu0 %v2225
        %v2227 = vpop.f32.mrb[0].mxu0
        %v2228 = vadd.f32 %v2033, %v2227
        %v2229 = vpop.f32.mrb[0].mxu0
        %v2230 = vadd.f32 %v2035, %v2229
        %2231 = vmatprep.mubr.f32.mxu0 0.0
        %v2232 = vand.u32 %v1341, 4294901760
        %2233 = vmatmul.mubr.f32.gmra.mrb[0].mxu0 %v2232
        %v2234 = vpop.f32.mrb[0].mxu0
        %v2235 = vadd.f32 %v2042, %v2234
        %v2236 = vpop.f32.mrb[0].mxu0
        %v2237 = vadd.f32 %v2044, %v2236
        %2238 = vmatprep.mubr.f32.mxu0 0.0
        %v2239 = vand.u32 %v1342, 4294901760
        %2240 = vmatmul.mubr.f32.gmra.mrb[0].mxu0 %v2239
        %v2241 = vpop.f32.mrb[0].mxu0
        %v2242 = vadd.f32 %v2051, %v2241
        %v2243 = vpop.f32.mrb[0].mxu0
        %v2244 = vadd.f32 %v2053, %v2243
        %2245 = vmatprep.mubr.f32.mxu0 0.0
        %v2246 = vand.u32 %v1343, 4294901760
        %2247 = vmatmul.mubr.f32.gmra.mrb[0].mxu0 %v2246
        %v2248 = vpop.f32.mrb[0].mxu0
        %v2249 = vadd.f32 %v2060, %v2248
        %v2250 = vpop.f32.mrb[0].mxu0
        %v2251 = vadd.f32 %v2062, %v2250
        %2252 = vdwg.mxu0
        %v2253 = vand.u32 %v1345, 4294901760
        %2254 = vmatprep.subr.mxu0 %v2253
        %v2255 = vand.u32 %v1344, 4294901760
        %2256 = vmatpush1.msra.mxu0 %v2255
        %v2257 = vand.u32 %v1347, 4294901760
        %2258 = vmatprep.subr.mxu0 %v2257
        %v2259 = vand.u32 %v1346, 4294901760
        %2260 = vmatpush1.msra.mxu0 %v2259
        %v2261 = vand.u32 %v1349, 4294901760
        %2262 = vmatprep.subr.mxu0 %v2261
        %v2263 = vand.u32 %v1348, 4294901760
        %2264 = vmatpush1.msra.mxu0 %v2263
        %v2265 = vand.u32 %v1351, 4294901760
        %2266 = vmatprep.subr.mxu0 %v2265
        %v2267 = vand.u32 %v1350, 4294901760
        %2268 = vmatpush1.msra.mxu0 %v2267
        %v2269 = vand.u32 %v1353, 4294901760
        %2270 = vmatprep.subr.mxu0 %v2269
        %v2271 = vand.u32 %v1352, 4294901760
        %2272 = vmatpush1.msra.mxu0 %v2271
        %v2273 = vand.u32 %v1355, 4294901760
        %2274 = vmatprep.subr.mxu0 %v2273
        %v2275 = vand.u32 %v1354, 4294901760
        %2276 = vmatpush1.msra.mxu0 %v2275
        %v2277 = vand.u32 %v1357, 4294901760
        %2278 = vmatprep.subr.mxu0 %v2277
        %v2279 = vand.u32 %v1356, 4294901760
        %2280 = vmatpush1.msra.mxu0 %v2279
        %v2281 = vand.u32 %v1359, 4294901760
        %2282 = vmatprep.subr.mxu0 %v2281
        %v2283 = vand.u32 %v1358, 4294901760
        %2284 = vmatpush1.msra.mxu0 %v2283
        %v2285 = vand.u32 %v1361, 4294901760
        %2286 = vmatprep.subr.mxu0 %v2285
        %v2287 = vand.u32 %v1360, 4294901760
        %2288 = vmatpush1.msra.mxu0 %v2287
        %v2289 = vand.u32 %v1363, 4294901760
        %2290 = vmatprep.subr.mxu0 %v2289
        %v2291 = vand.u32 %v1362, 4294901760
        %2292 = vmatpush1.msra.mxu0 %v2291
        %v2293 = vand.u32 %v1365, 4294901760
        %2294 = vmatprep.subr.mxu0 %v2293
        %v2295 = vand.u32 %v1364, 4294901760
        %2296 = vmatpush1.msra.mxu0 %v2295
        %v2297 = vand.u32 %v1367, 4294901760
        %2298 = vmatprep.subr.mxu0 %v2297
        %v2299 = vand.u32 %v1366, 4294901760
        %2300 = vmatpush1.msra.mxu0 %v2299
        %v2301 = vand.u32 %v1369, 4294901760
        %2302 = vmatprep.subr.mxu0 %v2301
        %v2303 = vand.u32 %v1368, 4294901760
        %2304 = vmatpush1.msra.mxu0 %v2303
        %v2305 = vand.u32 %v1371, 4294901760
        %2306 = vmatprep.subr.mxu0 %v2305
        %v2307 = vand.u32 %v1370, 4294901760
        %2308 = vmatpush1.msra.mxu0 %v2307
        %v2309 = vand.u32 %v1373, 4294901760
        %2310 = vmatprep.subr.mxu0 %v2309
        %v2311 = vand.u32 %v1372, 4294901760
        %2312 = vmatpush1.msra.mxu0 %v2311
        %v2313 = vand.u32 %v1375, 4294901760
        %2314 = vmatprep.subr.mxu0 %v2313
        %v2315 = vand.u32 %v1374, 4294901760
        %2316 = vmatpush1.msra.mxu0 %v2315
        %2317 = vmatprep.subr.mxu0 0.0
        %2318 = vmatpush1.msra.mxu0 0.0
        %2319 = vmatprep.subr.mxu0 0.0
        %2320 = vmatpush1.msra.mxu0 0.0
        %2321 = vmatprep.subr.mxu0 0.0
        %2322 = vmatpush1.msra.mxu0 0.0
        %2323 = vmatprep.subr.mxu0 0.0
        %2324 = vmatpush1.msra.mxu0 0.0
        %2325 = vmatprep.subr.mxu0 0.0
        %2326 = vmatpush1.msra.mxu0 0.0
        %2327 = vmatprep.subr.mxu0 0.0
        %2328 = vmatpush1.msra.mxu0 0.0
        %2329 = vmatprep.subr.mxu0 0.0
        %2330 = vmatpush1.msra.mxu0 0.0
        %2331 = vmatprep.subr.mxu0 0.0
        %2332 = vmatpush1.msra.mxu0 0.0
        %2333 = vmatprep.subr.mxu0 0.0
        %2334 = vmatpush1.msra.mxu0 0.0
        %2335 = vmatprep.subr.mxu0 0.0
        %2336 = vmatpush1.msra.mxu0 0.0
        %2337 = vmatprep.subr.mxu0 0.0
        %2338 = vmatpush1.msra.mxu0 0.0
        %2339 = vmatprep.subr.mxu0 0.0
        %2340 = vmatpush1.msra.mxu0 0.0
        %2341 = vmatprep.subr.mxu0 0.0
        %2342 = vmatpush1.msra.mxu0 0.0
        %2343 = vmatprep.subr.mxu0 0.0
        %2344 = vmatpush1.msra.mxu0 0.0
        %2345 = vmatprep.subr.mxu0 0.0
        %2346 = vmatpush1.msra.mxu0 0.0
        %2347 = vmatprep.subr.mxu0 0.0
        %2348 = vmatpush1.msra.mxu0 0.0
        %2349 = vmatprep.mubr.f32.mxu0 0.0
        %v2350 = vand.u32 %v1340, 4294901760
        %2351 = vmatmul.mubr.f32.gmra.mrb[0].mxu0 %v2350
        %v2352 = vpop.f32.mrb[0].mxu0
        %v2353 = vadd.f32 %v2228, %v2352
        %v2354 = vpop.f32.mrb[0].mxu0
        %v2355 = vadd.f32 %v2230, %v2354
        %2356 = vmatprep.mubr.f32.mxu0 0.0
        %v2357 = vand.u32 %v1341, 4294901760
        %2358 = vmatmul.mubr.f32.gmra.mrb[0].mxu0 %v2357
        %v2359 = vpop.f32.mrb[0].mxu0
        %v2360 = vadd.f32 %v2235, %v2359
        %v2361 = vpop.f32.mrb[0].mxu0
        %v2362 = vadd.f32 %v2237, %v2361
        %2363 = vmatprep.mubr.f32.mxu0 0.0
        %v2364 = vand.u32 %v1342, 4294901760
        %2365 = vmatmul.mubr.f32.gmra.mrb[0].mxu0 %v2364
        %v2366 = vpop.f32.mrb[0].mxu0
        %v2367 = vadd.f32 %v2242, %v2366
        %v2368 = vpop.f32.mrb[0].mxu0
        %v2369 = vadd.f32 %v2244, %v2368
        %2370 = vmatprep.mubr.f32.mxu0 0.0
        %v2371 = vand.u32 %v1343, 4294901760
        %2372 = vmatmul.mubr.f32.gmra.mrb[0].mxu0 %v2371
        %v2373 = vpop.f32.mrb[0].mxu0
        %v2374 = vadd.f32 %v2249, %v2373
        %v2375 = vpop.f32.mrb[0].mxu0
        %v2376 = vadd.f32 %v2251, %v2375
        %2377 = vdwg.mxu0
        %v2378 = vmax.f32 %v2353, 0.0
        %v2379 = vmax.f32 %v2355, 0.0
        %v2380 = vmax.f32 %v2360, 0.0
        %v2381 = vmax.f32 %v2362, 0.0
        %v2382 = vmax.f32 %v2367, 0.0
        %v2383 = vmax.f32 %v2369, 0.0
        %v2384 = vmax.f32 %v2374, 0.0
        %v2385 = vmax.f32 %v2376, 0.0
        %2386 = vst [vmem:[#allocation2] sm:$0xff] %v2378
        %2387 = vst [vmem:[#allocation2 + $0x8] sm:$0xff] %v2379
        %2388 = vst [vmem:[#allocation2 + $0x10] sm:$0xff] %v2380
        %2389 = vst [vmem:[#allocation2 + $0x18] sm:$0xff] %v2381
        %2390 = vst [vmem:[#allocation2 + $0x20] sm:$0xff] %v2382
        %2391 = vst [vmem:[#allocation2 + $0x28] sm:$0xff] %v2383
        %2392 = vst [vmem:[#allocation2 + $0x30] sm:$0xff] %v2384
        %2393 = vst [vmem:[#allocation2 + $0x38] sm:$0xff] %v2385
        %v2394 = vld [vmem:[#allocation8 + $0x40] sm:$0xff]
        %v2395 = vld [vmem:[#allocation8 + $0x48] sm:$0xff]
        %v2396 = vld [vmem:[#allocation8 + $0x50] sm:$0xff]
        %v2397 = vld [vmem:[#allocation8 + $0x58] sm:$0xff]
        %v2398 = vld [vmem:[#allocation2] sm:$0xff]
        %v2399 = vld [vmem:[#allocation2 + $0x8] sm:$0xff]
        %v2400 = vld [vmem:[#allocation2 + $0x10] sm:$0xff]
        %v2401 = vld [vmem:[#allocation2 + $0x18] sm:$0xff]
        %v2402 = vld [vmem:[#allocation2 + $0x20] sm:$0xff]
        %v2403 = vld [vmem:[#allocation2 + $0x28] sm:$0xff]
        %v2404 = vld [vmem:[#allocation2 + $0x30] sm:$0xff]
        %v2405 = vld [vmem:[#allocation2 + $0x38] sm:$0xff]
        %v2406 = vld [vmem:[#allocation2 + $0x40] sm:$0xff]
        %v2407 = vld [vmem:[#allocation2 + $0x48] sm:$0xff]
        %v2408 = vld [vmem:[#allocation2 + $0x50] sm:$0xff]
        %v2409 = vld [vmem:[#allocation2 + $0x58] sm:$0xff]
        %v2410 = vld [vmem:[#allocation2 + $0x60] sm:$0xff]
        %v2411 = vld [vmem:[#allocation2 + $0x68] sm:$0xff]
        %v2412 = vld [vmem:[#allocation2 + $0x70] sm:$0xff]
        %v2413 = vld [vmem:[#allocation2 + $0x78] sm:$0xff]
        %v2414 = vld [vmem:[#allocation2 + $0x80] sm:$0xff]
        %v2415 = vld [vmem:[#allocation2 + $0x88] sm:$0xff]
        %v2416 = vld [vmem:[#allocation2 + $0x90] sm:$0xff]
        %v2417 = vld [vmem:[#allocation2 + $0x98] sm:$0xff]
        %v2418 = vld [vmem:[#allocation2 + $0xa0] sm:$0xff]
        %v2419 = vld [vmem:[#allocation2 + $0xa8] sm:$0xff]
        %v2420 = vld [vmem:[#allocation2 + $0xb0] sm:$0xff]
        %v2421 = vld [vmem:[#allocation2 + $0xb8] sm:$0xff]
        %v2422 = vld [vmem:[#allocation2 + $0xc0] sm:$0xff]
        %v2423 = vld [vmem:[#allocation2 + $0xc8] sm:$0xff]
        %v2424 = vld [vmem:[#allocation2 + $0xd0] sm:$0xff]
        %v2425 = vld [vmem:[#allocation2 + $0xd8] sm:$0xff]
        %v2426 = vld [vmem:[#allocation2 + $0xe0] sm:$0xff]
        %v2427 = vld [vmem:[#allocation2 + $0xe8] sm:$0xff]
        %v2428 = vld [vmem:[#allocation2 + $0xf0] sm:$0xff]
        %v2429 = vld [vmem:[#allocation2 + $0xf8] sm:$0xff]
        %v2430 = vand.u32 %v2399, 4294901760
        %2431 = vmatprep.subr.mxu0 %v2430
        %v2432 = vand.u32 %v2398, 4294901760
        %2433 = vmatpush1.msra.mxu0 %v2432
        %v2434 = vand.u32 %v2401, 4294901760
        %2435 = vmatprep.subr.mxu0 %v2434
        %v2436 = vand.u32 %v2400, 4294901760
        %2437 = vmatpush1.msra.mxu0 %v2436
        %v2438 = vand.u32 %v2403, 4294901760
        %2439 = vmatprep.subr.mxu0 %v2438
        %v2440 = vand.u32 %v2402, 4294901760
        %2441 = vmatpush1.msra.mxu0 %v2440
        %v2442 = vand.u32 %v2405, 4294901760
        %2443 = vmatprep.subr.mxu0 %v2442
        %v2444 = vand.u32 %v2404, 4294901760
        %2445 = vmatpush1.msra.mxu0 %v2444
        %v2446 = vand.u32 %v2407, 4294901760
        %2447 = vmatprep.subr.mxu0 %v2446
        %v2448 = vand.u32 %v2406, 4294901760
        %2449 = vmatpush1.msra.mxu0 %v2448
        %v2450 = vand.u32 %v2409, 4294901760
        %2451 = vmatprep.subr.mxu0 %v2450
        %v2452 = vand.u32 %v2408, 4294901760
        %2453 = vmatpush1.msra.mxu0 %v2452
        %v2454 = vand.u32 %v2411, 4294901760
        %2455 = vmatprep.subr.mxu0 %v2454
        %v2456 = vand.u32 %v2410, 4294901760
        %2457 = vmatpush1.msra.mxu0 %v2456
        %v2458 = vand.u32 %v2413, 4294901760
        %2459 = vmatprep.subr.mxu0 %v2458
        %v2460 = vand.u32 %v2412, 4294901760
        %2461 = vmatpush1.msra.mxu0 %v2460
        %v2462 = vand.u32 %v2415, 4294901760
        %2463 = vmatprep.subr.mxu0 %v2462
        %v2464 = vand.u32 %v2414, 4294901760
        %2465 = vmatpush1.msra.mxu0 %v2464
        %v2466 = vand.u32 %v2417, 4294901760
        %2467 = vmatprep.subr.mxu0 %v2466
        %v2468 = vand.u32 %v2416, 4294901760
        %2469 = vmatpush1.msra.mxu0 %v2468
        %v2470 = vand.u32 %v2419, 4294901760
        %2471 = vmatprep.subr.mxu0 %v2470
        %v2472 = vand.u32 %v2418, 4294901760
        %2473 = vmatpush1.msra.mxu0 %v2472
        %v2474 = vand.u32 %v2421, 4294901760
        %2475 = vmatprep.subr.mxu0 %v2474
        %v2476 = vand.u32 %v2420, 4294901760
        %2477 = vmatpush1.msra.mxu0 %v2476
        %v2478 = vand.u32 %v2423, 4294901760
        %2479 = vmatprep.subr.mxu0 %v2478
        %v2480 = vand.u32 %v2422, 4294901760
        %2481 = vmatpush1.msra.mxu0 %v2480
        %v2482 = vand.u32 %v2425, 4294901760
        %2483 = vmatprep.subr.mxu0 %v2482
        %v2484 = vand.u32 %v2424, 4294901760
        %2485 = vmatpush1.msra.mxu0 %v2484
        %v2486 = vand.u32 %v2427, 4294901760
        %2487 = vmatprep.subr.mxu0 %v2486
        %v2488 = vand.u32 %v2426, 4294901760
        %2489 = vmatpush1.msra.mxu0 %v2488
        %v2490 = vand.u32 %v2429, 4294901760
        %2491 = vmatprep.subr.mxu0 %v2490
        %v2492 = vand.u32 %v2428, 4294901760
        %2493 = vmatpush1.msra.mxu0 %v2492
        %2494 = vmatprep.subr.mxu0 0.0
        %2495 = vmatpush1.msra.mxu0 0.0
        %2496 = vmatprep.subr.mxu0 0.0
        %2497 = vmatpush1.msra.mxu0 0.0
        %2498 = vmatprep.subr.mxu0 0.0
        %2499 = vmatpush1.msra.mxu0 0.0
        %2500 = vmatprep.subr.mxu0 0.0
        %2501 = vmatpush1.msra.mxu0 0.0
        %2502 = vmatprep.subr.mxu0 0.0
        %2503 = vmatpush1.msra.mxu0 0.0
        %2504 = vmatprep.subr.mxu0 0.0
        %2505 = vmatpush1.msra.mxu0 0.0
        %2506 = vmatprep.subr.mxu0 0.0
        %2507 = vmatpush1.msra.mxu0 0.0
        %2508 = vmatprep.subr.mxu0 0.0
        %2509 = vmatpush1.msra.mxu0 0.0
        %2510 = vmatprep.subr.mxu0 0.0
        %2511 = vmatpush1.msra.mxu0 0.0
        %2512 = vmatprep.subr.mxu0 0.0
        %2513 = vmatpush1.msra.mxu0 0.0
        %2514 = vmatprep.subr.mxu0 0.0
        %2515 = vmatpush1.msra.mxu0 0.0
        %2516 = vmatprep.subr.mxu0 0.0
        %2517 = vmatpush1.msra.mxu0 0.0
        %2518 = vmatprep.subr.mxu0 0.0
        %2519 = vmatpush1.msra.mxu0 0.0
        %2520 = vmatprep.subr.mxu0 0.0
        %2521 = vmatpush1.msra.mxu0 0.0
        %2522 = vmatprep.subr.mxu0 0.0
        %2523 = vmatpush1.msra.mxu0 0.0
        %2524 = vmatprep.subr.mxu0 0.0
        %2525 = vmatpush1.msra.mxu0 0.0
        %2526 = vmatprep.mubr.f32.mxu0 0.0
        %v2527 = vand.u32 %v2394, 4294901760
        %v2528 = vsub.f32 %v2394, %v2527
        %v2529 = vand.u32 %v2528, 4294901760
        %v2530 = vsub.f32 %v2528, %v2529
        %v2531 = vand.u32 %v2530, 4294901760
        %2532 = vmatmul.mubr.f32.gmra.mrb[0].mxu0 %v2531
        %v2533 = vpop.f32.mrb[0].mxu0
        %v2534 = vadd.f32 0.0, %v2533
        %v2535 = vpop.f32.mrb[0].mxu0
        %v2536 = vadd.f32 0.0, %v2535
        %2537 = vmatprep.mubr.f32.mxu0 0.0
        %v2538 = vand.u32 %v2395, 4294901760
        %v2539 = vsub.f32 %v2395, %v2538
        %v2540 = vand.u32 %v2539, 4294901760
        %v2541 = vsub.f32 %v2539, %v2540
        %v2542 = vand.u32 %v2541, 4294901760
        %2543 = vmatmul.mubr.f32.gmra.mrb[0].mxu0 %v2542
        %v2544 = vpop.f32.mrb[0].mxu0
        %v2545 = vadd.f32 0.0, %v2544
        %v2546 = vpop.f32.mrb[0].mxu0
        %v2547 = vadd.f32 0.0, %v2546
        %2548 = vmatprep.mubr.f32.mxu0 0.0
        %v2549 = vand.u32 %v2396, 4294901760
        %v2550 = vsub.f32 %v2396, %v2549
        %v2551 = vand.u32 %v2550, 4294901760
        %v2552 = vsub.f32 %v2550, %v2551
        %v2553 = vand.u32 %v2552, 4294901760
        %2554 = vmatmul.mubr.f32.gmra.mrb[0].mxu0 %v2553
        %v2555 = vpop.f32.mrb[0].mxu0
        %v2556 = vadd.f32 0.0, %v2555
        %v2557 = vpop.f32.mrb[0].mxu0
        %v2558 = vadd.f32 0.0, %v2557
        %2559 = vmatprep.mubr.f32.mxu0 0.0
        %v2560 = vand.u32 %v2397, 4294901760
        %v2561 = vsub.f32 %v2397, %v2560
        %v2562 = vand.u32 %v2561, 4294901760
        %v2563 = vsub.f32 %v2561, %v2562
        %v2564 = vand.u32 %v2563, 4294901760
        %2565 = vmatmul.mubr.f32.gmra.mrb[0].mxu0 %v2564
        %v2566 = vpop.f32.mrb[0].mxu0
        %v2567 = vadd.f32 0.0, %v2566
        %v2568 = vpop.f32.mrb[0].mxu0
        %v2569 = vadd.f32 0.0, %v2568
        %2570 = vdwg.mxu0
        %v2571 = vand.u32 %v2399, 4294901760
        %v2572 = vsub.f32 %v2399, %v2571
        %v2573 = vand.u32 %v2572, 4294901760
        %v2574 = vsub.f32 %v2572, %v2573
        %v2575 = vand.u32 %v2574, 4294901760
        %2576 = vmatprep.subr.mxu0 %v2575
        %v2577 = vand.u32 %v2398, 4294901760
        %v2578 = vsub.f32 %v2398, %v2577
        %v2579 = vand.u32 %v2578, 4294901760
        %v2580 = vsub.f32 %v2578, %v2579
        %v2581 = vand.u32 %v2580, 4294901760
        %2582 = vmatpush1.msra.mxu0 %v2581
        %v2583 = vand.u32 %v2401, 4294901760
        %v2584 = vsub.f32 %v2401, %v2583
        %v2585 = vand.u32 %v2584, 4294901760
        %v2586 = vsub.f32 %v2584, %v2585
        %v2587 = vand.u32 %v2586, 4294901760
        %2588 = vmatprep.subr.mxu0 %v2587
        %v2589 = vand.u32 %v2400, 4294901760
        %v2590 = vsub.f32 %v2400, %v2589
        %v2591 = vand.u32 %v2590, 4294901760
        %v2592 = vsub.f32 %v2590, %v2591
        %v2593 = vand.u32 %v2592, 4294901760
        %2594 = vmatpush1.msra.mxu0 %v2593
        %v2595 = vand.u32 %v2403, 4294901760
        %v2596 = vsub.f32 %v2403, %v2595
        %v2597 = vand.u32 %v2596, 4294901760
        %v2598 = vsub.f32 %v2596, %v2597
        %v2599 = vand.u32 %v2598, 4294901760
        %2600 = vmatprep.subr.mxu0 %v2599
        %v2601 = vand.u32 %v2402, 4294901760
        %v2602 = vsub.f32 %v2402, %v2601
        %v2603 = vand.u32 %v2602, 4294901760
        %v2604 = vsub.f32 %v2602, %v2603
        %v2605 = vand.u32 %v2604, 4294901760
        %2606 = vmatpush1.msra.mxu0 %v2605
        %v2607 = vand.u32 %v2405, 4294901760
        %v2608 = vsub.f32 %v2405, %v2607
        %v2609 = vand.u32 %v2608, 4294901760
        %v2610 = vsub.f32 %v2608, %v2609
        %v2611 = vand.u32 %v2610, 4294901760
        %2612 = vmatprep.subr.mxu0 %v2611
        %v2613 = vand.u32 %v2404, 4294901760
        %v2614 = vsub.f32 %v2404, %v2613
        %v2615 = vand.u32 %v2614, 4294901760
        %v2616 = vsub.f32 %v2614, %v2615
        %v2617 = vand.u32 %v2616, 4294901760
        %2618 = vmatpush1.msra.mxu0 %v2617
        %v2619 = vand.u32 %v2407, 4294901760
        %v2620 = vsub.f32 %v2407, %v2619
        %v2621 = vand.u32 %v2620, 4294901760
        %v2622 = vsub.f32 %v2620, %v2621
        %v2623 = vand.u32 %v2622, 4294901760
        %2624 = vmatprep.subr.mxu0 %v2623
        %v2625 = vand.u32 %v2406, 4294901760
        %v2626 = vsub.f32 %v2406, %v2625
        %v2627 = vand.u32 %v2626, 4294901760
        %v2628 = vsub.f32 %v2626, %v2627
        %v2629 = vand.u32 %v2628, 4294901760
        %2630 = vmatpush1.msra.mxu0 %v2629
        %v2631 = vand.u32 %v2409, 4294901760
        %v2632 = vsub.f32 %v2409, %v2631
        %v2633 = vand.u32 %v2632, 4294901760
        %v2634 = vsub.f32 %v2632, %v2633
        %v2635 = vand.u32 %v2634, 4294901760
        %2636 = vmatprep.subr.mxu0 %v2635
        %v2637 = vand.u32 %v2408, 4294901760
        %v2638 = vsub.f32 %v2408, %v2637
        %v2639 = vand.u32 %v2638, 4294901760
        %v2640 = vsub.f32 %v2638, %v2639
        %v2641 = vand.u32 %v2640, 4294901760
        %2642 = vmatpush1.msra.mxu0 %v2641
        %v2643 = vand.u32 %v2411, 4294901760
        %v2644 = vsub.f32 %v2411, %v2643
        %v2645 = vand.u32 %v2644, 4294901760
        %v2646 = vsub.f32 %v2644, %v2645
        %v2647 = vand.u32 %v2646, 4294901760
        %2648 = vmatprep.subr.mxu0 %v2647
        %v2649 = vand.u32 %v2410, 4294901760
        %v2650 = vsub.f32 %v2410, %v2649
        %v2651 = vand.u32 %v2650, 4294901760
        %v2652 = vsub.f32 %v2650, %v2651
        %v2653 = vand.u32 %v2652, 4294901760
        %2654 = vmatpush1.msra.mxu0 %v2653
        %v2655 = vand.u32 %v2413, 4294901760
        %v2656 = vsub.f32 %v2413, %v2655
        %v2657 = vand.u32 %v2656, 4294901760
        %v2658 = vsub.f32 %v2656, %v2657
        %v2659 = vand.u32 %v2658, 4294901760
        %2660 = vmatprep.subr.mxu0 %v2659
        %v2661 = vand.u32 %v2412, 4294901760
        %v2662 = vsub.f32 %v2412, %v2661
        %v2663 = vand.u32 %v2662, 4294901760
        %v2664 = vsub.f32 %v2662, %v2663
        %v2665 = vand.u32 %v2664, 4294901760
        %2666 = vmatpush1.msra.mxu0 %v2665
        %v2667 = vand.u32 %v2415, 4294901760
        %v2668 = vsub.f32 %v2415, %v2667
        %v2669 = vand.u32 %v2668, 4294901760
        %v2670 = vsub.f32 %v2668, %v2669
        %v2671 = vand.u32 %v2670, 4294901760
        %2672 = vmatprep.subr.mxu0 %v2671
        %v2673 = vand.u32 %v2414, 4294901760
        %v2674 = vsub.f32 %v2414, %v2673
        %v2675 = vand.u32 %v2674, 4294901760
        %v2676 = vsub.f32 %v2674, %v2675
        %v2677 = vand.u32 %v2676, 4294901760
        %2678 = vmatpush1.msra.mxu0 %v2677
        %v2679 = vand.u32 %v2417, 4294901760
        %v2680 = vsub.f32 %v2417, %v2679
        %v2681 = vand.u32 %v2680, 4294901760
        %v2682 = vsub.f32 %v2680, %v2681
        %v2683 = vand.u32 %v2682, 4294901760
        %2684 = vmatprep.subr.mxu0 %v2683
        %v2685 = vand.u32 %v2416, 4294901760
        %v2686 = vsub.f32 %v2416, %v2685
        %v2687 = vand.u32 %v2686, 4294901760
        %v2688 = vsub.f32 %v2686, %v2687
        %v2689 = vand.u32 %v2688, 4294901760
        %2690 = vmatpush1.msra.mxu0 %v2689
        %v2691 = vand.u32 %v2419, 4294901760
        %v2692 = vsub.f32 %v2419, %v2691
        %v2693 = vand.u32 %v2692, 4294901760
        %v2694 = vsub.f32 %v2692, %v2693
        %v2695 = vand.u32 %v2694, 4294901760
        %2696 = vmatprep.subr.mxu0 %v2695
        %v2697 = vand.u32 %v2418, 4294901760
        %v2698 = vsub.f32 %v2418, %v2697
        %v2699 = vand.u32 %v2698, 4294901760
        %v2700 = vsub.f32 %v2698, %v2699
        %v2701 = vand.u32 %v2700, 4294901760
        %2702 = vmatpush1.msra.mxu0 %v2701
        %v2703 = vand.u32 %v2421, 4294901760
        %v2704 = vsub.f32 %v2421, %v2703
        %v2705 = vand.u32 %v2704, 4294901760
        %v2706 = vsub.f32 %v2704, %v2705
        %v2707 = vand.u32 %v2706, 4294901760
        %2708 = vmatprep.subr.mxu0 %v2707
        %v2709 = vand.u32 %v2420, 4294901760
        %v2710 = vsub.f32 %v2420, %v2709
        %v2711 = vand.u32 %v2710, 4294901760
        %v2712 = vsub.f32 %v2710, %v2711
        %v2713 = vand.u32 %v2712, 4294901760
        %2714 = vmatpush1.msra.mxu0 %v2713
        %v2715 = vand.u32 %v2423, 4294901760
        %v2716 = vsub.f32 %v2423, %v2715
        %v2717 = vand.u32 %v2716, 4294901760
        %v2718 = vsub.f32 %v2716, %v2717
        %v2719 = vand.u32 %v2718, 4294901760
        %2720 = vmatprep.subr.mxu0 %v2719
        %v2721 = vand.u32 %v2422, 4294901760
        %v2722 = vsub.f32 %v2422, %v2721
        %v2723 = vand.u32 %v2722, 4294901760
        %v2724 = vsub.f32 %v2722, %v2723
        %v2725 = vand.u32 %v2724, 4294901760
        %2726 = vmatpush1.msra.mxu0 %v2725
        %v2727 = vand.u32 %v2425, 4294901760
        %v2728 = vsub.f32 %v2425, %v2727
        %v2729 = vand.u32 %v2728, 4294901760
        %v2730 = vsub.f32 %v2728, %v2729
        %v2731 = vand.u32 %v2730, 4294901760
        %2732 = vmatprep.subr.mxu0 %v2731
        %v2733 = vand.u32 %v2424, 4294901760
        %v2734 = vsub.f32 %v2424, %v2733
        %v2735 = vand.u32 %v2734, 4294901760
        %v2736 = vsub.f32 %v2734, %v2735
        %v2737 = vand.u32 %v2736, 4294901760
        %2738 = vmatpush1.msra.mxu0 %v2737
        %v2739 = vand.u32 %v2427, 4294901760
        %v2740 = vsub.f32 %v2427, %v2739
        %v2741 = vand.u32 %v2740, 4294901760
        %v2742 = vsub.f32 %v2740, %v2741
        %v2743 = vand.u32 %v2742, 4294901760
        %2744 = vmatprep.subr.mxu0 %v2743
        %v2745 = vand.u32 %v2426, 4294901760
        %v2746 = vsub.f32 %v2426, %v2745
        %v2747 = vand.u32 %v2746, 4294901760
        %v2748 = vsub.f32 %v2746, %v2747
        %v2749 = vand.u32 %v2748, 4294901760
        %2750 = vmatpush1.msra.mxu0 %v2749
        %v2751 = vand.u32 %v2429, 4294901760
        %v2752 = vsub.f32 %v2429, %v2751
        %v2753 = vand.u32 %v2752, 4294901760
        %v2754 = vsub.f32 %v2752, %v2753
        %v2755 = vand.u32 %v2754, 4294901760
        %2756 = vmatprep.subr.mxu0 %v2755
        %v2757 = vand.u32 %v2428, 4294901760
        %v2758 = vsub.f32 %v2428, %v2757
        %v2759 = vand.u32 %v2758, 4294901760
        %v2760 = vsub.f32 %v2758, %v2759
        %v2761 = vand.u32 %v2760, 4294901760
        %2762 = vmatpush1.msra.mxu0 %v2761
        %2763 = vmatprep.subr.mxu0 0.0
        %2764 = vmatpush1.msra.mxu0 0.0
        %2765 = vmatprep.subr.mxu0 0.0
        %2766 = vmatpush1.msra.mxu0 0.0
        %2767 = vmatprep.subr.mxu0 0.0
        %2768 = vmatpush1.msra.mxu0 0.0
        %2769 = vmatprep.subr.mxu0 0.0
        %2770 = vmatpush1.msra.mxu0 0.0
        %2771 = vmatprep.subr.mxu0 0.0
        %2772 = vmatpush1.msra.mxu0 0.0
        %2773 = vmatprep.subr.mxu0 0.0
        %2774 = vmatpush1.msra.mxu0 0.0
        %2775 = vmatprep.subr.mxu0 0.0
        %2776 = vmatpush1.msra.mxu0 0.0
        %2777 = vmatprep.subr.mxu0 0.0
        %2778 = vmatpush1.msra.mxu0 0.0
        %2779 = vmatprep.subr.mxu0 0.0
        %2780 = vmatpush1.msra.mxu0 0.0
        %2781 = vmatprep.subr.mxu0 0.0
        %2782 = vmatpush1.msra.mxu0 0.0
        %2783 = vmatprep.subr.mxu0 0.0
        %2784 = vmatpush1.msra.mxu0 0.0
        %2785 = vmatprep.subr.mxu0 0.0
        %2786 = vmatpush1.msra.mxu0 0.0
        %2787 = vmatprep.subr.mxu0 0.0
        %2788 = vmatpush1.msra.mxu0 0.0
        %2789 = vmatprep.subr.mxu0 0.0
        %2790 = vmatpush1.msra.mxu0 0.0
        %2791 = vmatprep.subr.mxu0 0.0
        %2792 = vmatpush1.msra.mxu0 0.0
        %2793 = vmatprep.subr.mxu0 0.0
        %2794 = vmatpush1.msra.mxu0 0.0
        %2795 = vmatprep.mubr.f32.mxu0 0.0
        %v2796 = vand.u32 %v2394, 4294901760
        %2797 = vmatmul.mubr.f32.gmra.mrb[0].mxu0 %v2796
        %v2798 = vpop.f32.mrb[0].mxu0
        %v2799 = vadd.f32 %v2534, %v2798
        %v2800 = vpop.f32.mrb[0].mxu0
        %v2801 = vadd.f32 %v2536, %v2800
        %2802 = vmatprep.mubr.f32.mxu0 0.0
        %v2803 = vand.u32 %v2395, 4294901760
        %2804 = vmatmul.mubr.f32.gmra.mrb[0].mxu0 %v2803
        %v2805 = vpop.f32.mrb[0].mxu0
        %v2806 = vadd.f32 %v2545, %v2805
        %v2807 = vpop.f32.mrb[0].mxu0
        %v2808 = vadd.f32 %v2547, %v2807
        %2809 = vmatprep.mubr.f32.mxu0 0.0
        %v2810 = vand.u32 %v2396, 4294901760
        %2811 = vmatmul.mubr.f32.gmra.mrb[0].mxu0 %v2810
        %v2812 = vpop.f32.mrb[0].mxu0
        %v2813 = vadd.f32 %v2556, %v2812
        %v2814 = vpop.f32.mrb[0].mxu0
        %v2815 = vadd.f32 %v2558, %v2814
        %2816 = vmatprep.mubr.f32.mxu0 0.0
        %v2817 = vand.u32 %v2397, 4294901760
        %2818 = vmatmul.mubr.f32.gmra.mrb[0].mxu0 %v2817
        %v2819 = vpop.f32.mrb[0].mxu0
        %v2820 = vadd.f32 %v2567, %v2819
        %v2821 = vpop.f32.mrb[0].mxu0
        %v2822 = vadd.f32 %v2569, %v2821
        %2823 = vdwg.mxu0
        %v2824 = vand.u32 %v2399, 4294901760
        %v2825 = vsub.f32 %v2399, %v2824
        %2826 = vmatprep.subr.mxu0 %v2825
        %v2827 = vand.u32 %v2398, 4294901760
        %v2828 = vsub.f32 %v2398, %v2827
        %2829 = vmatpush1.msra.mxu0 %v2828
        %v2830 = vand.u32 %v2401, 4294901760
        %v2831 = vsub.f32 %v2401, %v2830
        %2832 = vmatprep.subr.mxu0 %v2831
        %v2833 = vand.u32 %v2400, 4294901760
        %v2834 = vsub.f32 %v2400, %v2833
        %2835 = vmatpush1.msra.mxu0 %v2834
        %v2836 = vand.u32 %v2403, 4294901760
        %v2837 = vsub.f32 %v2403, %v2836
        %2838 = vmatprep.subr.mxu0 %v2837
        %v2839 = vand.u32 %v2402, 4294901760
        %v2840 = vsub.f32 %v2402, %v2839
        %2841 = vmatpush1.msra.mxu0 %v2840
        %v2842 = vand.u32 %v2405, 4294901760
        %v2843 = vsub.f32 %v2405, %v2842
        %2844 = vmatprep.subr.mxu0 %v2843
        %v2845 = vand.u32 %v2404, 4294901760
        %v2846 = vsub.f32 %v2404, %v2845
        %2847 = vmatpush1.msra.mxu0 %v2846
        %v2848 = vand.u32 %v2407, 4294901760
        %v2849 = vsub.f32 %v2407, %v2848
        %2850 = vmatprep.subr.mxu0 %v2849
        %v2851 = vand.u32 %v2406, 4294901760
        %v2852 = vsub.f32 %v2406, %v2851
        %2853 = vmatpush1.msra.mxu0 %v2852
        %v2854 = vand.u32 %v2409, 4294901760
        %v2855 = vsub.f32 %v2409, %v2854
        %2856 = vmatprep.subr.mxu0 %v2855
        %v2857 = vand.u32 %v2408, 4294901760
        %v2858 = vsub.f32 %v2408, %v2857
        %2859 = vmatpush1.msra.mxu0 %v2858
        %v2860 = vand.u32 %v2411, 4294901760
        %v2861 = vsub.f32 %v2411, %v2860
        %2862 = vmatprep.subr.mxu0 %v2861
        %v2863 = vand.u32 %v2410, 4294901760
        %v2864 = vsub.f32 %v2410, %v2863
        %2865 = vmatpush1.msra.mxu0 %v2864
        %v2866 = vand.u32 %v2413, 4294901760
        %v2867 = vsub.f32 %v2413, %v2866
        %2868 = vmatprep.subr.mxu0 %v2867
        %v2869 = vand.u32 %v2412, 4294901760
        %v2870 = vsub.f32 %v2412, %v2869
        %2871 = vmatpush1.msra.mxu0 %v2870
        %v2872 = vand.u32 %v2415, 4294901760
        %v2873 = vsub.f32 %v2415, %v2872
        %2874 = vmatprep.subr.mxu0 %v2873
        %v2875 = vand.u32 %v2414, 4294901760
        %v2876 = vsub.f32 %v2414, %v2875
        %2877 = vmatpush1.msra.mxu0 %v2876
        %v2878 = vand.u32 %v2417, 4294901760
        %v2879 = vsub.f32 %v2417, %v2878
        %2880 = vmatprep.subr.mxu0 %v2879
        %v2881 = vand.u32 %v2416, 4294901760
        %v2882 = vsub.f32 %v2416, %v2881
        %2883 = vmatpush1.msra.mxu0 %v2882
        %v2884 = vand.u32 %v2419, 4294901760
        %v2885 = vsub.f32 %v2419, %v2884
        %2886 = vmatprep.subr.mxu0 %v2885
        %v2887 = vand.u32 %v2418, 4294901760
        %v2888 = vsub.f32 %v2418, %v2887
        %2889 = vmatpush1.msra.mxu0 %v2888
        %v2890 = vand.u32 %v2421, 4294901760
        %v2891 = vsub.f32 %v2421, %v2890
        %2892 = vmatprep.subr.mxu0 %v2891
        %v2893 = vand.u32 %v2420, 4294901760
        %v2894 = vsub.f32 %v2420, %v2893
        %2895 = vmatpush1.msra.mxu0 %v2894
        %v2896 = vand.u32 %v2423, 4294901760
        %v2897 = vsub.f32 %v2423, %v2896
        %2898 = vmatprep.subr.mxu0 %v2897
        %v2899 = vand.u32 %v2422, 4294901760
        %v2900 = vsub.f32 %v2422, %v2899
        %2901 = vmatpush1.msra.mxu0 %v2900
        %v2902 = vand.u32 %v2425, 4294901760
        %v2903 = vsub.f32 %v2425, %v2902
        %2904 = vmatprep.subr.mxu0 %v2903
        %v2905 = vand.u32 %v2424, 4294901760
        %v2906 = vsub.f32 %v2424, %v2905
        %2907 = vmatpush1.msra.mxu0 %v2906
        %v2908 = vand.u32 %v2427, 4294901760
        %v2909 = vsub.f32 %v2427, %v2908
        %2910 = vmatprep.subr.mxu0 %v2909
        %v2911 = vand.u32 %v2426, 4294901760
        %v2912 = vsub.f32 %v2426, %v2911
        %2913 = vmatpush1.msra.mxu0 %v2912
        %v2914 = vand.u32 %v2429, 4294901760
        %v2915 = vsub.f32 %v2429, %v2914
        %2916 = vmatprep.subr.mxu0 %v2915
        %v2917 = vand.u32 %v2428, 4294901760
        %v2918 = vsub.f32 %v2428, %v2917
        %2919 = vmatpush1.msra.mxu0 %v2918
        %2920 = vmatprep.subr.mxu0 0.0
        %2921 = vmatpush1.msra.mxu0 0.0
        %2922 = vmatprep.subr.mxu0 0.0
        %2923 = vmatpush1.msra.mxu0 0.0
        %2924 = vmatprep.subr.mxu0 0.0
        %2925 = vmatpush1.msra.mxu0 0.0
        %2926 = vmatprep.subr.mxu0 0.0
        %2927 = vmatpush1.msra.mxu0 0.0
        %2928 = vmatprep.subr.mxu0 0.0
        %2929 = vmatpush1.msra.mxu0 0.0
        %2930 = vmatprep.subr.mxu0 0.0
        %2931 = vmatpush1.msra.mxu0 0.0
        %2932 = vmatprep.subr.mxu0 0.0
        %2933 = vmatpush1.msra.mxu0 0.0
        %2934 = vmatprep.subr.mxu0 0.0
        %2935 = vmatpush1.msra.mxu0 0.0
        %2936 = vmatprep.subr.mxu0 0.0
        %2937 = vmatpush1.msra.mxu0 0.0
        %2938 = vmatprep.subr.mxu0 0.0
        %2939 = vmatpush1.msra.mxu0 0.0
        %2940 = vmatprep.subr.mxu0 0.0
        %2941 = vmatpush1.msra.mxu0 0.0
        %2942 = vmatprep.subr.mxu0 0.0
        %2943 = vmatpush1.msra.mxu0 0.0
        %2944 = vmatprep.subr.mxu0 0.0
        %2945 = vmatpush1.msra.mxu0 0.0
        %2946 = vmatprep.subr.mxu0 0.0
        %2947 = vmatpush1.msra.mxu0 0.0
        %2948 = vmatprep.subr.mxu0 0.0
        %2949 = vmatpush1.msra.mxu0 0.0
        %2950 = vmatprep.subr.mxu0 0.0
        %2951 = vmatpush1.msra.mxu0 0.0
        %2952 = vmatprep.mubr.f32.mxu0 0.0
        %v2953 = vand.u32 %v2394, 4294901760
        %v2954 = vsub.f32 %v2394, %v2953
        %2955 = vmatmul.mubr.f32.gmra.mrb[0].mxu0 %v2954
        %v2956 = vpop.f32.mrb[0].mxu0
        %v2957 = vadd.f32 %v2799, %v2956
        %v2958 = vpop.f32.mrb[0].mxu0
        %v2959 = vadd.f32 %v2801, %v2958
        %2960 = vmatprep.mubr.f32.mxu0 0.0
        %v2961 = vand.u32 %v2395, 4294901760
        %v2962 = vsub.f32 %v2395, %v2961
        %2963 = vmatmul.mubr.f32.gmra.mrb[0].mxu0 %v2962
        %v2964 = vpop.f32.mrb[0].mxu0
        %v2965 = vadd.f32 %v2806, %v2964
        %v2966 = vpop.f32.mrb[0].mxu0
        %v2967 = vadd.f32 %v2808, %v2966
        %2968 = vmatprep.mubr.f32.mxu0 0.0
        %v2969 = vand.u32 %v2396, 4294901760
        %v2970 = vsub.f32 %v2396, %v2969
        %2971 = vmatmul.mubr.f32.gmra.mrb[0].mxu0 %v2970
        %v2972 = vpop.f32.mrb[0].mxu0
        %v2973 = vadd.f32 %v2813, %v2972
        %v2974 = vpop.f32.mrb[0].mxu0
        %v2975 = vadd.f32 %v2815, %v2974
        %2976 = vmatprep.mubr.f32.mxu0 0.0
        %v2977 = vand.u32 %v2397, 4294901760
        %v2978 = vsub.f32 %v2397, %v2977
        %2979 = vmatmul.mubr.f32.gmra.mrb[0].mxu0 %v2978
        %v2980 = vpop.f32.mrb[0].mxu0
        %v2981 = vadd.f32 %v2820, %v2980
        %v2982 = vpop.f32.mrb[0].mxu0
        %v2983 = vadd.f32 %v2822, %v2982
        %2984 = vdwg.mxu0
        %v2985 = vand.u32 %v2399, 4294901760
        %2986 = vmatprep.subr.mxu0 %v2985
        %v2987 = vand.u32 %v2398, 4294901760
        %2988 = vmatpush1.msra.mxu0 %v2987
        %v2989 = vand.u32 %v2401, 4294901760
        %2990 = vmatprep.subr.mxu0 %v2989
        %v2991 = vand.u32 %v2400, 4294901760
        %2992 = vmatpush1.msra.mxu0 %v2991
        %v2993 = vand.u32 %v2403, 4294901760
        %2994 = vmatprep.subr.mxu0 %v2993
        %v2995 = vand.u32 %v2402, 4294901760
        %2996 = vmatpush1.msra.mxu0 %v2995
        %v2997 = vand.u32 %v2405, 4294901760
        %2998 = vmatprep.subr.mxu0 %v2997
        %v2999 = vand.u32 %v2404, 4294901760
        %3000 = vmatpush1.msra.mxu0 %v2999
        %v3001 = vand.u32 %v2407, 4294901760
        %3002 = vmatprep.subr.mxu0 %v3001
        %v3003 = vand.u32 %v2406, 4294901760
        %3004 = vmatpush1.msra.mxu0 %v3003
        %v3005 = vand.u32 %v2409, 4294901760
        %3006 = vmatprep.subr.mxu0 %v3005
        %v3007 = vand.u32 %v2408, 4294901760
        %3008 = vmatpush1.msra.mxu0 %v3007
        %v3009 = vand.u32 %v2411, 4294901760
        %3010 = vmatprep.subr.mxu0 %v3009
        %v3011 = vand.u32 %v2410, 4294901760
        %3012 = vmatpush1.msra.mxu0 %v3011
        %v3013 = vand.u32 %v2413, 4294901760
        %3014 = vmatprep.subr.mxu0 %v3013
        %v3015 = vand.u32 %v2412, 4294901760
        %3016 = vmatpush1.msra.mxu0 %v3015
        %v3017 = vand.u32 %v2415, 4294901760
        %3018 = vmatprep.subr.mxu0 %v3017
        %v3019 = vand.u32 %v2414, 4294901760
        %3020 = vmatpush1.msra.mxu0 %v3019
        %v3021 = vand.u32 %v2417, 4294901760
        %3022 = vmatprep.subr.mxu0 %v3021
        %v3023 = vand.u32 %v2416, 4294901760
        %3024 = vmatpush1.msra.mxu0 %v3023
        %v3025 = vand.u32 %v2419, 4294901760
        %3026 = vmatprep.subr.mxu0 %v3025
        %v3027 = vand.u32 %v2418, 4294901760
        %3028 = vmatpush1.msra.mxu0 %v3027
        %v3029 = vand.u32 %v2421, 4294901760
        %3030 = vmatprep.subr.mxu0 %v3029
        %v3031 = vand.u32 %v2420, 4294901760
        %3032 = vmatpush1.msra.mxu0 %v3031
        %v3033 = vand.u32 %v2423, 4294901760
        %3034 = vmatprep.subr.mxu0 %v3033
        %v3035 = vand.u32 %v2422, 4294901760
        %3036 = vmatpush1.msra.mxu0 %v3035
        %v3037 = vand.u32 %v2425, 4294901760
        %3038 = vmatprep.subr.mxu0 %v3037
        %v3039 = vand.u32 %v2424, 4294901760
        %3040 = vmatpush1.msra.mxu0 %v3039
        %v3041 = vand.u32 %v2427, 4294901760
        %3042 = vmatprep.subr.mxu0 %v3041
        %v3043 = vand.u32 %v2426, 4294901760
        %3044 = vmatpush1.msra.mxu0 %v3043
        %v3045 = vand.u32 %v2429, 4294901760
        %3046 = vmatprep.subr.mxu0 %v3045
        %v3047 = vand.u32 %v2428, 4294901760
        %3048 = vmatpush1.msra.mxu0 %v3047
        %3049 = vmatprep.subr.mxu0 0.0
        %3050 = vmatpush1.msra.mxu0 0.0
        %3051 = vmatprep.subr.mxu0 0.0
        %3052 = vmatpush1.msra.mxu0 0.0
        %3053 = vmatprep.subr.mxu0 0.0
        %3054 = vmatpush1.msra.mxu0 0.0
        %3055 = vmatprep.subr.mxu0 0.0
        %3056 = vmatpush1.msra.mxu0 0.0
        %3057 = vmatprep.subr.mxu0 0.0
        %3058 = vmatpush1.msra.mxu0 0.0
        %3059 = vmatprep.subr.mxu0 0.0
        %3060 = vmatpush1.msra.mxu0 0.0
        %3061 = vmatprep.subr.mxu0 0.0
        %3062 = vmatpush1.msra.mxu0 0.0
        %3063 = vmatprep.subr.mxu0 0.0
        %3064 = vmatpush1.msra.mxu0 0.0
        %3065 = vmatprep.subr.mxu0 0.0
        %3066 = vmatpush1.msra.mxu0 0.0
        %3067 = vmatprep.subr.mxu0 0.0
        %3068 = vmatpush1.msra.mxu0 0.0
        %3069 = vmatprep.subr.mxu0 0.0
        %3070 = vmatpush1.msra.mxu0 0.0
        %3071 = vmatprep.subr.mxu0 0.0
        %3072 = vmatpush1.msra.mxu0 0.0
        %3073 = vmatprep.subr.mxu0 0.0
        %3074 = vmatpush1.msra.mxu0 0.0
        %3075 = vmatprep.subr.mxu0 0.0
        %3076 = vmatpush1.msra.mxu0 0.0
        %3077 = vmatprep.subr.mxu0 0.0
        %3078 = vmatpush1.msra.mxu0 0.0
        %3079 = vmatprep.subr.mxu0 0.0
        %3080 = vmatpush1.msra.mxu0 0.0
        %3081 = vmatprep.mubr.f32.mxu0 0.0
        %v3082 = vand.u32 %v2394, 4294901760
        %v3083 = vsub.f32 %v2394, %v3082
        %v3084 = vand.u32 %v3083, 4294901760
        %3085 = vmatmul.mubr.f32.gmra.mrb[0].mxu0 %v3084
        %v3086 = vpop.f32.mrb[0].mxu0
        %v3087 = vadd.f32 %v2957, %v3086
        %v3088 = vpop.f32.mrb[0].mxu0
        %v3089 = vadd.f32 %v2959, %v3088
        %3090 = vmatprep.mubr.f32.mxu0 0.0
        %v3091 = vand.u32 %v2395, 4294901760
        %v3092 = vsub.f32 %v2395, %v3091
        %v3093 = vand.u32 %v3092, 4294901760
        %3094 = vmatmul.mubr.f32.gmra.mrb[0].mxu0 %v3093
        %v3095 = vpop.f32.mrb[0].mxu0
        %v3096 = vadd.f32 %v2965, %v3095
        %v3097 = vpop.f32.mrb[0].mxu0
        %v3098 = vadd.f32 %v2967, %v3097
        %3099 = vmatprep.mubr.f32.mxu0 0.0
        %v3100 = vand.u32 %v2396, 4294901760
        %v3101 = vsub.f32 %v2396, %v3100
        %v3102 = vand.u32 %v3101, 4294901760
        %3103 = vmatmul.mubr.f32.gmra.mrb[0].mxu0 %v3102
        %v3104 = vpop.f32.mrb[0].mxu0
        %v3105 = vadd.f32 %v2973, %v3104
        %v3106 = vpop.f32.mrb[0].mxu0
        %v3107 = vadd.f32 %v2975, %v3106
        %3108 = vmatprep.mubr.f32.mxu0 0.0
        %v3109 = vand.u32 %v2397, 4294901760
        %v3110 = vsub.f32 %v2397, %v3109
        %v3111 = vand.u32 %v3110, 4294901760
        %3112 = vmatmul.mubr.f32.gmra.mrb[0].mxu0 %v3111
        %v3113 = vpop.f32.mrb[0].mxu0
        %v3114 = vadd.f32 %v2981, %v3113
        %v3115 = vpop.f32.mrb[0].mxu0
        %v3116 = vadd.f32 %v2983, %v3115
        %3117 = vdwg.mxu0
        %v3118 = vand.u32 %v2399, 4294901760
        %v3119 = vsub.f32 %v2399, %v3118
        %v3120 = vand.u32 %v3119, 4294901760
        %3121 = vmatprep.subr.mxu0 %v3120
        %v3122 = vand.u32 %v2398, 4294901760
        %v3123 = vsub.f32 %v2398, %v3122
        %v3124 = vand.u32 %v3123, 4294901760
        %3125 = vmatpush1.msra.mxu0 %v3124
        %v3126 = vand.u32 %v2401, 4294901760
        %v3127 = vsub.f32 %v2401, %v3126
        %v3128 = vand.u32 %v3127, 4294901760
        %3129 = vmatprep.subr.mxu0 %v3128
        %v3130 = vand.u32 %v2400, 4294901760
        %v3131 = vsub.f32 %v2400, %v3130
        %v3132 = vand.u32 %v3131, 4294901760
        %3133 = vmatpush1.msra.mxu0 %v3132
        %v3134 = vand.u32 %v2403, 4294901760
        %v3135 = vsub.f32 %v2403, %v3134
        %v3136 = vand.u32 %v3135, 4294901760
        %3137 = vmatprep.subr.mxu0 %v3136
        %v3138 = vand.u32 %v2402, 4294901760
        %v3139 = vsub.f32 %v2402, %v3138
        %v3140 = vand.u32 %v3139, 4294901760
        %3141 = vmatpush1.msra.mxu0 %v3140
        %v3142 = vand.u32 %v2405, 4294901760
        %v3143 = vsub.f32 %v2405, %v3142
        %v3144 = vand.u32 %v3143, 4294901760
        %3145 = vmatprep.subr.mxu0 %v3144
        %v3146 = vand.u32 %v2404, 4294901760
        %v3147 = vsub.f32 %v2404, %v3146
        %v3148 = vand.u32 %v3147, 4294901760
        %3149 = vmatpush1.msra.mxu0 %v3148
        %v3150 = vand.u32 %v2407, 4294901760
        %v3151 = vsub.f32 %v2407, %v3150
        %v3152 = vand.u32 %v3151, 4294901760
        %3153 = vmatprep.subr.mxu0 %v3152
        %v3154 = vand.u32 %v2406, 4294901760
        %v3155 = vsub.f32 %v2406, %v3154
        %v3156 = vand.u32 %v3155, 4294901760
        %3157 = vmatpush1.msra.mxu0 %v3156
        %v3158 = vand.u32 %v2409, 4294901760
        %v3159 = vsub.f32 %v2409, %v3158
        %v3160 = vand.u32 %v3159, 4294901760
        %3161 = vmatprep.subr.mxu0 %v3160
        %v3162 = vand.u32 %v2408, 4294901760
        %v3163 = vsub.f32 %v2408, %v3162
        %v3164 = vand.u32 %v3163, 4294901760
        %3165 = vmatpush1.msra.mxu0 %v3164
        %v3166 = vand.u32 %v2411, 4294901760
        %v3167 = vsub.f32 %v2411, %v3166
        %v3168 = vand.u32 %v3167, 4294901760
        %3169 = vmatprep.subr.mxu0 %v3168
        %v3170 = vand.u32 %v2410, 4294901760
        %v3171 = vsub.f32 %v2410, %v3170
        %v3172 = vand.u32 %v3171, 4294901760
        %3173 = vmatpush1.msra.mxu0 %v3172
        %v3174 = vand.u32 %v2413, 4294901760
        %v3175 = vsub.f32 %v2413, %v3174
        %v3176 = vand.u32 %v3175, 4294901760
        %3177 = vmatprep.subr.mxu0 %v3176
        %v3178 = vand.u32 %v2412, 4294901760
        %v3179 = vsub.f32 %v2412, %v3178
        %v3180 = vand.u32 %v3179, 4294901760
        %3181 = vmatpush1.msra.mxu0 %v3180
        %v3182 = vand.u32 %v2415, 4294901760
        %v3183 = vsub.f32 %v2415, %v3182
        %v3184 = vand.u32 %v3183, 4294901760
        %3185 = vmatprep.subr.mxu0 %v3184
        %v3186 = vand.u32 %v2414, 4294901760
        %v3187 = vsub.f32 %v2414, %v3186
        %v3188 = vand.u32 %v3187, 4294901760
        %3189 = vmatpush1.msra.mxu0 %v3188
        %v3190 = vand.u32 %v2417, 4294901760
        %v3191 = vsub.f32 %v2417, %v3190
        %v3192 = vand.u32 %v3191, 4294901760
        %3193 = vmatprep.subr.mxu0 %v3192
        %v3194 = vand.u32 %v2416, 4294901760
        %v3195 = vsub.f32 %v2416, %v3194
        %v3196 = vand.u32 %v3195, 4294901760
        %3197 = vmatpush1.msra.mxu0 %v3196
        %v3198 = vand.u32 %v2419, 4294901760
        %v3199 = vsub.f32 %v2419, %v3198
        %v3200 = vand.u32 %v3199, 4294901760
        %3201 = vmatprep.subr.mxu0 %v3200
        %v3202 = vand.u32 %v2418, 4294901760
        %v3203 = vsub.f32 %v2418, %v3202
        %v3204 = vand.u32 %v3203, 4294901760
        %3205 = vmatpush1.msra.mxu0 %v3204
        %v3206 = vand.u32 %v2421, 4294901760
        %v3207 = vsub.f32 %v2421, %v3206
        %v3208 = vand.u32 %v3207, 4294901760
        %3209 = vmatprep.subr.mxu0 %v3208
        %v3210 = vand.u32 %v2420, 4294901760
        %v3211 = vsub.f32 %v2420, %v3210
        %v3212 = vand.u32 %v3211, 4294901760
        %3213 = vmatpush1.msra.mxu0 %v3212
        %v3214 = vand.u32 %v2423, 4294901760
        %v3215 = vsub.f32 %v2423, %v3214
        %v3216 = vand.u32 %v3215, 4294901760
        %3217 = vmatprep.subr.mxu0 %v3216
        %v3218 = vand.u32 %v2422, 4294901760
        %v3219 = vsub.f32 %v2422, %v3218
        %v3220 = vand.u32 %v3219, 4294901760
        %3221 = vmatpush1.msra.mxu0 %v3220
        %v3222 = vand.u32 %v2425, 4294901760
        %v3223 = vsub.f32 %v2425, %v3222
        %v3224 = vand.u32 %v3223, 4294901760
        %3225 = vmatprep.subr.mxu0 %v3224
        %v3226 = vand.u32 %v2424, 4294901760
        %v3227 = vsub.f32 %v2424, %v3226
        %v3228 = vand.u32 %v3227, 4294901760
        %3229 = vmatpush1.msra.mxu0 %v3228
        %v3230 = vand.u32 %v2427, 4294901760
        %v3231 = vsub.f32 %v2427, %v3230
        %v3232 = vand.u32 %v3231, 4294901760
        %3233 = vmatprep.subr.mxu0 %v3232
        %v3234 = vand.u32 %v2426, 4294901760
        %v3235 = vsub.f32 %v2426, %v3234
        %v3236 = vand.u32 %v3235, 4294901760
        %3237 = vmatpush1.msra.mxu0 %v3236
        %v3238 = vand.u32 %v2429, 4294901760
        %v3239 = vsub.f32 %v2429, %v3238
        %v3240 = vand.u32 %v3239, 4294901760
        %3241 = vmatprep.subr.mxu0 %v3240
        %v3242 = vand.u32 %v2428, 4294901760
        %v3243 = vsub.f32 %v2428, %v3242
        %v3244 = vand.u32 %v3243, 4294901760
        %3245 = vmatpush1.msra.mxu0 %v3244
        %3246 = vmatprep.subr.mxu0 0.0
        %3247 = vmatpush1.msra.mxu0 0.0
        %3248 = vmatprep.subr.mxu0 0.0
        %3249 = vmatpush1.msra.mxu0 0.0
        %3250 = vmatprep.subr.mxu0 0.0
        %3251 = vmatpush1.msra.mxu0 0.0
        %3252 = vmatprep.subr.mxu0 0.0
        %3253 = vmatpush1.msra.mxu0 0.0
        %3254 = vmatprep.subr.mxu0 0.0
        %3255 = vmatpush1.msra.mxu0 0.0
        %3256 = vmatprep.subr.mxu0 0.0
        %3257 = vmatpush1.msra.mxu0 0.0
        %3258 = vmatprep.subr.mxu0 0.0
        %3259 = vmatpush1.msra.mxu0 0.0
        %3260 = vmatprep.subr.mxu0 0.0
        %3261 = vmatpush1.msra.mxu0 0.0
        %3262 = vmatprep.subr.mxu0 0.0
        %3263 = vmatpush1.msra.mxu0 0.0
        %3264 = vmatprep.subr.mxu0 0.0
        %3265 = vmatpush1.msra.mxu0 0.0
        %3266 = vmatprep.subr.mxu0 0.0
        %3267 = vmatpush1.msra.mxu0 0.0
        %3268 = vmatprep.subr.mxu0 0.0
        %3269 = vmatpush1.msra.mxu0 0.0
        %3270 = vmatprep.subr.mxu0 0.0
        %3271 = vmatpush1.msra.mxu0 0.0
        %3272 = vmatprep.subr.mxu0 0.0
        %3273 = vmatpush1.msra.mxu0 0.0
        %3274 = vmatprep.subr.mxu0 0.0
        %3275 = vmatpush1.msra.mxu0 0.0
        %3276 = vmatprep.subr.mxu0 0.0
        %3277 = vmatpush1.msra.mxu0 0.0
        %3278 = vmatprep.mubr.f32.mxu0 0.0
        %v3279 = vand.u32 %v2394, 4294901760
        %3280 = vmatmul.mubr.f32.gmra.mrb[0].mxu0 %v3279
        %v3281 = vpop.f32.mrb[0].mxu0
        %v3282 = vadd.f32 %v3087, %v3281
        %v3283 = vpop.f32.mrb[0].mxu0
        %v3284 = vadd.f32 %v3089, %v3283
        %3285 = vmatprep.mubr.f32.mxu0 0.0
        %v3286 = vand.u32 %v2395, 4294901760
        %3287 = vmatmul.mubr.f32.gmra.mrb[0].mxu0 %v3286
        %v3288 = vpop.f32.mrb[0].mxu0
        %v3289 = vadd.f32 %v3096, %v3288
        %v3290 = vpop.f32.mrb[0].mxu0
        %v3291 = vadd.f32 %v3098, %v3290
        %3292 = vmatprep.mubr.f32.mxu0 0.0
        %v3293 = vand.u32 %v2396, 4294901760
        %3294 = vmatmul.mubr.f32.gmra.mrb[0].mxu0 %v3293
        %v3295 = vpop.f32.mrb[0].mxu0
        %v3296 = vadd.f32 %v3105, %v3295
        %v3297 = vpop.f32.mrb[0].mxu0
        %v3298 = vadd.f32 %v3107, %v3297
        %3299 = vmatprep.mubr.f32.mxu0 0.0
        %v3300 = vand.u32 %v2397, 4294901760
        %3301 = vmatmul.mubr.f32.gmra.mrb[0].mxu0 %v3300
        %v3302 = vpop.f32.mrb[0].mxu0
        %v3303 = vadd.f32 %v3114, %v3302
        %v3304 = vpop.f32.mrb[0].mxu0
        %v3305 = vadd.f32 %v3116, %v3304
        %3306 = vdwg.mxu0
        %v3307 = vand.u32 %v2399, 4294901760
        %3308 = vmatprep.subr.mxu0 %v3307
        %v3309 = vand.u32 %v2398, 4294901760
        %3310 = vmatpush1.msra.mxu0 %v3309
        %v3311 = vand.u32 %v2401, 4294901760
        %3312 = vmatprep.subr.mxu0 %v3311
        %v3313 = vand.u32 %v2400, 4294901760
        %3314 = vmatpush1.msra.mxu0 %v3313
        %v3315 = vand.u32 %v2403, 4294901760
        %3316 = vmatprep.subr.mxu0 %v3315
        %v3317 = vand.u32 %v2402, 4294901760
        %3318 = vmatpush1.msra.mxu0 %v3317
        %v3319 = vand.u32 %v2405, 4294901760
        %3320 = vmatprep.subr.mxu0 %v3319
        %v3321 = vand.u32 %v2404, 4294901760
        %3322 = vmatpush1.msra.mxu0 %v3321
        %v3323 = vand.u32 %v2407, 4294901760
        %3324 = vmatprep.subr.mxu0 %v3323
        %v3325 = vand.u32 %v2406, 4294901760
        %3326 = vmatpush1.msra.mxu0 %v3325
        %v3327 = vand.u32 %v2409, 4294901760
        %3328 = vmatprep.subr.mxu0 %v3327
        %v3329 = vand.u32 %v2408, 4294901760
        %3330 = vmatpush1.msra.mxu0 %v3329
        %v3331 = vand.u32 %v2411, 4294901760
        %3332 = vmatprep.subr.mxu0 %v3331
        %v3333 = vand.u32 %v2410, 4294901760
        %3334 = vmatpush1.msra.mxu0 %v3333
        %v3335 = vand.u32 %v2413, 4294901760
        %3336 = vmatprep.subr.mxu0 %v3335
        %v3337 = vand.u32 %v2412, 4294901760
        %3338 = vmatpush1.msra.mxu0 %v3337
        %v3339 = vand.u32 %v2415, 4294901760
        %3340 = vmatprep.subr.mxu0 %v3339
        %v3341 = vand.u32 %v2414, 4294901760
        %3342 = vmatpush1.msra.mxu0 %v3341
        %v3343 = vand.u32 %v2417, 4294901760
        %3344 = vmatprep.subr.mxu0 %v3343
        %v3345 = vand.u32 %v2416, 4294901760
        %3346 = vmatpush1.msra.mxu0 %v3345
        %v3347 = vand.u32 %v2419, 4294901760
        %3348 = vmatprep.subr.mxu0 %v3347
        %v3349 = vand.u32 %v2418, 4294901760
        %3350 = vmatpush1.msra.mxu0 %v3349
        %v3351 = vand.u32 %v2421, 4294901760
        %3352 = vmatprep.subr.mxu0 %v3351
        %v3353 = vand.u32 %v2420, 4294901760
        %3354 = vmatpush1.msra.mxu0 %v3353
        %v3355 = vand.u32 %v2423, 4294901760
        %3356 = vmatprep.subr.mxu0 %v3355
        %v3357 = vand.u32 %v2422, 4294901760
        %3358 = vmatpush1.msra.mxu0 %v3357
        %v3359 = vand.u32 %v2425, 4294901760
        %3360 = vmatprep.subr.mxu0 %v3359
        %v3361 = vand.u32 %v2424, 4294901760
        %3362 = vmatpush1.msra.mxu0 %v3361
        %v3363 = vand.u32 %v2427, 4294901760
        %3364 = vmatprep.subr.mxu0 %v3363
        %v3365 = vand.u32 %v2426, 4294901760
        %3366 = vmatpush1.msra.mxu0 %v3365
        %v3367 = vand.u32 %v2429, 4294901760
        %3368 = vmatprep.subr.mxu0 %v3367
        %v3369 = vand.u32 %v2428, 4294901760
        %3370 = vmatpush1.msra.mxu0 %v3369
        %3371 = vmatprep.subr.mxu0 0.0
        %3372 = vmatpush1.msra.mxu0 0.0
        %3373 = vmatprep.subr.mxu0 0.0
        %3374 = vmatpush1.msra.mxu0 0.0
        %3375 = vmatprep.subr.mxu0 0.0
        %3376 = vmatpush1.msra.mxu0 0.0
        %3377 = vmatprep.subr.mxu0 0.0
        %3378 = vmatpush1.msra.mxu0 0.0
        %3379 = vmatprep.subr.mxu0 0.0
        %3380 = vmatpush1.msra.mxu0 0.0
        %3381 = vmatprep.subr.mxu0 0.0
        %3382 = vmatpush1.msra.mxu0 0.0
        %3383 = vmatprep.subr.mxu0 0.0
        %3384 = vmatpush1.msra.mxu0 0.0
        %3385 = vmatprep.subr.mxu0 0.0
        %3386 = vmatpush1.msra.mxu0 0.0
        %3387 = vmatprep.subr.mxu0 0.0
        %3388 = vmatpush1.msra.mxu0 0.0
        %3389 = vmatprep.subr.mxu0 0.0
        %3390 = vmatpush1.msra.mxu0 0.0
        %3391 = vmatprep.subr.mxu0 0.0
        %3392 = vmatpush1.msra.mxu0 0.0
        %3393 = vmatprep.subr.mxu0 0.0
        %3394 = vmatpush1.msra.mxu0 0.0
        %3395 = vmatprep.subr.mxu0 0.0
        %3396 = vmatpush1.msra.mxu0 0.0
        %3397 = vmatprep.subr.mxu0 0.0
        %3398 = vmatpush1.msra.mxu0 0.0
        %3399 = vmatprep.subr.mxu0 0.0
        %3400 = vmatpush1.msra.mxu0 0.0
        %3401 = vmatprep.subr.mxu0 0.0
        %3402 = vmatpush1.msra.mxu0 0.0
        %3403 = vmatprep.mubr.f32.mxu0 0.0
        %v3404 = vand.u32 %v2394, 4294901760
        %3405 = vmatmul.mubr.f32.gmra.mrb[0].mxu0 %v3404
        %v3406 = vpop.f32.mrb[0].mxu0
        %v3407 = vadd.f32 %v3282, %v3406
        %v3408 = vpop.f32.mrb[0].mxu0
        %v3409 = vadd.f32 %v3284, %v3408
        %3410 = vmatprep.mubr.f32.mxu0 0.0
        %v3411 = vand.u32 %v2395, 4294901760
        %3412 = vmatmul.mubr.f32.gmra.mrb[0].mxu0 %v3411
        %v3413 = vpop.f32.mrb[0].mxu0
        %v3414 = vadd.f32 %v3289, %v3413
        %v3415 = vpop.f32.mrb[0].mxu0
        %v3416 = vadd.f32 %v3291, %v3415
        %3417 = vmatprep.mubr.f32.mxu0 0.0
        %v3418 = vand.u32 %v2396, 4294901760
        %3419 = vmatmul.mubr.f32.gmra.mrb[0].mxu0 %v3418
        %v3420 = vpop.f32.mrb[0].mxu0
        %v3421 = vadd.f32 %v3296, %v3420
        %v3422 = vpop.f32.mrb[0].mxu0
        %v3423 = vadd.f32 %v3298, %v3422
        %3424 = vmatprep.mubr.f32.mxu0 0.0
        %v3425 = vand.u32 %v2397, 4294901760
        %3426 = vmatmul.mubr.f32.gmra.mrb[0].mxu0 %v3425
        %v3427 = vpop.f32.mrb[0].mxu0
        %v3428 = vadd.f32 %v3303, %v3427
        %v3429 = vpop.f32.mrb[0].mxu0
        %v3430 = vadd.f32 %v3305, %v3429
        %3431 = vdwg.mxu0
        %v3432 = vmax.f32 %v3407, 0.0
        %v3433 = vmax.f32 %v3409, 0.0
        %v3434 = vmax.f32 %v3414, 0.0
        %v3435 = vmax.f32 %v3416, 0.0
        %v3436 = vmax.f32 %v3421, 0.0
        %v3437 = vmax.f32 %v3423, 0.0
        %v3438 = vmax.f32 %v3428, 0.0
        %v3439 = vmax.f32 %v3430, 0.0
        %3440 = vst [vmem:[#allocation2] sm:$0xff] %v3432
        %3441 = vst [vmem:[#allocation2 + $0x8] sm:$0xff] %v3433
        %3442 = vst [vmem:[#allocation2 + $0x10] sm:$0xff] %v3434
        %3443 = vst [vmem:[#allocation2 + $0x18] sm:$0xff] %v3435
        %3444 = vst [vmem:[#allocation2 + $0x20] sm:$0xff] %v3436
        %3445 = vst [vmem:[#allocation2 + $0x28] sm:$0xff] %v3437
        %3446 = vst [vmem:[#allocation2 + $0x30] sm:$0xff] %v3438
        %3447 = vst [vmem:[#allocation2 + $0x38] sm:$0xff] %v3439
        %v3448 = vld [vmem:[#allocation8 + $0x60] sm:$0xff]
        %v3449 = vld [vmem:[#allocation8 + $0x68] sm:$0xff]
        %v3450 = vld [vmem:[#allocation2] sm:$0xff]
        %v3451 = vld [vmem:[#allocation2 + $0x8] sm:$0xff]
        %v3452 = vld [vmem:[#allocation2 + $0x10] sm:$0xff]
        %v3453 = vld [vmem:[#allocation2 + $0x18] sm:$0xff]
        %v3454 = vld [vmem:[#allocation2 + $0x20] sm:$0xff]
        %v3455 = vld [vmem:[#allocation2 + $0x28] sm:$0xff]
        %v3456 = vld [vmem:[#allocation2 + $0x30] sm:$0xff]
        %v3457 = vld [vmem:[#allocation2 + $0x38] sm:$0xff]
        %v3458 = vld [vmem:[#allocation2 + $0x40] sm:$0xff]
        %v3459 = vld [vmem:[#allocation2 + $0x48] sm:$0xff]
        %v3460 = vld [vmem:[#allocation2 + $0x50] sm:$0xff]
        %v3461 = vld [vmem:[#allocation2 + $0x58] sm:$0xff]
        %v3462 = vld [vmem:[#allocation2 + $0x60] sm:$0xff]
        %v3463 = vld [vmem:[#allocation2 + $0x68] sm:$0xff]
        %v3464 = vld [vmem:[#allocation2 + $0x70] sm:$0xff]
        %v3465 = vld [vmem:[#allocation2 + $0x78] sm:$0xff]
        %v3466 = vld [vmem:[#allocation2 + $0x80] sm:$0xff]
        %v3467 = vld [vmem:[#allocation2 + $0x88] sm:$0xff]
        %v3468 = vld [vmem:[#allocation2 + $0x90] sm:$0xff]
        %v3469 = vld [vmem:[#allocation2 + $0x98] sm:$0xff]
        %v3470 = vld [vmem:[#allocation2 + $0xa0] sm:$0xff]
        %v3471 = vld [vmem:[#allocation2 + $0xa8] sm:$0xff]
        %v3472 = vld [vmem:[#allocation2 + $0xb0] sm:$0xff]
        %v3473 = vld [vmem:[#allocation2 + $0xb8] sm:$0xff]
        %v3474 = vld [vmem:[#allocation2 + $0xc0] sm:$0xff]
        %v3475 = vld [vmem:[#allocation2 + $0xc8] sm:$0xff]
        %v3476 = vld [vmem:[#allocation2 + $0xd0] sm:$0xff]
        %v3477 = vld [vmem:[#allocation2 + $0xd8] sm:$0xff]
        %v3478 = vld [vmem:[#allocation2 + $0xe0] sm:$0xff]
        %v3479 = vld [vmem:[#allocation2 + $0xe8] sm:$0xff]
        %v3480 = vld [vmem:[#allocation2 + $0xf0] sm:$0xff]
        %v3481 = vld [vmem:[#allocation2 + $0xf8] sm:$0xff]
        %v3482 = vand.u32 %v3451, 4294901760
        %3483 = vmatprep.subr.mxu0 %v3482
        %v3484 = vand.u32 %v3450, 4294901760
        %3485 = vmatpush1.msra.mxu0 %v3484
        %v3486 = vand.u32 %v3453, 4294901760
        %3487 = vmatprep.subr.mxu0 %v3486
        %v3488 = vand.u32 %v3452, 4294901760
        %3489 = vmatpush1.msra.mxu0 %v3488
        %v3490 = vand.u32 %v3455, 4294901760
        %3491 = vmatprep.subr.mxu0 %v3490
        %v3492 = vand.u32 %v3454, 4294901760
        %3493 = vmatpush1.msra.mxu0 %v3492
        %v3494 = vand.u32 %v3457, 4294901760
        %3495 = vmatprep.subr.mxu0 %v3494
        %v3496 = vand.u32 %v3456, 4294901760
        %3497 = vmatpush1.msra.mxu0 %v3496
        %v3498 = vand.u32 %v3459, 4294901760
        %3499 = vmatprep.subr.mxu0 %v3498
        %v3500 = vand.u32 %v3458, 4294901760
        %3501 = vmatpush1.msra.mxu0 %v3500
        %v3502 = vand.u32 %v3461, 4294901760
        %3503 = vmatprep.subr.mxu0 %v3502
        %v3504 = vand.u32 %v3460, 4294901760
        %3505 = vmatpush1.msra.mxu0 %v3504
        %v3506 = vand.u32 %v3463, 4294901760
        %3507 = vmatprep.subr.mxu0 %v3506
        %v3508 = vand.u32 %v3462, 4294901760
        %3509 = vmatpush1.msra.mxu0 %v3508
        %v3510 = vand.u32 %v3465, 4294901760
        %3511 = vmatprep.subr.mxu0 %v3510
        %v3512 = vand.u32 %v3464, 4294901760
        %3513 = vmatpush1.msra.mxu0 %v3512
        %v3514 = vand.u32 %v3467, 4294901760
        %3515 = vmatprep.subr.mxu0 %v3514
        %v3516 = vand.u32 %v3466, 4294901760
        %3517 = vmatpush1.msra.mxu0 %v3516
        %v3518 = vand.u32 %v3469, 4294901760
        %3519 = vmatprep.subr.mxu0 %v3518
        %v3520 = vand.u32 %v3468, 4294901760
        %3521 = vmatpush1.msra.mxu0 %v3520
        %v3522 = vand.u32 %v3471, 4294901760
        %3523 = vmatprep.subr.mxu0 %v3522
        %v3524 = vand.u32 %v3470, 4294901760
        %3525 = vmatpush1.msra.mxu0 %v3524
        %v3526 = vand.u32 %v3473, 4294901760
        %3527 = vmatprep.subr.mxu0 %v3526
        %v3528 = vand.u32 %v3472, 4294901760
        %3529 = vmatpush1.msra.mxu0 %v3528
        %v3530 = vand.u32 %v3475, 4294901760
        %3531 = vmatprep.subr.mxu0 %v3530
        %v3532 = vand.u32 %v3474, 4294901760
        %3533 = vmatpush1.msra.mxu0 %v3532
        %v3534 = vand.u32 %v3477, 4294901760
        %3535 = vmatprep.subr.mxu0 %v3534
        %v3536 = vand.u32 %v3476, 4294901760
        %3537 = vmatpush1.msra.mxu0 %v3536
        %v3538 = vand.u32 %v3479, 4294901760
        %3539 = vmatprep.subr.mxu0 %v3538
        %v3540 = vand.u32 %v3478, 4294901760
        %3541 = vmatpush1.msra.mxu0 %v3540
        %v3542 = vand.u32 %v3481, 4294901760
        %3543 = vmatprep.subr.mxu0 %v3542
        %v3544 = vand.u32 %v3480, 4294901760
        %3545 = vmatpush1.msra.mxu0 %v3544
        %3546 = vmatprep.subr.mxu0 0.0
        %3547 = vmatpush1.msra.mxu0 0.0
        %3548 = vmatprep.subr.mxu0 0.0
        %3549 = vmatpush1.msra.mxu0 0.0
        %3550 = vmatprep.subr.mxu0 0.0
        %3551 = vmatpush1.msra.mxu0 0.0
        %3552 = vmatprep.subr.mxu0 0.0
        %3553 = vmatpush1.msra.mxu0 0.0
        %3554 = vmatprep.subr.mxu0 0.0
        %3555 = vmatpush1.msra.mxu0 0.0
        %3556 = vmatprep.subr.mxu0 0.0
        %3557 = vmatpush1.msra.mxu0 0.0
        %3558 = vmatprep.subr.mxu0 0.0
        %3559 = vmatpush1.msra.mxu0 0.0
        %3560 = vmatprep.subr.mxu0 0.0
        %3561 = vmatpush1.msra.mxu0 0.0
        %3562 = vmatprep.subr.mxu0 0.0
        %3563 = vmatpush1.msra.mxu0 0.0
        %3564 = vmatprep.subr.mxu0 0.0
        %3565 = vmatpush1.msra.mxu0 0.0
        %3566 = vmatprep.subr.mxu0 0.0
        %3567 = vmatpush1.msra.mxu0 0.0
        %3568 = vmatprep.subr.mxu0 0.0
        %3569 = vmatpush1.msra.mxu0 0.0
        %3570 = vmatprep.subr.mxu0 0.0
        %3571 = vmatpush1.msra.mxu0 0.0
        %3572 = vmatprep.subr.mxu0 0.0
        %3573 = vmatpush1.msra.mxu0 0.0
        %3574 = vmatprep.subr.mxu0 0.0
        %3575 = vmatpush1.msra.mxu0 0.0
        %3576 = vmatprep.subr.mxu0 0.0
        %3577 = vmatpush1.msra.mxu0 0.0
        %3578 = vmatprep.mubr.f32.mxu0 0.0
        %v3579 = vand.u32 %v3448, 4294901760
        %v3580 = vsub.f32 %v3448, %v3579
        %v3581 = vand.u32 %v3580, 4294901760
        %v3582 = vsub.f32 %v3580, %v3581
        %v3583 = vand.u32 %v3582, 4294901760
        %3584 = vmatmul.mubr.f32.gmra.mrb[0].mxu0 %v3583
        %v3585 = vpop.f32.mrb[0].mxu0
        %v3586 = vadd.f32 0.0, %v3585
        %v3587 = vpop.f32.mrb[0].mxu0
        %v3588 = vadd.f32 0.0, %v3587
        %3589 = vmatprep.mubr.f32.mxu0 0.0
        %v3590 = vand.u32 %v3449, 4294901760
        %v3591 = vsub.f32 %v3449, %v3590
        %v3592 = vand.u32 %v3591, 4294901760
        %v3593 = vsub.f32 %v3591, %v3592
        %v3594 = vand.u32 %v3593, 4294901760
        %3595 = vmatmul.mubr.f32.gmra.mrb[0].mxu0 %v3594
        %v3596 = vpop.f32.mrb[0].mxu0
        %v3597 = vadd.f32 0.0, %v3596
        %v3598 = vpop.f32.mrb[0].mxu0
        %v3599 = vadd.f32 0.0, %v3598
        %3600 = vdwg.mxu0
        %v3601 = vand.u32 %v3451, 4294901760
        %v3602 = vsub.f32 %v3451, %v3601
        %v3603 = vand.u32 %v3602, 4294901760
        %v3604 = vsub.f32 %v3602, %v3603
        %v3605 = vand.u32 %v3604, 4294901760
        %3606 = vmatprep.subr.mxu0 %v3605
        %v3607 = vand.u32 %v3450, 4294901760
        %v3608 = vsub.f32 %v3450, %v3607
        %v3609 = vand.u32 %v3608, 4294901760
        %v3610 = vsub.f32 %v3608, %v3609
        %v3611 = vand.u32 %v3610, 4294901760
        %3612 = vmatpush1.msra.mxu0 %v3611
        %v3613 = vand.u32 %v3453, 4294901760
        %v3614 = vsub.f32 %v3453, %v3613
        %v3615 = vand.u32 %v3614, 4294901760
        %v3616 = vsub.f32 %v3614, %v3615
        %v3617 = vand.u32 %v3616, 4294901760
        %3618 = vmatprep.subr.mxu0 %v3617
        %v3619 = vand.u32 %v3452, 4294901760
        %v3620 = vsub.f32 %v3452, %v3619
        %v3621 = vand.u32 %v3620, 4294901760
        %v3622 = vsub.f32 %v3620, %v3621
        %v3623 = vand.u32 %v3622, 4294901760
        %3624 = vmatpush1.msra.mxu0 %v3623
        %v3625 = vand.u32 %v3455, 4294901760
        %v3626 = vsub.f32 %v3455, %v3625
        %v3627 = vand.u32 %v3626, 4294901760
        %v3628 = vsub.f32 %v3626, %v3627
        %v3629 = vand.u32 %v3628, 4294901760
        %3630 = vmatprep.subr.mxu0 %v3629
        %v3631 = vand.u32 %v3454, 4294901760
        %v3632 = vsub.f32 %v3454, %v3631
        %v3633 = vand.u32 %v3632, 4294901760
        %v3634 = vsub.f32 %v3632, %v3633
        %v3635 = vand.u32 %v3634, 4294901760
        %3636 = vmatpush1.msra.mxu0 %v3635
        %v3637 = vand.u32 %v3457, 4294901760
        %v3638 = vsub.f32 %v3457, %v3637
        %v3639 = vand.u32 %v3638, 4294901760
        %v3640 = vsub.f32 %v3638, %v3639
        %v3641 = vand.u32 %v3640, 4294901760
        %3642 = vmatprep.subr.mxu0 %v3641
        %v3643 = vand.u32 %v3456, 4294901760
        %v3644 = vsub.f32 %v3456, %v3643
        %v3645 = vand.u32 %v3644, 4294901760
        %v3646 = vsub.f32 %v3644, %v3645
        %v3647 = vand.u32 %v3646, 4294901760
        %3648 = vmatpush1.msra.mxu0 %v3647
        %v3649 = vand.u32 %v3459, 4294901760
        %v3650 = vsub.f32 %v3459, %v3649
        %v3651 = vand.u32 %v3650, 4294901760
        %v3652 = vsub.f32 %v3650, %v3651
        %v3653 = vand.u32 %v3652, 4294901760
        %3654 = vmatprep.subr.mxu0 %v3653
        %v3655 = vand.u32 %v3458, 4294901760
        %v3656 = vsub.f32 %v3458, %v3655
        %v3657 = vand.u32 %v3656, 4294901760
        %v3658 = vsub.f32 %v3656, %v3657
        %v3659 = vand.u32 %v3658, 4294901760
        %3660 = vmatpush1.msra.mxu0 %v3659
        %v3661 = vand.u32 %v3461, 4294901760
        %v3662 = vsub.f32 %v3461, %v3661
        %v3663 = vand.u32 %v3662, 4294901760
        %v3664 = vsub.f32 %v3662, %v3663
        %v3665 = vand.u32 %v3664, 4294901760
        %3666 = vmatprep.subr.mxu0 %v3665
        %v3667 = vand.u32 %v3460, 4294901760
        %v3668 = vsub.f32 %v3460, %v3667
        %v3669 = vand.u32 %v3668, 4294901760
        %v3670 = vsub.f32 %v3668, %v3669
        %v3671 = vand.u32 %v3670, 4294901760
        %3672 = vmatpush1.msra.mxu0 %v3671
        %v3673 = vand.u32 %v3463, 4294901760
        %v3674 = vsub.f32 %v3463, %v3673
        %v3675 = vand.u32 %v3674, 4294901760
        %v3676 = vsub.f32 %v3674, %v3675
        %v3677 = vand.u32 %v3676, 4294901760
        %3678 = vmatprep.subr.mxu0 %v3677
        %v3679 = vand.u32 %v3462, 4294901760
        %v3680 = vsub.f32 %v3462, %v3679
        %v3681 = vand.u32 %v3680, 4294901760
        %v3682 = vsub.f32 %v3680, %v3681
        %v3683 = vand.u32 %v3682, 4294901760
        %3684 = vmatpush1.msra.mxu0 %v3683
        %v3685 = vand.u32 %v3465, 4294901760
        %v3686 = vsub.f32 %v3465, %v3685
        %v3687 = vand.u32 %v3686, 4294901760
        %v3688 = vsub.f32 %v3686, %v3687
        %v3689 = vand.u32 %v3688, 4294901760
        %3690 = vmatprep.subr.mxu0 %v3689
        %v3691 = vand.u32 %v3464, 4294901760
        %v3692 = vsub.f32 %v3464, %v3691
        %v3693 = vand.u32 %v3692, 4294901760
        %v3694 = vsub.f32 %v3692, %v3693
        %v3695 = vand.u32 %v3694, 4294901760
        %3696 = vmatpush1.msra.mxu0 %v3695
        %v3697 = vand.u32 %v3467, 4294901760
        %v3698 = vsub.f32 %v3467, %v3697
        %v3699 = vand.u32 %v3698, 4294901760
        %v3700 = vsub.f32 %v3698, %v3699
        %v3701 = vand.u32 %v3700, 4294901760
        %3702 = vmatprep.subr.mxu0 %v3701
        %v3703 = vand.u32 %v3466, 4294901760
        %v3704 = vsub.f32 %v3466, %v3703
        %v3705 = vand.u32 %v3704, 4294901760
        %v3706 = vsub.f32 %v3704, %v3705
        %v3707 = vand.u32 %v3706, 4294901760
        %3708 = vmatpush1.msra.mxu0 %v3707
        %v3709 = vand.u32 %v3469, 4294901760
        %v3710 = vsub.f32 %v3469, %v3709
        %v3711 = vand.u32 %v3710, 4294901760
        %v3712 = vsub.f32 %v3710, %v3711
        %v3713 = vand.u32 %v3712, 4294901760
        %3714 = vmatprep.subr.mxu0 %v3713
        %v3715 = vand.u32 %v3468, 4294901760
        %v3716 = vsub.f32 %v3468, %v3715
        %v3717 = vand.u32 %v3716, 4294901760
        %v3718 = vsub.f32 %v3716, %v3717
        %v3719 = vand.u32 %v3718, 4294901760
        %3720 = vmatpush1.msra.mxu0 %v3719
        %v3721 = vand.u32 %v3471, 4294901760
        %v3722 = vsub.f32 %v3471, %v3721
        %v3723 = vand.u32 %v3722, 4294901760
        %v3724 = vsub.f32 %v3722, %v3723
        %v3725 = vand.u32 %v3724, 4294901760
        %3726 = vmatprep.subr.mxu0 %v3725
        %v3727 = vand.u32 %v3470, 4294901760
        %v3728 = vsub.f32 %v3470, %v3727
        %v3729 = vand.u32 %v3728, 4294901760
        %v3730 = vsub.f32 %v3728, %v3729
        %v3731 = vand.u32 %v3730, 4294901760
        %3732 = vmatpush1.msra.mxu0 %v3731
        %v3733 = vand.u32 %v3473, 4294901760
        %v3734 = vsub.f32 %v3473, %v3733
        %v3735 = vand.u32 %v3734, 4294901760
        %v3736 = vsub.f32 %v3734, %v3735
        %v3737 = vand.u32 %v3736, 4294901760
        %3738 = vmatprep.subr.mxu0 %v3737
        %v3739 = vand.u32 %v3472, 4294901760
        %v3740 = vsub.f32 %v3472, %v3739
        %v3741 = vand.u32 %v3740, 4294901760
        %v3742 = vsub.f32 %v3740, %v3741
        %v3743 = vand.u32 %v3742, 4294901760
        %3744 = vmatpush1.msra.mxu0 %v3743
        %v3745 = vand.u32 %v3475, 4294901760
        %v3746 = vsub.f32 %v3475, %v3745
        %v3747 = vand.u32 %v3746, 4294901760
        %v3748 = vsub.f32 %v3746, %v3747
        %v3749 = vand.u32 %v3748, 4294901760
        %3750 = vmatprep.subr.mxu0 %v3749
        %v3751 = vand.u32 %v3474, 4294901760
        %v3752 = vsub.f32 %v3474, %v3751
        %v3753 = vand.u32 %v3752, 4294901760
        %v3754 = vsub.f32 %v3752, %v3753
        %v3755 = vand.u32 %v3754, 4294901760
        %3756 = vmatpush1.msra.mxu0 %v3755
        %v3757 = vand.u32 %v3477, 4294901760
        %v3758 = vsub.f32 %v3477, %v3757
        %v3759 = vand.u32 %v3758, 4294901760
        %v3760 = vsub.f32 %v3758, %v3759
        %v3761 = vand.u32 %v3760, 4294901760
        %3762 = vmatprep.subr.mxu0 %v3761
        %v3763 = vand.u32 %v3476, 4294901760
        %v3764 = vsub.f32 %v3476, %v3763
        %v3765 = vand.u32 %v3764, 4294901760
        %v3766 = vsub.f32 %v3764, %v3765
        %v3767 = vand.u32 %v3766, 4294901760
        %3768 = vmatpush1.msra.mxu0 %v3767
        %v3769 = vand.u32 %v3479, 4294901760
        %v3770 = vsub.f32 %v3479, %v3769
        %v3771 = vand.u32 %v3770, 4294901760
        %v3772 = vsub.f32 %v3770, %v3771
        %v3773 = vand.u32 %v3772, 4294901760
        %3774 = vmatprep.subr.mxu0 %v3773
        %v3775 = vand.u32 %v3478, 4294901760
        %v3776 = vsub.f32 %v3478, %v3775
        %v3777 = vand.u32 %v3776, 4294901760
        %v3778 = vsub.f32 %v3776, %v3777
        %v3779 = vand.u32 %v3778, 4294901760
        %3780 = vmatpush1.msra.mxu0 %v3779
        %v3781 = vand.u32 %v3481, 4294901760
        %v3782 = vsub.f32 %v3481, %v3781
        %v3783 = vand.u32 %v3782, 4294901760
        %v3784 = vsub.f32 %v3782, %v3783
        %v3785 = vand.u32 %v3784, 4294901760
        %3786 = vmatprep.subr.mxu0 %v3785
        %v3787 = vand.u32 %v3480, 4294901760
        %v3788 = vsub.f32 %v3480, %v3787
        %v3789 = vand.u32 %v3788, 4294901760
        %v3790 = vsub.f32 %v3788, %v3789
        %v3791 = vand.u32 %v3790, 4294901760
        %3792 = vmatpush1.msra.mxu0 %v3791
        %3793 = vmatprep.subr.mxu0 0.0
        %3794 = vmatpush1.msra.mxu0 0.0
        %3795 = vmatprep.subr.mxu0 0.0
        %3796 = vmatpush1.msra.mxu0 0.0
        %3797 = vmatprep.subr.mxu0 0.0
        %3798 = vmatpush1.msra.mxu0 0.0
        %3799 = vmatprep.subr.mxu0 0.0
        %3800 = vmatpush1.msra.mxu0 0.0
        %3801 = vmatprep.subr.mxu0 0.0
        %3802 = vmatpush1.msra.mxu0 0.0
        %3803 = vmatprep.subr.mxu0 0.0
        %3804 = vmatpush1.msra.mxu0 0.0
        %3805 = vmatprep.subr.mxu0 0.0
        %3806 = vmatpush1.msra.mxu0 0.0
        %3807 = vmatprep.subr.mxu0 0.0
        %3808 = vmatpush1.msra.mxu0 0.0
        %3809 = vmatprep.subr.mxu0 0.0
        %3810 = vmatpush1.msra.mxu0 0.0
        %3811 = vmatprep.subr.mxu0 0.0
        %3812 = vmatpush1.msra.mxu0 0.0
        %3813 = vmatprep.subr.mxu0 0.0
        %3814 = vmatpush1.msra.mxu0 0.0
        %3815 = vmatprep.subr.mxu0 0.0
        %3816 = vmatpush1.msra.mxu0 0.0
        %3817 = vmatprep.subr.mxu0 0.0
        %3818 = vmatpush1.msra.mxu0 0.0
        %3819 = vmatprep.subr.mxu0 0.0
        %3820 = vmatpush1.msra.mxu0 0.0
        %3821 = vmatprep.subr.mxu0 0.0
        %3822 = vmatpush1.msra.mxu0 0.0
        %3823 = vmatprep.subr.mxu0 0.0
        %3824 = vmatpush1.msra.mxu0 0.0
        %3825 = vmatprep.mubr.f32.mxu0 0.0
        %v3826 = vand.u32 %v3448, 4294901760
        %3827 = vmatmul.mubr.f32.gmra.mrb[0].mxu0 %v3826
        %v3828 = vpop.f32.mrb[0].mxu0
        %v3829 = vadd.f32 %v3586, %v3828
        %v3830 = vpop.f32.mrb[0].mxu0
        %v3831 = vadd.f32 %v3588, %v3830
        %3832 = vmatprep.mubr.f32.mxu0 0.0
        %v3833 = vand.u32 %v3449, 4294901760
        %3834 = vmatmul.mubr.f32.gmra.mrb[0].mxu0 %v3833
        %v3835 = vpop.f32.mrb[0].mxu0
        %v3836 = vadd.f32 %v3597, %v3835
        %v3837 = vpop.f32.mrb[0].mxu0
        %v3838 = vadd.f32 %v3599, %v3837
        %3839 = vdwg.mxu0
        %v3840 = vand.u32 %v3451, 4294901760
        %v3841 = vsub.f32 %v3451, %v3840
        %3842 = vmatprep.subr.mxu0 %v3841
        %v3843 = vand.u32 %v3450, 4294901760
        %v3844 = vsub.f32 %v3450, %v3843
        %3845 = vmatpush1.msra.mxu0 %v3844
        %v3846 = vand.u32 %v3453, 4294901760
        %v3847 = vsub.f32 %v3453, %v3846
        %3848 = vmatprep.subr.mxu0 %v3847
        %v3849 = vand.u32 %v3452, 4294901760
        %v3850 = vsub.f32 %v3452, %v3849
        %3851 = vmatpush1.msra.mxu0 %v3850
        %v3852 = vand.u32 %v3455, 4294901760
        %v3853 = vsub.f32 %v3455, %v3852
        %3854 = vmatprep.subr.mxu0 %v3853
        %v3855 = vand.u32 %v3454, 4294901760
        %v3856 = vsub.f32 %v3454, %v3855
        %3857 = vmatpush1.msra.mxu0 %v3856
        %v3858 = vand.u32 %v3457, 4294901760
        %v3859 = vsub.f32 %v3457, %v3858
        %3860 = vmatprep.subr.mxu0 %v3859
        %v3861 = vand.u32 %v3456, 4294901760
        %v3862 = vsub.f32 %v3456, %v3861
        %3863 = vmatpush1.msra.mxu0 %v3862
        %v3864 = vand.u32 %v3459, 4294901760
        %v3865 = vsub.f32 %v3459, %v3864
        %3866 = vmatprep.subr.mxu0 %v3865
        %v3867 = vand.u32 %v3458, 4294901760
        %v3868 = vsub.f32 %v3458, %v3867
        %3869 = vmatpush1.msra.mxu0 %v3868
        %v3870 = vand.u32 %v3461, 4294901760
        %v3871 = vsub.f32 %v3461, %v3870
        %3872 = vmatprep.subr.mxu0 %v3871
        %v3873 = vand.u32 %v3460, 4294901760
        %v3874 = vsub.f32 %v3460, %v3873
        %3875 = vmatpush1.msra.mxu0 %v3874
        %v3876 = vand.u32 %v3463, 4294901760
        %v3877 = vsub.f32 %v3463, %v3876
        %3878 = vmatprep.subr.mxu0 %v3877
        %v3879 = vand.u32 %v3462, 4294901760
        %v3880 = vsub.f32 %v3462, %v3879
        %3881 = vmatpush1.msra.mxu0 %v3880
        %v3882 = vand.u32 %v3465, 4294901760
        %v3883 = vsub.f32 %v3465, %v3882
        %3884 = vmatprep.subr.mxu0 %v3883
        %v3885 = vand.u32 %v3464, 4294901760
        %v3886 = vsub.f32 %v3464, %v3885
        %3887 = vmatpush1.msra.mxu0 %v3886
        %v3888 = vand.u32 %v3467, 4294901760
        %v3889 = vsub.f32 %v3467, %v3888
        %3890 = vmatprep.subr.mxu0 %v3889
        %v3891 = vand.u32 %v3466, 4294901760
        %v3892 = vsub.f32 %v3466, %v3891
        %3893 = vmatpush1.msra.mxu0 %v3892
        %v3894 = vand.u32 %v3469, 4294901760
        %v3895 = vsub.f32 %v3469, %v3894
        %3896 = vmatprep.subr.mxu0 %v3895
        %v3897 = vand.u32 %v3468, 4294901760
        %v3898 = vsub.f32 %v3468, %v3897
        %3899 = vmatpush1.msra.mxu0 %v3898
        %v3900 = vand.u32 %v3471, 4294901760
        %v3901 = vsub.f32 %v3471, %v3900
        %3902 = vmatprep.subr.mxu0 %v3901
        %v3903 = vand.u32 %v3470, 4294901760
        %v3904 = vsub.f32 %v3470, %v3903
        %3905 = vmatpush1.msra.mxu0 %v3904
        %v3906 = vand.u32 %v3473, 4294901760
        %v3907 = vsub.f32 %v3473, %v3906
        %3908 = vmatprep.subr.mxu0 %v3907
        %v3909 = vand.u32 %v3472, 4294901760
        %v3910 = vsub.f32 %v3472, %v3909
        %3911 = vmatpush1.msra.mxu0 %v3910
        %v3912 = vand.u32 %v3475, 4294901760
        %v3913 = vsub.f32 %v3475, %v3912
        %3914 = vmatprep.subr.mxu0 %v3913
        %v3915 = vand.u32 %v3474, 4294901760
        %v3916 = vsub.f32 %v3474, %v3915
        %3917 = vmatpush1.msra.mxu0 %v3916
        %v3918 = vand.u32 %v3477, 4294901760
        %v3919 = vsub.f32 %v3477, %v3918
        %3920 = vmatprep.subr.mxu0 %v3919
        %v3921 = vand.u32 %v3476, 4294901760
        %v3922 = vsub.f32 %v3476, %v3921
        %3923 = vmatpush1.msra.mxu0 %v3922
        %v3924 = vand.u32 %v3479, 4294901760
        %v3925 = vsub.f32 %v3479, %v3924
        %3926 = vmatprep.subr.mxu0 %v3925
        %v3927 = vand.u32 %v3478, 4294901760
        %v3928 = vsub.f32 %v3478, %v3927
        %3929 = vmatpush1.msra.mxu0 %v3928
        %v3930 = vand.u32 %v3481, 4294901760
        %v3931 = vsub.f32 %v3481, %v3930
        %3932 = vmatprep.subr.mxu0 %v3931
        %v3933 = vand.u32 %v3480, 4294901760
        %v3934 = vsub.f32 %v3480, %v3933
        %3935 = vmatpush1.msra.mxu0 %v3934
        %3936 = vmatprep.subr.mxu0 0.0
        %3937 = vmatpush1.msra.mxu0 0.0
        %3938 = vmatprep.subr.mxu0 0.0
        %3939 = vmatpush1.msra.mxu0 0.0
        %3940 = vmatprep.subr.mxu0 0.0
        %3941 = vmatpush1.msra.mxu0 0.0
        %3942 = vmatprep.subr.mxu0 0.0
        %3943 = vmatpush1.msra.mxu0 0.0
        %3944 = vmatprep.subr.mxu0 0.0
        %3945 = vmatpush1.msra.mxu0 0.0
        %3946 = vmatprep.subr.mxu0 0.0
        %3947 = vmatpush1.msra.mxu0 0.0
        %3948 = vmatprep.subr.mxu0 0.0
        %3949 = vmatpush1.msra.mxu0 0.0
        %3950 = vmatprep.subr.mxu0 0.0
        %3951 = vmatpush1.msra.mxu0 0.0
        %3952 = vmatprep.subr.mxu0 0.0
        %3953 = vmatpush1.msra.mxu0 0.0
        %3954 = vmatprep.subr.mxu0 0.0
        %3955 = vmatpush1.msra.mxu0 0.0
        %3956 = vmatprep.subr.mxu0 0.0
        %3957 = vmatpush1.msra.mxu0 0.0
        %3958 = vmatprep.subr.mxu0 0.0
        %3959 = vmatpush1.msra.mxu0 0.0
        %3960 = vmatprep.subr.mxu0 0.0
        %3961 = vmatpush1.msra.mxu0 0.0
        %3962 = vmatprep.subr.mxu0 0.0
        %3963 = vmatpush1.msra.mxu0 0.0
        %3964 = vmatprep.subr.mxu0 0.0
        %3965 = vmatpush1.msra.mxu0 0.0
        %3966 = vmatprep.subr.mxu0 0.0
        %3967 = vmatpush1.msra.mxu0 0.0
        %3968 = vmatprep.mubr.f32.mxu0 0.0
        %v3969 = vand.u32 %v3448, 4294901760
        %v3970 = vsub.f32 %v3448, %v3969
        %3971 = vmatmul.mubr.f32.gmra.mrb[0].mxu0 %v3970
        %v3972 = vpop.f32.mrb[0].mxu0
        %v3973 = vadd.f32 %v3829, %v3972
        %v3974 = vpop.f32.mrb[0].mxu0
        %v3975 = vadd.f32 %v3831, %v3974
        %3976 = vmatprep.mubr.f32.mxu0 0.0
        %v3977 = vand.u32 %v3449, 4294901760
        %v3978 = vsub.f32 %v3449, %v3977
        %3979 = vmatmul.mubr.f32.gmra.mrb[0].mxu0 %v3978
        %v3980 = vpop.f32.mrb[0].mxu0
        %v3981 = vadd.f32 %v3836, %v3980
        %v3982 = vpop.f32.mrb[0].mxu0
        %v3983 = vadd.f32 %v3838, %v3982
        %3984 = vdwg.mxu0
        %v3985 = vand.u32 %v3451, 4294901760
        %3986 = vmatprep.subr.mxu0 %v3985
        %v3987 = vand.u32 %v3450, 4294901760
        %3988 = vmatpush1.msra.mxu0 %v3987
        %v3989 = vand.u32 %v3453, 4294901760
        %3990 = vmatprep.subr.mxu0 %v3989
        %v3991 = vand.u32 %v3452, 4294901760
        %3992 = vmatpush1.msra.mxu0 %v3991
        %v3993 = vand.u32 %v3455, 4294901760
        %3994 = vmatprep.subr.mxu0 %v3993
        %v3995 = vand.u32 %v3454, 4294901760
        %3996 = vmatpush1.msra.mxu0 %v3995
        %v3997 = vand.u32 %v3457, 4294901760
        %3998 = vmatprep.subr.mxu0 %v3997
        %v3999 = vand.u32 %v3456, 4294901760
        %4000 = vmatpush1.msra.mxu0 %v3999
        %v4001 = vand.u32 %v3459, 4294901760
        %4002 = vmatprep.subr.mxu0 %v4001
        %v4003 = vand.u32 %v3458, 4294901760
        %4004 = vmatpush1.msra.mxu0 %v4003
        %v4005 = vand.u32 %v3461, 4294901760
        %4006 = vmatprep.subr.mxu0 %v4005
        %v4007 = vand.u32 %v3460, 4294901760
        %4008 = vmatpush1.msra.mxu0 %v4007
        %v4009 = vand.u32 %v3463, 4294901760
        %4010 = vmatprep.subr.mxu0 %v4009
        %v4011 = vand.u32 %v3462, 4294901760
        %4012 = vmatpush1.msra.mxu0 %v4011
        %v4013 = vand.u32 %v3465, 4294901760
        %4014 = vmatprep.subr.mxu0 %v4013
        %v4015 = vand.u32 %v3464, 4294901760
        %4016 = vmatpush1.msra.mxu0 %v4015
        %v4017 = vand.u32 %v3467, 4294901760
        %4018 = vmatprep.subr.mxu0 %v4017
        %v4019 = vand.u32 %v3466, 4294901760
        %4020 = vmatpush1.msra.mxu0 %v4019
        %v4021 = vand.u32 %v3469, 4294901760
        %4022 = vmatprep.subr.mxu0 %v4021
        %v4023 = vand.u32 %v3468, 4294901760
        %4024 = vmatpush1.msra.mxu0 %v4023
        %v4025 = vand.u32 %v3471, 4294901760
        %4026 = vmatprep.subr.mxu0 %v4025
        %v4027 = vand.u32 %v3470, 4294901760
        %4028 = vmatpush1.msra.mxu0 %v4027
        %v4029 = vand.u32 %v3473, 4294901760
        %4030 = vmatprep.subr.mxu0 %v4029
        %v4031 = vand.u32 %v3472, 4294901760
        %4032 = vmatpush1.msra.mxu0 %v4031
        %v4033 = vand.u32 %v3475, 4294901760
        %4034 = vmatprep.subr.mxu0 %v4033
        %v4035 = vand.u32 %v3474, 4294901760
        %4036 = vmatpush1.msra.mxu0 %v4035
        %v4037 = vand.u32 %v3477, 4294901760
        %4038 = vmatprep.subr.mxu0 %v4037
        %v4039 = vand.u32 %v3476, 4294901760
        %4040 = vmatpush1.msra.mxu0 %v4039
        %v4041 = vand.u32 %v3479, 4294901760
        %4042 = vmatprep.subr.mxu0 %v4041
        %v4043 = vand.u32 %v3478, 4294901760
        %4044 = vmatpush1.msra.mxu0 %v4043
        %v4045 = vand.u32 %v3481, 4294901760
        %4046 = vmatprep.subr.mxu0 %v4045
        %v4047 = vand.u32 %v3480, 4294901760
        %4048 = vmatpush1.msra.mxu0 %v4047
        %4049 = vmatprep.subr.mxu0 0.0
        %4050 = vmatpush1.msra.mxu0 0.0
        %4051 = vmatprep.subr.mxu0 0.0
        %4052 = vmatpush1.msra.mxu0 0.0
        %4053 = vmatprep.subr.mxu0 0.0
        %4054 = vmatpush1.msra.mxu0 0.0
        %4055 = vmatprep.subr.mxu0 0.0
        %4056 = vmatpush1.msra.mxu0 0.0
        %4057 = vmatprep.subr.mxu0 0.0
        %4058 = vmatpush1.msra.mxu0 0.0
        %4059 = vmatprep.subr.mxu0 0.0
        %4060 = vmatpush1.msra.mxu0 0.0
        %4061 = vmatprep.subr.mxu0 0.0
        %4062 = vmatpush1.msra.mxu0 0.0
        %4063 = vmatprep.subr.mxu0 0.0
        %4064 = vmatpush1.msra.mxu0 0.0
        %4065 = vmatprep.subr.mxu0 0.0
        %4066 = vmatpush1.msra.mxu0 0.0
        %4067 = vmatprep.subr.mxu0 0.0
        %4068 = vmatpush1.msra.mxu0 0.0
        %4069 = vmatprep.subr.mxu0 0.0
        %4070 = vmatpush1.msra.mxu0 0.0
        %4071 = vmatprep.subr.mxu0 0.0
        %4072 = vmatpush1.msra.mxu0 0.0
        %4073 = vmatprep.subr.mxu0 0.0
        %4074 = vmatpush1.msra.mxu0 0.0
        %4075 = vmatprep.subr.mxu0 0.0
        %4076 = vmatpush1.msra.mxu0 0.0
        %4077 = vmatprep.subr.mxu0 0.0
        %4078 = vmatpush1.msra.mxu0 0.0
        %4079 = vmatprep.subr.mxu0 0.0
        %4080 = vmatpush1.msra.mxu0 0.0
        %4081 = vmatprep.mubr.f32.mxu0 0.0
        %v4082 = vand.u32 %v3448, 4294901760
        %v4083 = vsub.f32 %v3448, %v4082
        %v4084 = vand.u32 %v4083, 4294901760
        %4085 = vmatmul.mubr.f32.gmra.mrb[0].mxu0 %v4084
        %v4086 = vpop.f32.mrb[0].mxu0
        %v4087 = vadd.f32 %v3973, %v4086
        %v4088 = vpop.f32.mrb[0].mxu0
        %v4089 = vadd.f32 %v3975, %v4088
        %4090 = vmatprep.mubr.f32.mxu0 0.0
        %v4091 = vand.u32 %v3449, 4294901760
        %v4092 = vsub.f32 %v3449, %v4091
        %v4093 = vand.u32 %v4092, 4294901760
        %4094 = vmatmul.mubr.f32.gmra.mrb[0].mxu0 %v4093
        %v4095 = vpop.f32.mrb[0].mxu0
        %v4096 = vadd.f32 %v3981, %v4095
        %v4097 = vpop.f32.mrb[0].mxu0
        %v4098 = vadd.f32 %v3983, %v4097
        %4099 = vdwg.mxu0
        %v4100 = vand.u32 %v3451, 4294901760
        %v4101 = vsub.f32 %v3451, %v4100
        %v4102 = vand.u32 %v4101, 4294901760
        %4103 = vmatprep.subr.mxu0 %v4102
        %v4104 = vand.u32 %v3450, 4294901760
        %v4105 = vsub.f32 %v3450, %v4104
        %v4106 = vand.u32 %v4105, 4294901760
        %4107 = vmatpush1.msra.mxu0 %v4106
        %v4108 = vand.u32 %v3453, 4294901760
        %v4109 = vsub.f32 %v3453, %v4108
        %v4110 = vand.u32 %v4109, 4294901760
        %4111 = vmatprep.subr.mxu0 %v4110
        %v4112 = vand.u32 %v3452, 4294901760
        %v4113 = vsub.f32 %v3452, %v4112
        %v4114 = vand.u32 %v4113, 4294901760
        %4115 = vmatpush1.msra.mxu0 %v4114
        %v4116 = vand.u32 %v3455, 4294901760
        %v4117 = vsub.f32 %v3455, %v4116
        %v4118 = vand.u32 %v4117, 4294901760
        %4119 = vmatprep.subr.mxu0 %v4118
        %v4120 = vand.u32 %v3454, 4294901760
        %v4121 = vsub.f32 %v3454, %v4120
        %v4122 = vand.u32 %v4121, 4294901760
        %4123 = vmatpush1.msra.mxu0 %v4122
        %v4124 = vand.u32 %v3457, 4294901760
        %v4125 = vsub.f32 %v3457, %v4124
        %v4126 = vand.u32 %v4125, 4294901760
        %4127 = vmatprep.subr.mxu0 %v4126
        %v4128 = vand.u32 %v3456, 4294901760
        %v4129 = vsub.f32 %v3456, %v4128
        %v4130 = vand.u32 %v4129, 4294901760
        %4131 = vmatpush1.msra.mxu0 %v4130
        %v4132 = vand.u32 %v3459, 4294901760
        %v4133 = vsub.f32 %v3459, %v4132
        %v4134 = vand.u32 %v4133, 4294901760
        %4135 = vmatprep.subr.mxu0 %v4134
        %v4136 = vand.u32 %v3458, 4294901760
        %v4137 = vsub.f32 %v3458, %v4136
        %v4138 = vand.u32 %v4137, 4294901760
        %4139 = vmatpush1.msra.mxu0 %v4138
        %v4140 = vand.u32 %v3461, 4294901760
        %v4141 = vsub.f32 %v3461, %v4140
        %v4142 = vand.u32 %v4141, 4294901760
        %4143 = vmatprep.subr.mxu0 %v4142
        %v4144 = vand.u32 %v3460, 4294901760
        %v4145 = vsub.f32 %v3460, %v4144
        %v4146 = vand.u32 %v4145, 4294901760
        %4147 = vmatpush1.msra.mxu0 %v4146
        %v4148 = vand.u32 %v3463, 4294901760
        %v4149 = vsub.f32 %v3463, %v4148
        %v4150 = vand.u32 %v4149, 4294901760
        %4151 = vmatprep.subr.mxu0 %v4150
        %v4152 = vand.u32 %v3462, 4294901760
        %v4153 = vsub.f32 %v3462, %v4152
        %v4154 = vand.u32 %v4153, 4294901760
        %4155 = vmatpush1.msra.mxu0 %v4154
        %v4156 = vand.u32 %v3465, 4294901760
        %v4157 = vsub.f32 %v3465, %v4156
        %v4158 = vand.u32 %v4157, 4294901760
        %4159 = vmatprep.subr.mxu0 %v4158
        %v4160 = vand.u32 %v3464, 4294901760
        %v4161 = vsub.f32 %v3464, %v4160
        %v4162 = vand.u32 %v4161, 4294901760
        %4163 = vmatpush1.msra.mxu0 %v4162
        %v4164 = vand.u32 %v3467, 4294901760
        %v4165 = vsub.f32 %v3467, %v4164
        %v4166 = vand.u32 %v4165, 4294901760
        %4167 = vmatprep.subr.mxu0 %v4166
        %v4168 = vand.u32 %v3466, 4294901760
        %v4169 = vsub.f32 %v3466, %v4168
        %v4170 = vand.u32 %v4169, 4294901760
        %4171 = vmatpush1.msra.mxu0 %v4170
        %v4172 = vand.u32 %v3469, 4294901760
        %v4173 = vsub.f32 %v3469, %v4172
        %v4174 = vand.u32 %v4173, 4294901760
        %4175 = vmatprep.subr.mxu0 %v4174
        %v4176 = vand.u32 %v3468, 4294901760
        %v4177 = vsub.f32 %v3468, %v4176
        %v4178 = vand.u32 %v4177, 4294901760
        %4179 = vmatpush1.msra.mxu0 %v4178
        %v4180 = vand.u32 %v3471, 4294901760
        %v4181 = vsub.f32 %v3471, %v4180
        %v4182 = vand.u32 %v4181, 4294901760
        %4183 = vmatprep.subr.mxu0 %v4182
        %v4184 = vand.u32 %v3470, 4294901760
        %v4185 = vsub.f32 %v3470, %v4184
        %v4186 = vand.u32 %v4185, 4294901760
        %4187 = vmatpush1.msra.mxu0 %v4186
        %v4188 = vand.u32 %v3473, 4294901760
        %v4189 = vsub.f32 %v3473, %v4188
        %v4190 = vand.u32 %v4189, 4294901760
        %4191 = vmatprep.subr.mxu0 %v4190
        %v4192 = vand.u32 %v3472, 4294901760
        %v4193 = vsub.f32 %v3472, %v4192
        %v4194 = vand.u32 %v4193, 4294901760
        %4195 = vmatpush1.msra.mxu0 %v4194
        %v4196 = vand.u32 %v3475, 4294901760
        %v4197 = vsub.f32 %v3475, %v4196
        %v4198 = vand.u32 %v4197, 4294901760
        %4199 = vmatprep.subr.mxu0 %v4198
        %v4200 = vand.u32 %v3474, 4294901760
        %v4201 = vsub.f32 %v3474, %v4200
        %v4202 = vand.u32 %v4201, 4294901760
        %4203 = vmatpush1.msra.mxu0 %v4202
        %v4204 = vand.u32 %v3477, 4294901760
        %v4205 = vsub.f32 %v3477, %v4204
        %v4206 = vand.u32 %v4205, 4294901760
        %4207 = vmatprep.subr.mxu0 %v4206
        %v4208 = vand.u32 %v3476, 4294901760
        %v4209 = vsub.f32 %v3476, %v4208
        %v4210 = vand.u32 %v4209, 4294901760
        %4211 = vmatpush1.msra.mxu0 %v4210
        %v4212 = vand.u32 %v3479, 4294901760
        %v4213 = vsub.f32 %v3479, %v4212
        %v4214 = vand.u32 %v4213, 4294901760
        %4215 = vmatprep.subr.mxu0 %v4214
        %v4216 = vand.u32 %v3478, 4294901760
        %v4217 = vsub.f32 %v3478, %v4216
        %v4218 = vand.u32 %v4217, 4294901760
        %4219 = vmatpush1.msra.mxu0 %v4218
        %v4220 = vand.u32 %v3481, 4294901760
        %v4221 = vsub.f32 %v3481, %v4220
        %v4222 = vand.u32 %v4221, 4294901760
        %4223 = vmatprep.subr.mxu0 %v4222
        %v4224 = vand.u32 %v3480, 4294901760
        %v4225 = vsub.f32 %v3480, %v4224
        %v4226 = vand.u32 %v4225, 4294901760
        %4227 = vmatpush1.msra.mxu0 %v4226
        %4228 = vmatprep.subr.mxu0 0.0
        %4229 = vmatpush1.msra.mxu0 0.0
        %4230 = vmatprep.subr.mxu0 0.0
        %4231 = vmatpush1.msra.mxu0 0.0
        %4232 = vmatprep.subr.mxu0 0.0
        %4233 = vmatpush1.msra.mxu0 0.0
        %4234 = vmatprep.subr.mxu0 0.0
        %4235 = vmatpush1.msra.mxu0 0.0
        %4236 = vmatprep.subr.mxu0 0.0
        %4237 = vmatpush1.msra.mxu0 0.0
        %4238 = vmatprep.subr.mxu0 0.0
        %4239 = vmatpush1.msra.mxu0 0.0
        %4240 = vmatprep.subr.mxu0 0.0
        %4241 = vmatpush1.msra.mxu0 0.0
        %4242 = vmatprep.subr.mxu0 0.0
        %4243 = vmatpush1.msra.mxu0 0.0
        %4244 = vmatprep.subr.mxu0 0.0
        %4245 = vmatpush1.msra.mxu0 0.0
        %4246 = vmatprep.subr.mxu0 0.0
        %4247 = vmatpush1.msra.mxu0 0.0
        %4248 = vmatprep.subr.mxu0 0.0
        %4249 = vmatpush1.msra.mxu0 0.0
        %4250 = vmatprep.subr.mxu0 0.0
        %4251 = vmatpush1.msra.mxu0 0.0
        %4252 = vmatprep.subr.mxu0 0.0
        %4253 = vmatpush1.msra.mxu0 0.0
        %4254 = vmatprep.subr.mxu0 0.0
        %4255 = vmatpush1.msra.mxu0 0.0
        %4256 = vmatprep.subr.mxu0 0.0
        %4257 = vmatpush1.msra.mxu0 0.0
        %4258 = vmatprep.subr.mxu0 0.0
        %4259 = vmatpush1.msra.mxu0 0.0
        %4260 = vmatprep.mubr.f32.mxu0 0.0
        %v4261 = vand.u32 %v3448, 4294901760
        %4262 = vmatmul.mubr.f32.gmra.mrb[0].mxu0 %v4261
        %v4263 = vpop.f32.mrb[0].mxu0
        %v4264 = vadd.f32 %v4087, %v4263
        %v4265 = vpop.f32.mrb[0].mxu0
        %v4266 = vadd.f32 %v4089, %v4265
        %4267 = vmatprep.mubr.f32.mxu0 0.0
        %v4268 = vand.u32 %v3449, 4294901760
        %4269 = vmatmul.mubr.f32.gmra.mrb[0].mxu0 %v4268
        %v4270 = vpop.f32.mrb[0].mxu0
        %v4271 = vadd.f32 %v4096, %v4270
        %v4272 = vpop.f32.mrb[0].mxu0
        %v4273 = vadd.f32 %v4098, %v4272
        %4274 = vdwg.mxu0
        %v4275 = vand.u32 %v3451, 4294901760
        %4276 = vmatprep.subr.mxu0 %v4275
        %v4277 = vand.u32 %v3450, 4294901760
        %4278 = vmatpush1.msra.mxu0 %v4277
        %v4279 = vand.u32 %v3453, 4294901760
        %4280 = vmatprep.subr.mxu0 %v4279
        %v4281 = vand.u32 %v3452, 4294901760
        %4282 = vmatpush1.msra.mxu0 %v4281
        %v4283 = vand.u32 %v3455, 4294901760
        %4284 = vmatprep.subr.mxu0 %v4283
        %v4285 = vand.u32 %v3454, 4294901760
        %4286 = vmatpush1.msra.mxu0 %v4285
        %v4287 = vand.u32 %v3457, 4294901760
        %4288 = vmatprep.subr.mxu0 %v4287
        %v4289 = vand.u32 %v3456, 4294901760
        %4290 = vmatpush1.msra.mxu0 %v4289
        %v4291 = vand.u32 %v3459, 4294901760
        %4292 = vmatprep.subr.mxu0 %v4291
        %v4293 = vand.u32 %v3458, 4294901760
        %4294 = vmatpush1.msra.mxu0 %v4293
        %v4295 = vand.u32 %v3461, 4294901760
        %4296 = vmatprep.subr.mxu0 %v4295
        %v4297 = vand.u32 %v3460, 4294901760
        %4298 = vmatpush1.msra.mxu0 %v4297
        %v4299 = vand.u32 %v3463, 4294901760
        %4300 = vmatprep.subr.mxu0 %v4299
        %v4301 = vand.u32 %v3462, 4294901760
        %4302 = vmatpush1.msra.mxu0 %v4301
        %v4303 = vand.u32 %v3465, 4294901760
        %4304 = vmatprep.subr.mxu0 %v4303
        %v4305 = vand.u32 %v3464, 4294901760
        %4306 = vmatpush1.msra.mxu0 %v4305
        %v4307 = vand.u32 %v3467, 4294901760
        %4308 = vmatprep.subr.mxu0 %v4307
        %v4309 = vand.u32 %v3466, 4294901760
        %4310 = vmatpush1.msra.mxu0 %v4309
        %v4311 = vand.u32 %v3469, 4294901760
        %4312 = vmatprep.subr.mxu0 %v4311
        %v4313 = vand.u32 %v3468, 4294901760
        %4314 = vmatpush1.msra.mxu0 %v4313
        %v4315 = vand.u32 %v3471, 4294901760
        %4316 = vmatprep.subr.mxu0 %v4315
        %v4317 = vand.u32 %v3470, 4294901760
        %4318 = vmatpush1.msra.mxu0 %v4317
        %v4319 = vand.u32 %v3473, 4294901760
        %4320 = vmatprep.subr.mxu0 %v4319
        %v4321 = vand.u32 %v3472, 4294901760
        %4322 = vmatpush1.msra.mxu0 %v4321
        %v4323 = vand.u32 %v3475, 4294901760
        %4324 = vmatprep.subr.mxu0 %v4323
        %v4325 = vand.u32 %v3474, 4294901760
        %4326 = vmatpush1.msra.mxu0 %v4325
        %v4327 = vand.u32 %v3477, 4294901760
        %4328 = vmatprep.subr.mxu0 %v4327
        %v4329 = vand.u32 %v3476, 4294901760
        %4330 = vmatpush1.msra.mxu0 %v4329
        %v4331 = vand.u32 %v3479, 4294901760
        %4332 = vmatprep.subr.mxu0 %v4331
        %v4333 = vand.u32 %v3478, 4294901760
        %4334 = vmatpush1.msra.mxu0 %v4333
        %v4335 = vand.u32 %v3481, 4294901760
        %4336 = vmatprep.subr.mxu0 %v4335
        %v4337 = vand.u32 %v3480, 4294901760
        %4338 = vmatpush1.msra.mxu0 %v4337
        %4339 = vmatprep.subr.mxu0 0.0
        %4340 = vmatpush1.msra.mxu0 0.0
        %4341 = vmatprep.subr.mxu0 0.0
        %4342 = vmatpush1.msra.mxu0 0.0
        %4343 = vmatprep.subr.mxu0 0.0
        %4344 = vmatpush1.msra.mxu0 0.0
        %4345 = vmatprep.subr.mxu0 0.0
        %4346 = vmatpush1.msra.mxu0 0.0
        %4347 = vmatprep.subr.mxu0 0.0
        %4348 = vmatpush1.msra.mxu0 0.0
        %4349 = vmatprep.subr.mxu0 0.0
        %4350 = vmatpush1.msra.mxu0 0.0
        %4351 = vmatprep.subr.mxu0 0.0
        %4352 = vmatpush1.msra.mxu0 0.0
        %4353 = vmatprep.subr.mxu0 0.0
        %4354 = vmatpush1.msra.mxu0 0.0
        %4355 = vmatprep.subr.mxu0 0.0
        %4356 = vmatpush1.msra.mxu0 0.0
        %4357 = vmatprep.subr.mxu0 0.0
        %4358 = vmatpush1.msra.mxu0 0.0
        %4359 = vmatprep.subr.mxu0 0.0
        %4360 = vmatpush1.msra.mxu0 0.0
        %4361 = vmatprep.subr.mxu0 0.0
        %4362 = vmatpush1.msra.mxu0 0.0
        %4363 = vmatprep.subr.mxu0 0.0
        %4364 = vmatpush1.msra.mxu0 0.0
        %4365 = vmatprep.subr.mxu0 0.0
        %4366 = vmatpush1.msra.mxu0 0.0
        %4367 = vmatprep.subr.mxu0 0.0
        %4368 = vmatpush1.msra.mxu0 0.0
        %4369 = vmatprep.subr.mxu0 0.0
        %4370 = vmatpush1.msra.mxu0 0.0
        %4371 = vmatprep.mubr.f32.mxu0 0.0
        %v4372 = vand.u32 %v3448, 4294901760
        %4373 = vmatmul.mubr.f32.gmra.mrb[0].mxu0 %v4372
        %v4374 = vpop.f32.mrb[0].mxu0
        %v4375 = vadd.f32 %v4264, %v4374
        %v4376 = vpop.f32.mrb[0].mxu0
        %v4377 = vadd.f32 %v4266, %v4376
        %4378 = vmatprep.mubr.f32.mxu0 0.0
        %v4379 = vand.u32 %v3449, 4294901760
        %4380 = vmatmul.mubr.f32.gmra.mrb[0].mxu0 %v4379
        %v4381 = vpop.f32.mrb[0].mxu0
        %v4382 = vadd.f32 %v4271, %v4381
        %v4383 = vpop.f32.mrb[0].mxu0
        %v4384 = vadd.f32 %v4273, %v4383
        %4385 = vdwg.mxu0
        %v4386 = vmax.f32 %v4375, 0.0
        %v4387 = vmax.f32 %v4377, 0.0
        %v4388 = vmax.f32 %v4382, 0.0
        %v4389 = vmax.f32 %v4384, 0.0
        %4390 = vst [vmem:[%s240] sm:$0xff] %v4386
        %4391 = vst [vmem:[%s240 + $0x8] sm:$0xff] %v4387
        %4392 = vst [vmem:[%s240 + $0x10] sm:$0xff] %v4388
        %4393 = vst [vmem:[%s240 + $0x18] sm:$0xff] %v4389
        %s4394 = sand.u32 %s104, 1
        %s4395 = scalar_lea.sflag [#allocation5], %s4394
        %s4396 = sand.u32 %s104, 1
        %s4397 = smul.addr %s4396, 32
        %s4398 = scalar_lea.vmem [#allocation9], %s4397
        // Predicated region
        $region45: #{_mlp_forward_impl.1} parent=31 // pred_check
          %p4399 = pneg %p114
        $region46: #{_mlp_forward_impl.1} parent=31 // pred_check_branch
          %4401 = sbr.rel (%p4399) target = $region48
        $region47: #{_mlp_forward_impl.1} parent=31 // pred_region
          %s4402 = smul.u32 2, %s23
          %s4404 = ssub.s32 512, 512
          %4405 = vsyncadd %s4395, %s4404
          %s4406 = smul.addr %s4402, 128
          %s4407 = scalar_lea.hbm %s3, %s4406
          %s4408 = sshll.u32 %s4398, 4
          %s4409 = int_to_ptr.vmem [resolvable:$true] %s4408
          %4414 = dma.vmem_to_hbm [thread:$0]  %s4409, 512, %s4407, %s4395, 256, 512, 16
        $region48: #{_mlp_forward_impl.1} parent=31 // pred_fallthru
          _
      $region32: #{_mlp_forward_impl.1} parent=5 // pred_fallthru
        _
      %p4415 = scmp.le.s32.totalorder 2, %s18
      // Predicated region
      $region49: #{_mlp_forward_impl.1} parent=5 // pred_check
        %p4416 = pneg %p4415
      $region50: #{_mlp_forward_impl.1} parent=5 // pred_check_branch
        %4418 = sbr.rel (%p4416) target = $region52
      $region51: #{_mlp_forward_impl.1} parent=5 // pred_region
        %s4419 = ssub.s32 %s18, 2
        // Predicated region
        $region53: #{_mlp_forward_impl.1} parent=51 // pred_check
          %p4420 = pneg %p120
        $region54: #{_mlp_forward_impl.1} parent=51 // pred_check_branch
          %4422 = sbr.rel (%p4420) target = $region56
        $region55: #{_mlp_forward_impl.1} parent=51 // pred_region
          %s4423 = sand.u32 %s105, 1
          %s4424 = scalar_lea.sflag [#allocation5], %s4423
          %s4425 = sand.u32 %s105, 1
          %s4426 = smul.addr %s4425, 32
          %s4427 = scalar_lea.vmem [#allocation9], %s4426
          %4428 = dma.done %s4424, 512
        $region56: #{_mlp_forward_impl.1} parent=51 // pred_fallthru
          _
      $region52: #{_mlp_forward_impl.1} parent=5 // pred_fallthru
        _
    $region6: #{_mlp_forward_impl.1} parent=1 // loop_footer
      %s22 = sadd.s32 1, %s18
    $region7: #{_mlp_forward_impl.1} parent=1 // loop_footer_branch
      %17 = sbr.rel target = $region3
    $region8: #{_mlp_forward_impl.1} parent=1 // loop_exit
      _
    %4429 = vsyncpa [#allocation4], 1
    %s4430 = scalar_lea.sflag [#allocation4], 1
    %4431 = vsyncpa %s4430, 1
    %4432 = vsyncpa [#allocation7], 1
    %s4433 = scalar_lea.sflag [#allocation7], 1
    %4434 = vsyncpa %s4433, 1
    %4435 = vsyncpa [#allocation5], 1
    %s4436 = scalar_lea.sflag [#allocation5], 1
    %4437 = vsyncpa %s4436, 1

</llo_original>
